<compile_context>
chip_gen: v7x
topology: tpu7x:2x2x1
jax: 0.10.0
libtpu: 0.0.40
codegen_flags: <defaults>
</compile_context>

<pallas_src>
import jax
import jax.numpy as jnp
from jax.experimental import pallas as pl
from jax.experimental.pallas import tpu as pltpu

_LANE = 128
_MAX_TM_CAP = 8 * 1024   # hard cap on lanes per grid block


def _cdiv(a, b):
    return -(-a // b)


def _round_up(a, b):
    return _cdiv(a, b) * b


def _vmem_budget_bytes():
    """Conservative VMEM budget usable by the kernel on this generation."""
    cap = 128 * 1024 * 1024
    try:
        cap = int(pltpu.get_tpu_info().vmem_capacity_bytes)
    except Exception:  # pragma: no cover - defensive: keep the kernel runnable
        pass
    return max(16 * 1024 * 1024, min(cap // 2, 48 * 1024 * 1024))


# ----------------------------------------------------------------------------
# Pallas kernel: fused 4-layer per-voxel MLP (= HamPart conv1..conv4 interior)
# Layout: channels on sublanes, voxels on lanes (lane-dense). Two input
# streams: packed activations and one packed weight+bias matrix.
# ----------------------------------------------------------------------------
def _make_hampart_kernel(df, cs, chunk, n_chunks):
    c_in = df + 2

    def kernel(x_ref, w_ref, o_ref):
        # Static, 128-aligned slices of the packed per-part weight matrix.
        w1 = w_ref[:, 0 * cs:0 * cs + c_in]             # (6df, df+2)
        b1 = w_ref[:, 1 * cs:1 * cs + 1]                # (6df, 1)
        w2 = w_ref[:, 2 * cs:2 * cs + 6 * df]           # (6df, 6df)
        b2 = w_ref[:, 3 * cs:3 * cs + 1]                # (6df, 1)
        w3 = w_ref[0:3 * df, 4 * cs:4 * cs + 6 * df]    # (3df, 6df)
        b3 = w_ref[0:3 * df, 5 * cs:5 * cs + 1]         # (3df, 1)
        w4 = w_ref[0:1, 6 * cs:6 * cs + 3 * df]         # (1, 3df)
        b4 = w_ref[0:1, 7 * cs:7 * cs + 1]              # (1, 1)

        def body(ci, carry):
            off = pl.multiple_of(ci * chunk, _LANE)
            x = x_ref[:, pl.ds(off, chunk)]             # (df+2, chunk)
            h1 = jnp.maximum(
                jnp.dot(w1, x, preferred_element_type=jnp.float32) + b1, 0.0)
            h2 = jnp.maximum(
                jnp.dot(w2, h1, preferred_element_type=jnp.float32) + b2, 0.0)
            h3 = jnp.maximum(
                jnp.dot(w3, h2, preferred_element_type=jnp.float32) + b3, 0.0)
            h4 = jnp.maximum(
                jnp.dot(w4, h3, preferred_element_type=jnp.float32) + b4, 0.0)
            o_ref[:, pl.ds(off, chunk)] = h4
            return carry

        # Unrolled lane-chunk loop keeps the layer chain vreg-resident while
        # the DMA block stays at the full tm width.
        jax.lax.fori_loop(0, n_chunks, body, 0, unroll=True)

    return kernel


def _fused_hampart_interior(xs, wts, df, cs, tm, chunk, vmem_limit):
    """xs: (2, N, df+2, S_pad) f32.  wts: (2, 6df, 8*cs) f32.
    Returns (2, N, 1, S_pad) f32: conv4 output at interior voxels per part."""
    _, n_batch, c_in, s_pad = xs.shape
    r, wcols = wts.shape[1], wts.shape[2]
    n_m = s_pad // tm
    kernel = _make_hampart_kernel(df, cs, chunk, tm // chunk)
    return pl.pallas_call(
        kernel,
        out_shape=jax.ShapeDtypeStruct((2, n_batch, 1, s_pad), jnp.float32),
        grid_spec=pltpu.PrefetchScalarGridSpec(
            num_scalar_prefetch=0,
            grid=(2, n_batch, n_m),                      # (part, sample, lane-block)
            in_specs=[
                pl.BlockSpec((None, None, c_in, tm), lambda p, n, m: (p, n, 0, m)),
                pl.BlockSpec((None, r, wcols), lambda p, n, m: (p, 0, 0)),
            ],
            out_specs=pl.BlockSpec((None, None, 1, tm), lambda p, n, m: (p, n, 0, m)),
        ),
        compiler_params=pltpu.CompilerParams(
            dimension_semantics=("parallel", "parallel", "parallel"),
            vmem_limit_bytes=int(vmem_limit)),
    )(xs, wts)


# ----------------------------------------------------------------------------
# Parameter handling / algebraic folds (plain JAX glue)
# ----------------------------------------------------------------------------
def _part_matrices(pp, df):
    w1 = pp["c1_w"].reshape(6 * df, 3 * df)
    w2 = pp["c2_w"].reshape(6 * df, 6 * df)
    w3 = pp["c3_w"].reshape(3 * df, 6 * df)
    w4 = pp["c4_w"].reshape(1, 3 * df)
    return w1, w2, w3, w4


def _pack_part_weights(pp, df, cs):
    """Pack all weights + biases of one HamPart into one (6df, 8*cs) matrix.
    Slot i occupies columns [i*cs, i*cs + ncols_i); cs is a multiple of 128 so
    every in-kernel slice starts at a lane-tile boundary."""
    w1, w2, w3, w4 = _part_matrices(pp, df)
    # Fold ImageGradient: all dxx/dxy channels are identical, so sum their
    # conv1 weight columns (exact).
    w1c = jnp.concatenate(
        [w1[:, :df],
         w1[:, df:2 * df].sum(axis=1, keepdims=True),
         w1[:, 2 * df:].sum(axis=1, keepdims=True)], axis=1)          # (6df, df+2)
    blocks = [w1c, pp["c1_b"].reshape(6 * df, 1),
              w2, pp["c2_b"].reshape(6 * df, 1),
              w3, pp["c3_b"].reshape(3 * df, 1),
              w4, pp["c4_b"].reshape(1, 1)]
    packed = jnp.zeros((6 * df, 8 * cs), jnp.float32)
    for slot, blk in enumerate(blocks):
        rr, cc = blk.shape
        packed = packed.at[:rr, slot * cs:slot * cs + cc].set(blk.astype(jnp.float32))
    return packed


def _frame_values(pp, df):
    """Constant values of the four border shells created by the padding=1
    pointwise convs (outermost shell first)."""
    relu = lambda t: jnp.maximum(t, 0.0)
    _, w2, w3, w4 = _part_matrices(pp, df)
    b1, b2, b3, b4 = pp["c1_b"], pp["c2_b"], pp["c3_b"], pp["c4_b"]
    v0 = relu(b4)[0]
    v1 = relu(w4 @ relu(b3) + b4)[0]
    v2 = relu(w4 @ relu(w3 @ relu(b2) + b3) + b4)[0]
    v3 = relu(w4 @ relu(w3 @ relu(w2 @ relu(b1) + b2) + b3) + b4)[0]
    return v0, v1, v2, v3


def _image_gradients(x):
    """Channel-summed central differences with zero padding (matches the dense
    torch ImageGradient kernel, whose output channels are all identical).
    x: (N, C, D, H, W) -> (d/dH, d/dW), each (N, D, H, W)."""
    s = x.sum(axis=1)
    sh = jnp.pad(s, ((0, 0), (0, 0), (1, 1), (0, 0)))
    gh = 0.5 * (sh[:, :, 2:, :] - sh[:, :, :-2, :])
    sw = jnp.pad(s, ((0, 0), (0, 0), (0, 0), (1, 1)))
    gw = 0.5 * (sw[:, :, :, 2:] - sw[:, :, :, :-2])
    return gh, gw


# ----------------------------------------------------------------------------
# Module forward:  Hamiltonian(p, q) -> (kin+pot, p, dpx, dpy, q, dqx, dqy)
# ----------------------------------------------------------------------------
def hamiltonian_forward(p, q, params):
    N, df, D, H, W = p.shape
    S = D * H * W
    C = df + 2

    gpx, gpy = _image_gradients(p)
    gqx, gqy = _image_gradients(q)
    dpx = jnp.broadcast_to(gpx[:, None], p.shape)
    dpy = jnp.broadcast_to(gpy[:, None], p.shape)
    dqx = jnp.broadcast_to(gqx[:, None], q.shape)
    dqy = jnp.broadcast_to(gqy[:, None], q.shape)

    # Kernel input in natural (N, C, S) layout (no transpose): one data stream.
    def part_input(x, gh, gw):
        return jnp.concatenate(
            [x.reshape(N, df, S),
             gh.reshape(N, 1, S),
             gw.reshape(N, 1, S)], axis=1)

    xs = jnp.stack([part_input(p, gpx, gpy),
                    part_input(q, gqx, gqy)]).astype(jnp.float32)   # (2,N,C,S)

    # Tiling: lane tile derived from the per-generation VMEM budget; round only
    # to the lane granularity actually needed.
    budget = _vmem_budget_bytes()
    per_lane_bytes = 4 * (2 * C + 2)                 # dbl-buffered in + out rows
    max_tm = budget // (8 * per_lane_bytes)          # 8x headroom
    max_tm = max(512, min(max_tm, _MAX_TM_CAP))
    max_tm = (max_tm // _LANE) * _LANE
    n_m = _cdiv(S, max_tm)
    tm = _LANE * _cdiv(S, n_m * _LANE)
    s_pad = n_m * tm
    if s_pad != S:   # tiny lane-alignment pad; fused by XLA into the concat/stack
        xs = jnp.pad(xs, ((0, 0), (0, 0), (0, 0), (0, s_pad - S)))

    # Lane-chunk size for the vreg-resident inner loop (128-aligned divisor of tm).
    tiles = tm // _LANE
    chunk = _LANE
    for d in (4, 3, 2):
        if tiles % d == 0:
            chunk = _LANE * d
            break

    cs = _round_up(max(6 * df, C), _LANE)
    wts = jnp.stack([_pack_part_weights(params["kin"], df, cs),
                     _pack_part_weights(params["pot"], df, cs)])

    out = _fused_hampart_interior(xs, wts, df, cs, tm, chunk, budget)
    inter = out[:, :, 0, :S]                                        # (2, N, S)
    ham_int = (inter[0] + inter[1]).reshape(N, 1, D, H, W)

    # Border shells of the (D+8)^3 output are bias-chain constants; assemble
    # the full volume in one select pass (Chebyshev distance to the boundary).
    fk = _frame_values(params["kin"], df)
    fp = _frame_values(params["pot"], df)
    f0, f1, f2, f3 = [a + b for a, b in zip(fk, fp)]

    Dp, Hp, Wp = D + 8, H + 8, W + 8
    di = jax.lax.broadcasted_iota(jnp.int32, (Dp, Hp, Wp), 0)
    hi = jax.lax.broadcasted_iota(jnp.int32, (Dp, Hp, Wp), 1)
    wi = jax.lax.broadcasted_iota(jnp.int32, (Dp, Hp, Wp), 2)
    ring = jnp.minimum(jnp.minimum(jnp.minimum(di, Dp - 1 - di),
                                   jnp.minimum(hi, Hp - 1 - hi)),
                       jnp.minimum(wi, Wp - 1 - wi))
    shell = jnp.where(ring == 0, f0,
            jnp.where(ring == 1, f1,
            jnp.where(ring == 2, f2, f3))).astype(jnp.float32)
    interior_pad = jnp.pad(ham_int, ((0, 0), (0, 0), (4, 4), (4, 4), (4, 4)))
    ham = jnp.where((ring >= 4)[None, None], interior_pad, shell[None, None])

    return ham, p, dpx, dpy, q, dqx, dqy


# ----------------------------------------------------------------------------
# Deterministic synthetic parameters (torch Conv3d-shaped)
# ----------------------------------------------------------------------------
def init_params(key, df):
    keys = iter(jax.random.split(key, 16))

    def conv(cout, cin):
        return 0.1 * jax.random.normal(next(keys), (cout, cin, 1, 1, 1), jnp.float32)

    def bias(cout):
        return 0.1 * jax.random.normal(next(keys), (cout,), jnp.float32)

    def ham_part():
        return dict(
            c1_w=conv(6 * df, 3 * df), c1_b=bias(6 * df),
            c2_w=conv(6 * df, 6 * df), c2_b=bias(6 * df),
            c3_w=conv(3 * df, 6 * df), c3_b=bias(3 * df),
            c4_w=conv(1, 3 * df),      c4_b=bias(1),
        )

    return dict(kin=ham_part(), pot=ham_part())


# ----------------------------------------------------------------------------
# Pure-JAX layer-by-layer reference (mirrors the torch module) for validation
# ----------------------------------------------------------------------------
def reference_forward(p, q, params):
    def img_grad(x, pos):
        s = x.sum(axis=1, keepdims=True)
        axis = 2 + pos
        padw = [(0, 0)] * 5
        padw[axis] = (1, 1)
        sp = jnp.pad(s, padw)
        hi = [slice(None)] * 5; hi[axis] = slice(2, None)
        lo = [slice(None)] * 5; lo[axis] = slice(0, -2)
        return jnp.broadcast_to(0.5 * (sp[tuple(hi)] - sp[tuple(lo)]), x.shape)

    def hampart(x, pp):
        dxx = img_grad(x, 1)
        dxy = img_grad(x, 2)
        h = jnp.concatenate([x, dxx, dxy], axis=1)
        for wk, bk in (("c1_w", "c1_b"), ("c2_w", "c2_b"),
                       ("c3_w", "c3_b"), ("c4_w", "c4_b")):
            w = pp[wk][:, :, 0, 0, 0]
            b = pp[bk]
            h = jnp.pad(h, ((0, 0), (0, 0), (1, 1), (1, 1), (1, 1)))
            h = jnp.einsum("oc,ncdhw->nodhw", w, h) + b[None, :, None, None, None]
            h = jnp.maximum(h, 0.0)
        return h, x, dxx, dxy

    kin, p_, dpx, dpy = hampart(p, params["kin"])
    pot, q_, dqx, dqy = hampart(q, params["pot"])
    return kin + pot, p_, dpx, dpy, q_, dqx, dqy


# ----------------------------------------------------------------------------
if __name__ == "__main__":
    DF = 2
    N, D, H, W = 2, 12, 12, 12

    key = jax.random.PRNGKey(0)
    kp, kq, kw = jax.random.split(key, 3)
    p = jax.random.normal(kp, (N, DF, D, H, W), jnp.float32)
    q = jax.random.normal(kq, (N, DF, D, H, W), jnp.float32)
    params = init_params(kw, DF)

    fwd = jax.jit(hamiltonian_forward)
    ham, p_o, dpx, dpy, q_o, dqx, dqy = fwd(p, q, params)
    jax.block_until_ready((ham, p_o, dpx, dpy, q_o, dqx, dqy))

    # Shape sanity (torch: each padding=1 pointwise conv grows the volume by 2).
    assert ham.shape == (N, 1, D + 8, H + 8, W + 8)
    assert p_o.shape == p.shape and q_o.shape == q.shape
    assert dpx.shape == p.shape and dpy.shape == p.shape
    assert dqx.shape == q.shape and dqy.shape == q.shape

    # Correctness against the pure-JAX layer-by-layer reference.
    ref = jax.jit(reference_forward)(p, q, params)
    jax.block_until_ready(ref)
    assert float(jnp.max(jnp.abs(ham - ref[0]))) < 1e-4
    assert float(jnp.max(jnp.abs(dpx - ref[2]))) < 1e-5
    assert float(jnp.max(jnp.abs(dpy - ref[3]))) < 1e-5
    assert float(jnp.max(jnp.abs(dqx - ref[5]))) < 1e-5
    assert float(jnp.max(jnp.abs(dqy - ref[6]))) < 1e-5

    print("KERNEL_OK")
</pallas_src>

<mosaic_0001>
module attributes {stable_mosaic.version = 11 : i64} {
  func.func @kernel(%arg0: i32, %arg1: i32, %arg2: i32, %arg3: memref<1x1x4x1792xf32, #tpu.memory_space<vmem>>, %arg4: memref<1x12x1024xf32, #tpu.memory_space<vmem>>, %arg5: memref<1x1x1x1792xf32, #tpu.memory_space<vmem>>) attributes {dimension_semantics = [#tpu.dimension_semantics<parallel>, #tpu.dimension_semantics<parallel>, #tpu.dimension_semantics<parallel>], iteration_bounds = array<i64: 2, 2, 1>, scalar_prefetch = 0 : i64, scratch_operands = 0 : i64, tpu.core_type = #tpu.core_type<tc>, window_params = [{transform_indices = @transform_0, window_bounds = array<i64: 1, 1, 4, 1792>}, {transform_indices = @transform_1, window_bounds = array<i64: 1, 12, 1024>}, {transform_indices = @transform_2, window_bounds = array<i64: 1, 1, 1, 1792>}]} {
    %c0 = arith.constant 0 : index
    %c0_0 = arith.constant 0 : index
    %c0_1 = arith.constant 0 : index
    %0 = vector.load %arg4[%c0, %c0_0, %c0_1] : memref<1x12x1024xf32, #tpu.memory_space<vmem>>, vector<1x12x4xf32>
    %1 = vector.shape_cast %0 : vector<1x12x4xf32> to vector<12x4xf32>
    %c0_2 = arith.constant 0 : index
    %c0_3 = arith.constant 0 : index
    %c128 = arith.constant 128 : index
    %2 = vector.load %arg4[%c0_2, %c0_3, %c128] : memref<1x12x1024xf32, #tpu.memory_space<vmem>>, vector<1x12x1xf32>
    %3 = vector.shape_cast %2 : vector<1x12x1xf32> to vector<12x1xf32>
    %c0_4 = arith.constant 0 : index
    %c0_5 = arith.constant 0 : index
    %c256 = arith.constant 256 : index
    %4 = vector.load %arg4[%c0_4, %c0_5, %c256] : memref<1x12x1024xf32, #tpu.memory_space<vmem>>, vector<1x12x12xf32>
    %5 = vector.shape_cast %4 : vector<1x12x12xf32> to vector<12x12xf32>
    %c0_6 = arith.constant 0 : index
    %c0_7 = arith.constant 0 : index
    %c384 = arith.constant 384 : index
    %6 = vector.load %arg4[%c0_6, %c0_7, %c384] : memref<1x12x1024xf32, #tpu.memory_space<vmem>>, vector<1x12x1xf32>
    %7 = vector.shape_cast %6 : vector<1x12x1xf32> to vector<12x1xf32>
    %c0_8 = arith.constant 0 : index
    %c0_9 = arith.constant 0 : index
    %c512 = arith.constant 512 : index
    %8 = vector.load %arg4[%c0_8, %c0_9, %c512] : memref<1x12x1024xf32, #tpu.memory_space<vmem>>, vector<1x6x12xf32>
    %9 = vector.shape_cast %8 : vector<1x6x12xf32> to vector<6x12xf32>
    %c0_10 = arith.constant 0 : index
    %c0_11 = arith.constant 0 : index
    %c640 = arith.constant 640 : index
    %10 = vector.load %arg4[%c0_10, %c0_11, %c640] : memref<1x12x1024xf32, #tpu.memory_space<vmem>>, vector<1x6x1xf32>
    %11 = vector.shape_cast %10 : vector<1x6x1xf32> to vector<6x1xf32>
    %c0_12 = arith.constant 0 : index
    %c0_13 = arith.constant 0 : index
    %c768 = arith.constant 768 : index
    %12 = vector.load %arg4[%c0_12, %c0_13, %c768] : memref<1x12x1024xf32, #tpu.memory_space<vmem>>, vector<1x1x6xf32>
    %13 = vector.shape_cast %12 : vector<1x1x6xf32> to vector<1x6xf32>
    %c0_14 = arith.constant 0 : index
    %c0_15 = arith.constant 0 : index
    %c896 = arith.constant 896 : index
    %14 = vector.load %arg4[%c0_14, %c0_15, %c896] : memref<1x12x1024xf32, #tpu.memory_space<vmem>>, vector<1x1x1xf32>
    %15 = vector.shape_cast %14 : vector<1x1x1xf32> to vector<1x1xf32>
    %c0_i32 = arith.constant 0 : i32
    %c256_i32 = arith.constant 256 : i32
    %16 = arith.muli %c0_i32, %c256_i32 : i32
    %17 = tpu.assume_multiple %16, 128 : i32
    %c0_16 = arith.constant 0 : index
    %c0_17 = arith.constant 0 : index
    %c0_18 = arith.constant 0 : index
    %18 = arith.index_cast %17 : i32 to index
    %19 = vector.load %arg3[%c0_16, %c0_17, %c0_18, %18] : memref<1x1x4x1792xf32, #tpu.memory_space<vmem>>, vector<1x1x4x256xf32>
    %20 = vector.shape_cast %19 : vector<1x1x4x256xf32> to vector<4x256xf32>
    %cst = arith.constant dense<0.000000e+00> : vector<12x256xf32>
    %21 = tpu.matmul %1, %20, %cst {dimension_numbers = #tpu.dot_dimension_numbers<[1], [0], [0], [1], [0, 0, 1, 1], [], []>} : vector<12x4xf32>, vector<4x256xf32>, vector<12x256xf32> -> vector<12x256xf32>
    %22 = vector.broadcast %3 : vector<12x1xf32> to vector<12x256xf32>
    %23 = arith.addf %21, %22 : vector<12x256xf32>
    %cst_19 = arith.constant 0.000000e+00 : f32
    %24 = vector.broadcast %cst_19 : f32 to vector<12x256xf32>
    %25 = arith.maximumf %23, %24 : vector<12x256xf32>
    %cst_20 = arith.constant dense<0.000000e+00> : vector<12x256xf32>
    %26 = tpu.matmul %5, %25, %cst_20 {dimension_numbers = #tpu.dot_dimension_numbers<[1], [0], [0], [1], [0, 0, 1, 1], [], []>} : vector<12x12xf32>, vector<12x256xf32>, vector<12x256xf32> -> vector<12x256xf32>
    %27 = vector.broadcast %7 : vector<12x1xf32> to vector<12x256xf32>
    %28 = arith.addf %26, %27 : vector<12x256xf32>
    %cst_21 = arith.constant 0.000000e+00 : f32
    %29 = vector.broadcast %cst_21 : f32 to vector<12x256xf32>
    %30 = arith.maximumf %28, %29 : vector<12x256xf32>
    %cst_22 = arith.constant dense<0.000000e+00> : vector<6x256xf32>
    %31 = tpu.matmul %9, %30, %cst_22 {dimension_numbers = #tpu.dot_dimension_numbers<[1], [0], [0], [1], [0, 0, 1, 1], [], []>} : vector<6x12xf32>, vector<12x256xf32>, vector<6x256xf32> -> vector<6x256xf32>
    %32 = vector.broadcast %11 : vector<6x1xf32> to vector<6x256xf32>
    %33 = arith.addf %31, %32 : vector<6x256xf32>
    %cst_23 = arith.constant 0.000000e+00 : f32
    %34 = vector.broadcast %cst_23 : f32 to vector<6x256xf32>
    %35 = arith.maximumf %33, %34 : vector<6x256xf32>
    %cst_24 = arith.constant dense<0.000000e+00> : vector<1x256xf32>
    %36 = tpu.matmul %13, %35, %cst_24 {dimension_numbers = #tpu.dot_dimension_numbers<[1], [0], [0], [1], [0, 0, 1, 1], [], []>} : vector<1x6xf32>, vector<6x256xf32>, vector<1x256xf32> -> vector<1x256xf32>
    %37 = vector.broadcast %15 : vector<1x1xf32> to vector<1x256xf32>
    %38 = arith.addf %36, %37 : vector<1x256xf32>
    %cst_25 = arith.constant 0.000000e+00 : f32
    %39 = vector.broadcast %cst_25 : f32 to vector<1x256xf32>
    %40 = arith.maximumf %38, %39 : vector<1x256xf32>
    %c0_26 = arith.constant 0 : index
    %c0_27 = arith.constant 0 : index
    %c0_28 = arith.constant 0 : index
    %41 = arith.index_cast %17 : i32 to index
    %42 = vector.load %arg5[%c0_26, %c0_27, %c0_28, %41] : memref<1x1x1x1792xf32, #tpu.memory_space<vmem>>, vector<1x1x1x256xf32>
    %43 = vector.shape_cast %42 : vector<1x1x1x256xf32> to vector<1x256xf32>
    %44 = vector.shape_cast %40 : vector<1x256xf32> to vector<1x1x1x256xf32>
    tpu.vector_store %arg5[%c0_26, %c0_27, %c0_28, %41], %44 {strides = array<i32>} : memref<1x1x1x1792xf32, #tpu.memory_space<vmem>>, vector<1x1x1x256xf32>,
    %c1_i32 = arith.constant 1 : i32
    %c256_i32_29 = arith.constant 256 : i32
    %45 = arith.muli %c1_i32, %c256_i32_29 : i32
    %46 = tpu.assume_multiple %45, 128 : i32
    %c0_30 = arith.constant 0 : index
    %c0_31 = arith.constant 0 : index
    %c0_32 = arith.constant 0 : index
    %47 = arith.index_cast %46 : i32 to index
    %48 = vector.load %arg3[%c0_30, %c0_31, %c0_32, %47] : memref<1x1x4x1792xf32, #tpu.memory_space<vmem>>, vector<1x1x4x256xf32>
    %49 = vector.shape_cast %48 : vector<1x1x4x256xf32> to vector<4x256xf32>
    %cst_33 = arith.constant dense<0.000000e+00> : vector<12x256xf32>
    %50 = tpu.matmul %1, %49, %cst_33 {dimension_numbers = #tpu.dot_dimension_numbers<[1], [0], [0], [1], [0, 0, 1, 1], [], []>} : vector<12x4xf32>, vector<4x256xf32>, vector<12x256xf32> -> vector<12x256xf32>
    %51 = vector.broadcast %3 : vector<12x1xf32> to vector<12x256xf32>
    %52 = arith.addf %50, %51 : vector<12x256xf32>
    %cst_34 = arith.constant 0.000000e+00 : f32
    %53 = vector.broadcast %cst_34 : f32 to vector<12x256xf32>
    %54 = arith.maximumf %52, %53 : vector<12x256xf32>
    %cst_35 = arith.constant dense<0.000000e+00> : vector<12x256xf32>
    %55 = tpu.matmul %5, %54, %cst_35 {dimension_numbers = #tpu.dot_dimension_numbers<[1], [0], [0], [1], [0, 0, 1, 1], [], []>} : vector<12x12xf32>, vector<12x256xf32>, vector<12x256xf32> -> vector<12x256xf32>
    %56 = vector.broadcast %7 : vector<12x1xf32> to vector<12x256xf32>
    %57 = arith.addf %55, %56 : vector<12x256xf32>
    %cst_36 = arith.constant 0.000000e+00 : f32
    %58 = vector.broadcast %cst_36 : f32 to vector<12x256xf32>
    %59 = arith.maximumf %57, %58 : vector<12x256xf32>
    %cst_37 = arith.constant dense<0.000000e+00> : vector<6x256xf32>
    %60 = tpu.matmul %9, %59, %cst_37 {dimension_numbers = #tpu.dot_dimension_numbers<[1], [0], [0], [1], [0, 0, 1, 1], [], []>} : vector<6x12xf32>, vector<12x256xf32>, vector<6x256xf32> -> vector<6x256xf32>
    %61 = vector.broadcast %11 : vector<6x1xf32> to vector<6x256xf32>
    %62 = arith.addf %60, %61 : vector<6x256xf32>
    %cst_38 = arith.constant 0.000000e+00 : f32
    %63 = vector.broadcast %cst_38 : f32 to vector<6x256xf32>
    %64 = arith.maximumf %62, %63 : vector<6x256xf32>
    %cst_39 = arith.constant dense<0.000000e+00> : vector<1x256xf32>
    %65 = tpu.matmul %13, %64, %cst_39 {dimension_numbers = #tpu.dot_dimension_numbers<[1], [0], [0], [1], [0, 0, 1, 1], [], []>} : vector<1x6xf32>, vector<6x256xf32>, vector<1x256xf32> -> vector<1x256xf32>
    %66 = vector.broadcast %15 : vector<1x1xf32> to vector<1x256xf32>
    %67 = arith.addf %65, %66 : vector<1x256xf32>
    %cst_40 = arith.constant 0.000000e+00 : f32
    %68 = vector.broadcast %cst_40 : f32 to vector<1x256xf32>
    %69 = arith.maximumf %67, %68 : vector<1x256xf32>
    %c0_41 = arith.constant 0 : index
    %c0_42 = arith.constant 0 : index
    %c0_43 = arith.constant 0 : index
    %70 = arith.index_cast %46 : i32 to index
    %71 = vector.load %arg5[%c0_41, %c0_42, %c0_43, %70] : memref<1x1x1x1792xf32, #tpu.memory_space<vmem>>, vector<1x1x1x256xf32>
    %72 = vector.shape_cast %71 : vector<1x1x1x256xf32> to vector<1x256xf32>
    %73 = vector.shape_cast %69 : vector<1x256xf32> to vector<1x1x1x256xf32>
    tpu.vector_store %arg5[%c0_41, %c0_42, %c0_43, %70], %73 {strides = array<i32>} : memref<1x1x1x1792xf32, #tpu.memory_space<vmem>>, vector<1x1x1x256xf32>,
    %c2_i32 = arith.constant 2 : i32
    %c256_i32_44 = arith.constant 256 : i32
    %74 = arith.muli %c2_i32, %c256_i32_44 : i32
    %75 = tpu.assume_multiple %74, 128 : i32
    %c0_45 = arith.constant 0 : index
    %c0_46 = arith.constant 0 : index
    %c0_47 = arith.constant 0 : index
    %76 = arith.index_cast %75 : i32 to index
    %77 = vector.load %arg3[%c0_45, %c0_46, %c0_47, %76] : memref<1x1x4x1792xf32, #tpu.memory_space<vmem>>, vector<1x1x4x256xf32>
    %78 = vector.shape_cast %77 : vector<1x1x4x256xf32> to vector<4x256xf32>
    %cst_48 = arith.constant dense<0.000000e+00> : vector<12x256xf32>
    %79 = tpu.matmul %1, %78, %cst_48 {dimension_numbers = #tpu.dot_dimension_numbers<[1], [0], [0], [1], [0, 0, 1, 1], [], []>} : vector<12x4xf32>, vector<4x256xf32>, vector<12x256xf32> -> vector<12x256xf32>
    %80 = vector.broadcast %3 : vector<12x1xf32> to vector<12x256xf32>
    %81 = arith.addf %79, %80 : vector<12x256xf32>
    %cst_49 = arith.constant 0.000000e+00 : f32
    %82 = vector.broadcast %cst_49 : f32 to vector<12x256xf32>
    %83 = arith.maximumf %81, %82 : vector<12x256xf32>
    %cst_50 = arith.constant dense<0.000000e+00> : vector<12x256xf32>
    %84 = tpu.matmul %5, %83, %cst_50 {dimension_numbers = #tpu.dot_dimension_numbers<[1], [0], [0], [1], [0, 0, 1, 1], [], []>} : vector<12x12xf32>, vector<12x256xf32>, vector<12x256xf32> -> vector<12x256xf32>
    %85 = vector.broadcast %7 : vector<12x1xf32> to vector<12x256xf32>
    %86 = arith.addf %84, %85 : vector<12x256xf32>
    %cst_51 = arith.constant 0.000000e+00 : f32
    %87 = vector.broadcast %cst_51 : f32 to vector<12x256xf32>
    %88 = arith.maximumf %86, %87 : vector<12x256xf32>
    %cst_52 = arith.constant dense<0.000000e+00> : vector<6x256xf32>
    %89 = tpu.matmul %9, %88, %cst_52 {dimension_numbers = #tpu.dot_dimension_numbers<[1], [0], [0], [1], [0, 0, 1, 1], [], []>} : vector<6x12xf32>, vector<12x256xf32>, vector<6x256xf32> -> vector<6x256xf32>
    %90 = vector.broadcast %11 : vector<6x1xf32> to vector<6x256xf32>
    %91 = arith.addf %89, %90 : vector<6x256xf32>
    %cst_53 = arith.constant 0.000000e+00 : f32
    %92 = vector.broadcast %cst_53 : f32 to vector<6x256xf32>
    %93 = arith.maximumf %91, %92 : vector<6x256xf32>
    %cst_54 = arith.constant dense<0.000000e+00> : vector<1x256xf32>
    %94 = tpu.matmul %13, %93, %cst_54 {dimension_numbers = #tpu.dot_dimension_numbers<[1], [0], [0], [1], [0, 0, 1, 1], [], []>} : vector<1x6xf32>, vector<6x256xf32>, vector<1x256xf32> -> vector<1x256xf32>
    %95 = vector.broadcast %15 : vector<1x1xf32> to vector<1x256xf32>
    %96 = arith.addf %94, %95 : vector<1x256xf32>
    %cst_55 = arith.constant 0.000000e+00 : f32
    %97 = vector.broadcast %cst_55 : f32 to vector<1x256xf32>
    %98 = arith.maximumf %96, %97 : vector<1x256xf32>
    %c0_56 = arith.constant 0 : index
    %c0_57 = arith.constant 0 : index
    %c0_58 = arith.constant 0 : index
    %99 = arith.index_cast %75 : i32 to index
    %100 = vector.load %arg5[%c0_56, %c0_57, %c0_58, %99] : memref<1x1x1x1792xf32, #tpu.memory_space<vmem>>, vector<1x1x1x256xf32>
    %101 = vector.shape_cast %100 : vector<1x1x1x256xf32> to vector<1x256xf32>
    %102 = vector.shape_cast %98 : vector<1x256xf32> to vector<1x1x1x256xf32>
    tpu.vector_store %arg5[%c0_56, %c0_57, %c0_58, %99], %102 {strides = array<i32>} : memref<1x1x1x1792xf32, #tpu.memory_space<vmem>>, vector<1x1x1x256xf32>,
    %c3_i32 = arith.constant 3 : i32
    %c256_i32_59 = arith.constant 256 : i32
    %103 = arith.muli %c3_i32, %c256_i32_59 : i32
    %104 = tpu.assume_multiple %103, 128 : i32
    %c0_60 = arith.constant 0 : index
    %c0_61 = arith.constant 0 : index
    %c0_62 = arith.constant 0 : index
    %105 = arith.index_cast %104 : i32 to index
    %106 = vector.load %arg3[%c0_60, %c0_61, %c0_62, %105] : memref<1x1x4x1792xf32, #tpu.memory_space<vmem>>, vector<1x1x4x256xf32>
    %107 = vector.shape_cast %106 : vector<1x1x4x256xf32> to vector<4x256xf32>
    %cst_63 = arith.constant dense<0.000000e+00> : vector<12x256xf32>
    %108 = tpu.matmul %1, %107, %cst_63 {dimension_numbers = #tpu.dot_dimension_numbers<[1], [0], [0], [1], [0, 0, 1, 1], [], []>} : vector<12x4xf32>, vector<4x256xf32>, vector<12x256xf32> -> vector<12x256xf32>
    %109 = vector.broadcast %3 : vector<12x1xf32> to vector<12x256xf32>
    %110 = arith.addf %108, %109 : vector<12x256xf32>
    %cst_64 = arith.constant 0.000000e+00 : f32
    %111 = vector.broadcast %cst_64 : f32 to vector<12x256xf32>
    %112 = arith.maximumf %110, %111 : vector<12x256xf32>
    %cst_65 = arith.constant dense<0.000000e+00> : vector<12x256xf32>
    %113 = tpu.matmul %5, %112, %cst_65 {dimension_numbers = #tpu.dot_dimension_numbers<[1], [0], [0], [1], [0, 0, 1, 1], [], []>} : vector<12x12xf32>, vector<12x256xf32>, vector<12x256xf32> -> vector<12x256xf32>
    %114 = vector.broadcast %7 : vector<12x1xf32> to vector<12x256xf32>
    %115 = arith.addf %113, %114 : vector<12x256xf32>
    %cst_66 = arith.constant 0.000000e+00 : f32
    %116 = vector.broadcast %cst_66 : f32 to vector<12x256xf32>
    %117 = arith.maximumf %115, %116 : vector<12x256xf32>
    %cst_67 = arith.constant dense<0.000000e+00> : vector<6x256xf32>
    %118 = tpu.matmul %9, %117, %cst_67 {dimension_numbers = #tpu.dot_dimension_numbers<[1], [0], [0], [1], [0, 0, 1, 1], [], []>} : vector<6x12xf32>, vector<12x256xf32>, vector<6x256xf32> -> vector<6x256xf32>
    %119 = vector.broadcast %11 : vector<6x1xf32> to vector<6x256xf32>
    %120 = arith.addf %118, %119 : vector<6x256xf32>
    %cst_68 = arith.constant 0.000000e+00 : f32
    %121 = vector.broadcast %cst_68 : f32 to vector<6x256xf32>
    %122 = arith.maximumf %120, %121 : vector<6x256xf32>
    %cst_69 = arith.constant dense<0.000000e+00> : vector<1x256xf32>
    %123 = tpu.matmul %13, %122, %cst_69 {dimension_numbers = #tpu.dot_dimension_numbers<[1], [0], [0], [1], [0, 0, 1, 1], [], []>} : vector<1x6xf32>, vector<6x256xf32>, vector<1x256xf32> -> vector<1x256xf32>
    %124 = vector.broadcast %15 : vector<1x1xf32> to vector<1x256xf32>
    %125 = arith.addf %123, %124 : vector<1x256xf32>
    %cst_70 = arith.constant 0.000000e+00 : f32
    %126 = vector.broadcast %cst_70 : f32 to vector<1x256xf32>
    %127 = arith.maximumf %125, %126 : vector<1x256xf32>
    %c0_71 = arith.constant 0 : index
    %c0_72 = arith.constant 0 : index
    %c0_73 = arith.constant 0 : index
    %128 = arith.index_cast %104 : i32 to index
    %129 = vector.load %arg5[%c0_71, %c0_72, %c0_73, %128] : memref<1x1x1x1792xf32, #tpu.memory_space<vmem>>, vector<1x1x1x256xf32>
    %130 = vector.shape_cast %129 : vector<1x1x1x256xf32> to vector<1x256xf32>
    %131 = vector.shape_cast %127 : vector<1x256xf32> to vector<1x1x1x256xf32>
    tpu.vector_store %arg5[%c0_71, %c0_72, %c0_73, %128], %131 {strides = array<i32>} : memref<1x1x1x1792xf32, #tpu.memory_space<vmem>>, vector<1x1x1x256xf32>,
    %c4_i32 = arith.constant 4 : i32
    %c256_i32_74 = arith.constant 256 : i32
    %132 = arith.muli %c4_i32, %c256_i32_74 : i32
    %133 = tpu.assume_multiple %132, 128 : i32
    %c0_75 = arith.constant 0 : index
    %c0_76 = arith.constant 0 : index
    %c0_77 = arith.constant 0 : index
    %134 = arith.index_cast %133 : i32 to index
    %135 = vector.load %arg3[%c0_75, %c0_76, %c0_77, %134] : memref<1x1x4x1792xf32, #tpu.memory_space<vmem>>, vector<1x1x4x256xf32>
    %136 = vector.shape_cast %135 : vector<1x1x4x256xf32> to vector<4x256xf32>
    %cst_78 = arith.constant dense<0.000000e+00> : vector<12x256xf32>
    %137 = tpu.matmul %1, %136, %cst_78 {dimension_numbers = #tpu.dot_dimension_numbers<[1], [0], [0], [1], [0, 0, 1, 1], [], []>} : vector<12x4xf32>, vector<4x256xf32>, vector<12x256xf32> -> vector<12x256xf32>
    %138 = vector.broadcast %3 : vector<12x1xf32> to vector<12x256xf32>
    %139 = arith.addf %137, %138 : vector<12x256xf32>
    %cst_79 = arith.constant 0.000000e+00 : f32
    %140 = vector.broadcast %cst_79 : f32 to vector<12x256xf32>
    %141 = arith.maximumf %139, %140 : vector<12x256xf32>
    %cst_80 = arith.constant dense<0.000000e+00> : vector<12x256xf32>
    %142 = tpu.matmul %5, %141, %cst_80 {dimension_numbers = #tpu.dot_dimension_numbers<[1], [0], [0], [1], [0, 0, 1, 1], [], []>} : vector<12x12xf32>, vector<12x256xf32>, vector<12x256xf32> -> vector<12x256xf32>
    %143 = vector.broadcast %7 : vector<12x1xf32> to vector<12x256xf32>
    %144 = arith.addf %142, %143 : vector<12x256xf32>
    %cst_81 = arith.constant 0.000000e+00 : f32
    %145 = vector.broadcast %cst_81 : f32 to vector<12x256xf32>
    %146 = arith.maximumf %144, %145 : vector<12x256xf32>
    %cst_82 = arith.constant dense<0.000000e+00> : vector<6x256xf32>
    %147 = tpu.matmul %9, %146, %cst_82 {dimension_numbers = #tpu.dot_dimension_numbers<[1], [0], [0], [1], [0, 0, 1, 1], [], []>} : vector<6x12xf32>, vector<12x256xf32>, vector<6x256xf32> -> vector<6x256xf32>
    %148 = vector.broadcast %11 : vector<6x1xf32> to vector<6x256xf32>
    %149 = arith.addf %147, %148 : vector<6x256xf32>
    %cst_83 = arith.constant 0.000000e+00 : f32
    %150 = vector.broadcast %cst_83 : f32 to vector<6x256xf32>
    %151 = arith.maximumf %149, %150 : vector<6x256xf32>
    %cst_84 = arith.constant dense<0.000000e+00> : vector<1x256xf32>
    %152 = tpu.matmul %13, %151, %cst_84 {dimension_numbers = #tpu.dot_dimension_numbers<[1], [0], [0], [1], [0, 0, 1, 1], [], []>} : vector<1x6xf32>, vector<6x256xf32>, vector<1x256xf32> -> vector<1x256xf32>
    %153 = vector.broadcast %15 : vector<1x1xf32> to vector<1x256xf32>
    %154 = arith.addf %152, %153 : vector<1x256xf32>
    %cst_85 = arith.constant 0.000000e+00 : f32
    %155 = vector.broadcast %cst_85 : f32 to vector<1x256xf32>
    %156 = arith.maximumf %154, %155 : vector<1x256xf32>
    %c0_86 = arith.constant 0 : index
    %c0_87 = arith.constant 0 : index
    %c0_88 = arith.constant 0 : index
    %157 = arith.index_cast %133 : i32 to index
    %158 = vector.load %arg5[%c0_86, %c0_87, %c0_88, %157] : memref<1x1x1x1792xf32, #tpu.memory_space<vmem>>, vector<1x1x1x256xf32>
    %159 = vector.shape_cast %158 : vector<1x1x1x256xf32> to vector<1x256xf32>
    %160 = vector.shape_cast %156 : vector<1x256xf32> to vector<1x1x1x256xf32>
    tpu.vector_store %arg5[%c0_86, %c0_87, %c0_88, %157], %160 {strides = array<i32>} : memref<1x1x1x1792xf32, #tpu.memory_space<vmem>>, vector<1x1x1x256xf32>,
    %c5_i32 = arith.constant 5 : i32
    %c256_i32_89 = arith.constant 256 : i32
    %161 = arith.muli %c5_i32, %c256_i32_89 : i32
    %162 = tpu.assume_multiple %161, 128 : i32
    %c0_90 = arith.constant 0 : index
    %c0_91 = arith.constant 0 : index
    %c0_92 = arith.constant 0 : index
    %163 = arith.index_cast %162 : i32 to index
    %164 = vector.load %arg3[%c0_90, %c0_91, %c0_92, %163] : memref<1x1x4x1792xf32, #tpu.memory_space<vmem>>, vector<1x1x4x256xf32>
    %165 = vector.shape_cast %164 : vector<1x1x4x256xf32> to vector<4x256xf32>
    %cst_93 = arith.constant dense<0.000000e+00> : vector<12x256xf32>
    %166 = tpu.matmul %1, %165, %cst_93 {dimension_numbers = #tpu.dot_dimension_numbers<[1], [0], [0], [1], [0, 0, 1, 1], [], []>} : vector<12x4xf32>, vector<4x256xf32>, vector<12x256xf32> -> vector<12x256xf32>
    %167 = vector.broadcast %3 : vector<12x1xf32> to vector<12x256xf32>
    %168 = arith.addf %166, %167 : vector<12x256xf32>
    %cst_94 = arith.constant 0.000000e+00 : f32
    %169 = vector.broadcast %cst_94 : f32 to vector<12x256xf32>
    %170 = arith.maximumf %168, %169 : vector<12x256xf32>
    %cst_95 = arith.constant dense<0.000000e+00> : vector<12x256xf32>
    %171 = tpu.matmul %5, %170, %cst_95 {dimension_numbers = #tpu.dot_dimension_numbers<[1], [0], [0], [1], [0, 0, 1, 1], [], []>} : vector<12x12xf32>, vector<12x256xf32>, vector<12x256xf32> -> vector<12x256xf32>
    %172 = vector.broadcast %7 : vector<12x1xf32> to vector<12x256xf32>
    %173 = arith.addf %171, %172 : vector<12x256xf32>
    %cst_96 = arith.constant 0.000000e+00 : f32
    %174 = vector.broadcast %cst_96 : f32 to vector<12x256xf32>
    %175 = arith.maximumf %173, %174 : vector<12x256xf32>
    %cst_97 = arith.constant dense<0.000000e+00> : vector<6x256xf32>
    %176 = tpu.matmul %9, %175, %cst_97 {dimension_numbers = #tpu.dot_dimension_numbers<[1], [0], [0], [1], [0, 0, 1, 1], [], []>} : vector<6x12xf32>, vector<12x256xf32>, vector<6x256xf32> -> vector<6x256xf32>
    %177 = vector.broadcast %11 : vector<6x1xf32> to vector<6x256xf32>
    %178 = arith.addf %176, %177 : vector<6x256xf32>
    %cst_98 = arith.constant 0.000000e+00 : f32
    %179 = vector.broadcast %cst_98 : f32 to vector<6x256xf32>
    %180 = arith.maximumf %178, %179 : vector<6x256xf32>
    %cst_99 = arith.constant dense<0.000000e+00> : vector<1x256xf32>
    %181 = tpu.matmul %13, %180, %cst_99 {dimension_numbers = #tpu.dot_dimension_numbers<[1], [0], [0], [1], [0, 0, 1, 1], [], []>} : vector<1x6xf32>, vector<6x256xf32>, vector<1x256xf32> -> vector<1x256xf32>
    %182 = vector.broadcast %15 : vector<1x1xf32> to vector<1x256xf32>
    %183 = arith.addf %181, %182 : vector<1x256xf32>
    %cst_100 = arith.constant 0.000000e+00 : f32
    %184 = vector.broadcast %cst_100 : f32 to vector<1x256xf32>
    %185 = arith.maximumf %183, %184 : vector<1x256xf32>
    %c0_101 = arith.constant 0 : index
    %c0_102 = arith.constant 0 : index
    %c0_103 = arith.constant 0 : index
    %186 = arith.index_cast %162 : i32 to index
    %187 = vector.load %arg5[%c0_101, %c0_102, %c0_103, %186] : memref<1x1x1x1792xf32, #tpu.memory_space<vmem>>, vector<1x1x1x256xf32>
    %188 = vector.shape_cast %187 : vector<1x1x1x256xf32> to vector<1x256xf32>
    %189 = vector.shape_cast %185 : vector<1x256xf32> to vector<1x1x1x256xf32>
    tpu.vector_store %arg5[%c0_101, %c0_102, %c0_103, %186], %189 {strides = array<i32>} : memref<1x1x1x1792xf32, #tpu.memory_space<vmem>>, vector<1x1x1x256xf32>,
    %c6_i32 = arith.constant 6 : i32
    %c256_i32_104 = arith.constant 256 : i32
    %190 = arith.muli %c6_i32, %c256_i32_104 : i32
    %191 = tpu.assume_multiple %190, 128 : i32
    %c0_105 = arith.constant 0 : index
    %c0_106 = arith.constant 0 : index
    %c0_107 = arith.constant 0 : index
    %192 = arith.index_cast %191 : i32 to index
    %193 = vector.load %arg3[%c0_105, %c0_106, %c0_107, %192] : memref<1x1x4x1792xf32, #tpu.memory_space<vmem>>, vector<1x1x4x256xf32>
    %194 = vector.shape_cast %193 : vector<1x1x4x256xf32> to vector<4x256xf32>
    %cst_108 = arith.constant dense<0.000000e+00> : vector<12x256xf32>
    %195 = tpu.matmul %1, %194, %cst_108 {dimension_numbers = #tpu.dot_dimension_numbers<[1], [0], [0], [1], [0, 0, 1, 1], [], []>} : vector<12x4xf32>, vector<4x256xf32>, vector<12x256xf32> -> vector<12x256xf32>
    %196 = vector.broadcast %3 : vector<12x1xf32> to vector<12x256xf32>
    %197 = arith.addf %195, %196 : vector<12x256xf32>
    %cst_109 = arith.constant 0.000000e+00 : f32
    %198 = vector.broadcast %cst_109 : f32 to vector<12x256xf32>
    %199 = arith.maximumf %197, %198 : vector<12x256xf32>
    %cst_110 = arith.constant dense<0.000000e+00> : vector<12x256xf32>
    %200 = tpu.matmul %5, %199, %cst_110 {dimension_numbers = #tpu.dot_dimension_numbers<[1], [0], [0], [1], [0, 0, 1, 1], [], []>} : vector<12x12xf32>, vector<12x256xf32>, vector<12x256xf32> -> vector<12x256xf32>
    %201 = vector.broadcast %7 : vector<12x1xf32> to vector<12x256xf32>
    %202 = arith.addf %200, %201 : vector<12x256xf32>
    %cst_111 = arith.constant 0.000000e+00 : f32
    %203 = vector.broadcast %cst_111 : f32 to vector<12x256xf32>
    %204 = arith.maximumf %202, %203 : vector<12x256xf32>
    %cst_112 = arith.constant dense<0.000000e+00> : vector<6x256xf32>
    %205 = tpu.matmul %9, %204, %cst_112 {dimension_numbers = #tpu.dot_dimension_numbers<[1], [0], [0], [1], [0, 0, 1, 1], [], []>} : vector<6x12xf32>, vector<12x256xf32>, vector<6x256xf32> -> vector<6x256xf32>
    %206 = vector.broadcast %11 : vector<6x1xf32> to vector<6x256xf32>
    %207 = arith.addf %205, %206 : vector<6x256xf32>
    %cst_113 = arith.constant 0.000000e+00 : f32
    %208 = vector.broadcast %cst_113 : f32 to vector<6x256xf32>
    %209 = arith.maximumf %207, %208 : vector<6x256xf32>
    %cst_114 = arith.constant dense<0.000000e+00> : vector<1x256xf32>
    %210 = tpu.matmul %13, %209, %cst_114 {dimension_numbers = #tpu.dot_dimension_numbers<[1], [0], [0], [1], [0, 0, 1, 1], [], []>} : vector<1x6xf32>, vector<6x256xf32>, vector<1x256xf32> -> vector<1x256xf32>
    %211 = vector.broadcast %15 : vector<1x1xf32> to vector<1x256xf32>
    %212 = arith.addf %210, %211 : vector<1x256xf32>
    %cst_115 = arith.constant 0.000000e+00 : f32
    %213 = vector.broadcast %cst_115 : f32 to vector<1x256xf32>
    %214 = arith.maximumf %212, %213 : vector<1x256xf32>
    %c0_116 = arith.constant 0 : index
    %c0_117 = arith.constant 0 : index
    %c0_118 = arith.constant 0 : index
    %215 = arith.index_cast %191 : i32 to index
    %216 = vector.load %arg5[%c0_116, %c0_117, %c0_118, %215] : memref<1x1x1x1792xf32, #tpu.memory_space<vmem>>, vector<1x1x1x256xf32>
    %217 = vector.shape_cast %216 : vector<1x1x1x256xf32> to vector<1x256xf32>
    %218 = vector.shape_cast %214 : vector<1x256xf32> to vector<1x1x1x256xf32>
    tpu.vector_store %arg5[%c0_116, %c0_117, %c0_118, %215], %218 {strides = array<i32>} : memref<1x1x1x1792xf32, #tpu.memory_space<vmem>>, vector<1x1x1x256xf32>,
    %c7_i32 = arith.constant 7 : i32
    return
  }
  func.func @transform_0(%arg0: i32, %arg1: i32, %arg2: i32) -> (i32, i32, i32, i32) {
    %c0_i32 = arith.constant 0 : i32
    %c0_i32_0 = arith.constant 0 : i32
    return %arg0, %arg1, %c0_i32, %arg2 : i32, i32, i32, i32
  }
  func.func @transform_1(%arg0: i32, %arg1: i32, %arg2: i32) -> (i32, i32, i32) {
    %c0_i32 = arith.constant 0 : i32
    %c0_i32_0 = arith.constant 0 : i32
    %c0_i32_1 = arith.constant 0 : i32
    return %arg0, %c0_i32, %c0_i32_0 : i32, i32, i32
  }
  func.func @transform_2(%arg0: i32, %arg1: i32, %arg2: i32) -> (i32, i32, i32, i32) {
    %c0_i32 = arith.constant 0 : i32
    %c0_i32_0 = arith.constant 0 : i32
    return %arg0, %arg1, %c0_i32, %arg2 : i32, i32, i32, i32
  }
}

</mosaic_0001>

<llo_original>
// kernel: hamiltonian_forward.1
$region0: #{hamiltonian_forward.1}
  #allocation0 [shape = 'u32[]', space=smem, size = 0x4, offset = 0x4, fixed_abs, tag = 'smem constant byte address 0x4 - core index']
  #allocation1 [shape = 'u32[144,128]{1,0:T(1,128)}', space=vmem, size = 0x12000, scoped, tag = 'internal scratch']
  %s0 = inlined_call_operand.vmem [shape: f32[2,2,4,1792], index: 0, kind: input, shape index: {}]
  %s1 = inlined_call_operand.vmem [shape: f32[2,12,1024], index: 1, kind: input, shape index: {}]
  %s2 = inlined_call_operand.vmem [shape: f32[2,2,1,1792], index: 2, kind: output, shape index: {}]
  %s3 = sld [smem:[#allocation0]]
  $region41: #{hamiltonian_forward.1} parent=0
    _
  %s5 = ssub.s32 1, %s3
  %s6 = scalar_select 0, %s5, %s3
  loop: start=0, step=1, limit=6
  $region2: #{hamiltonian_forward.1} parent=0 // loop_pre_header
    _
  $region3: #{hamiltonian_forward.1} parent=0 // loop_header
    %s8 = sphi 0, %s12
    %p9 = scmp.ge.s32.totalorder %s8, 6
    %s15 = sphi 0, %s34
    %s16 = sphi 0, %s30
    %s17 = sphi 0, %s26
    %s18 = sphi 0, %s15
    %s19 = sphi 0, %s16
    %s20 = sphi 0, %s17
    %s21 = sphi 0, %s18
    %s22 = sphi 0, %s19
    %s23 = sphi 0, %s20
    %s41 = sphi 0, %s43
    %s44 = sphi 0, %s41
    %s45 = sphi 0, %s44
    %s61 = sphi 0, %s45
    %s67 = sphi 0, %s69
    %s70 = sphi 0, %s67
    %s71 = sphi 0, %s70
    %s87 = sphi 0, %s71
    %s97 = sphi 0, %s99
    %s100 = sphi 0, %s97
    %s101 = sphi 0, %s100
    %s117 = sphi 0, %s101
  $region4: #{hamiltonian_forward.1} parent=0 // loop_header_branch
    %11 = sbr.rel (%p9) target = $region8
  $region5: #{hamiltonian_forward.1} parent=0 // loop_body
    %s13 = ssub.s32 %s8, 1
    %s14 = ssub.s32 %s8, 2
    %s24 = sadd.s32 1, %s17
    %p25 = scmp.ge.s32.totalorder %s24, 1
    %s26 = scalar_select %p25, 0, %s24
    %s27 = sadd.s32 1, %s16
    %s28 = scalar_select %p25, %s27, %s16
    %p29 = scmp.ge.s32.totalorder %s28, 2
    %s30 = scalar_select %p29, 0, %s28
    %s31 = sadd.s32 1, %s15
    %s32 = scalar_select %p29, %s31, %s15
    %p33 = scmp.ge.s32.totalorder %s32, 2
    %s34 = scalar_select %p33, 0, %s32
    %s35 = ssub.s32 %s15, %s34
    %s36 = ssub.s32 %s16, %s30
    %s37 = sor.u32 %s35, %s36
    %s38 = ssub.s32 %s17, %s26
    %s39 = sor.u32 %s37, %s38
    %p40 = scmp.eq.s32.totalorder %s39, 0
    %s42 = sadd.s32 %s41, 1
    %s43 = scalar_select %p40, %s41, %s42
    %p46 = pneg %p40
    %p47 = scmp.eq.s32.totalorder %s8, 3
    %p48 = por %p46, %p47
    %p49 = scmp.ne.s32.totalorder %s41, %s44
    %p50 = scmp.eq.s32.totalorder %s8, 0
    %p51 = por %p49, %p50
    %p52 = scmp.ne.s32.totalorder %s41, %s44
    %p53 = scmp.eq.s32.totalorder %s13, 3
    %p54 = por %p52, %p53
    %p55 = scmp.ne.s32.totalorder %s44, %s45
    %p56 = scmp.eq.s32.totalorder %s13, 0
    %p57 = por %p55, %p56
    %p58 = scmp.ne.s32.totalorder %s44, %s45
    %p59 = scmp.eq.s32.totalorder %s14, 3
    %p60 = por %p58, %p59
    %p62 = scmp.ne.s32.totalorder %s45, %s61
    %p63 = scmp.eq.s32.totalorder %s14, 0
    %p64 = por %p62, %p63
    %s65 = ssub.s32 %s15, %s34
    %p66 = scmp.eq.s32.totalorder %s65, 0
    %s68 = sadd.s32 %s67, 1
    %s69 = scalar_select %p66, %s67, %s68
    %p72 = pneg %p66
    %p73 = scmp.eq.s32.totalorder %s8, 3
    %p74 = por %p72, %p73
    %p75 = scmp.ne.s32.totalorder %s67, %s70
    %p76 = scmp.eq.s32.totalorder %s8, 0
    %p77 = por %p75, %p76
    %p78 = scmp.ne.s32.totalorder %s67, %s70
    %p79 = scmp.eq.s32.totalorder %s13, 3
    %p80 = por %p78, %p79
    %p81 = scmp.ne.s32.totalorder %s70, %s71
    %p82 = scmp.eq.s32.totalorder %s13, 0
    %p83 = por %p81, %p82
    %p84 = scmp.ne.s32.totalorder %s70, %s71
    %p85 = scmp.eq.s32.totalorder %s14, 3
    %p86 = por %p84, %p85
    %p88 = scmp.ne.s32.totalorder %s71, %s87
    %p89 = scmp.eq.s32.totalorder %s14, 0
    %p90 = por %p88, %p89
    %s91 = ssub.s32 %s15, %s34
    %s92 = ssub.s32 %s16, %s30
    %s93 = sor.u32 %s91, %s92
    %s94 = ssub.s32 %s17, %s26
    %s95 = sor.u32 %s93, %s94
    %p96 = scmp.eq.s32.totalorder %s95, 0
    %s98 = sadd.s32 %s97, 1
    %s99 = scalar_select %p96, %s97, %s98
    %p102 = pneg %p96
    %p103 = scmp.eq.s32.totalorder %s8, 3
    %p104 = por %p102, %p103
    %p105 = scmp.ne.s32.totalorder %s97, %s100
    %p106 = scmp.eq.s32.totalorder %s8, 0
    %p107 = por %p105, %p106
    %p108 = scmp.ne.s32.totalorder %s97, %s100
    %p109 = scmp.eq.s32.totalorder %s13, 3
    %p110 = por %p108, %p109
    %p111 = scmp.ne.s32.totalorder %s100, %s101
    %p112 = scmp.eq.s32.totalorder %s13, 0
    %p113 = por %p111, %p112
    %p114 = scmp.ne.s32.totalorder %s100, %s101
    %p115 = scmp.eq.s32.totalorder %s14, 3
    %p116 = por %p114, %p115
    %p118 = scmp.ne.s32.totalorder %s101, %s117
    %p119 = scmp.eq.s32.totalorder %s14, 0
    %p120 = por %p118, %p119
    %p121 = scmp.le.s32.totalorder 1, %s8
    %p122 = scmp.lt.s32.totalorder %s8, 5
    %p123 = pnand %p121, %p122
    %p124 = pneg %p123
    // Predicated region
    $region9: #{hamiltonian_forward.1} parent=5 // pred_check
      _
    $region10: #{hamiltonian_forward.1} parent=5 // pred_check_branch
      %126 = sbr.rel (%p123) target = $region12
    $region11: #{hamiltonian_forward.1} parent=5 // pred_region
      %s127 = ssub.s32 %s8, 1
    $region12: #{hamiltonian_forward.1} parent=5 // pred_fallthru
      _
    %p128 = scmp.lt.s32.totalorder %s8, 4
    // Predicated region
    $region13: #{hamiltonian_forward.1} parent=5 // pred_check
      %p129 = pneg %p128
    $region14: #{hamiltonian_forward.1} parent=5 // pred_check_branch
      %131 = sbr.rel (%p129) target = $region16
    $region15: #{hamiltonian_forward.1} parent=5 // pred_region
      // Predicated region
      $region17: #{hamiltonian_forward.1} parent=15 // pred_check
        %p132 = pneg %p51
      $region18: #{hamiltonian_forward.1} parent=15 // pred_check_branch
        %134 = sbr.rel (%p132) target = $region20
      $region19: #{hamiltonian_forward.1} parent=15 // pred_region
        %s135 = smul.u32 14, %s17
        %p136 = scmp.lt.s32.totalorder %s15, 1
        %s137 = scalar_select %p136, %s15, 1
        %p138 = scmp.lt.s32.totalorder %s16, 1
        %s139 = scalar_select %p138, %s16, 1
        %p140 = scmp.lt.s32.totalorder %s135, 13
        %s141 = scalar_select %p140, %s135, 13
        %s142 = smul.addr %s139, 14
        %s143 = sadd.s32 %s141, %s142
        %s144 = smul.addr %s137, 28
        %s145 = sadd.s32 %s143, %s144
        %s146 = smul.addr %s145, 4
        %s147 = scalar_lea.vmem %s0, %s146
        %s148 = smul.u32 14, %s17
      $region20: #{hamiltonian_forward.1} parent=15 // pred_fallthru
        _
      // Predicated region
      $region21: #{hamiltonian_forward.1} parent=15 // pred_check
        %p149 = pneg %p77
      $region22: #{hamiltonian_forward.1} parent=15 // pred_check_branch
        %151 = sbr.rel (%p149) target = $region24
      $region23: #{hamiltonian_forward.1} parent=15 // pred_region
        %p152 = scmp.lt.s32.totalorder %s15, 1
        %s153 = scalar_select %p152, %s15, 1
        %s154 = smul.addr %s153, 16
        %s155 = smul.addr %s154, 8
        %s156 = scalar_lea.vmem %s1, %s155
      $region24: #{hamiltonian_forward.1} parent=15 // pred_fallthru
        _
    $region16: #{hamiltonian_forward.1} parent=5 // pred_fallthru
      _
    %p157 = scmp.le.s32.totalorder 1, %s8
    %p158 = scmp.lt.s32.totalorder %s8, 5
    %p159 = pnand %p157, %p158
    %p160 = pneg %p159
    // Predicated region
    $region25: #{hamiltonian_forward.1} parent=5 // pred_check
      _
    $region26: #{hamiltonian_forward.1} parent=5 // pred_check_branch
      %162 = sbr.rel (%p159) target = $region28
    $region27: #{hamiltonian_forward.1} parent=5 // pred_region
      %s163 = ssub.s32 %s8, 1
      %s164 = smul.u32 14, %s20
      %p165 = scmp.lt.s32.totalorder %s18, 1
      %s166 = scalar_select %p165, %s18, 1
      %p167 = scmp.lt.s32.totalorder %s19, 1
      %s168 = scalar_select %p167, %s19, 1
      %p169 = scmp.lt.s32.totalorder %s164, 13
      %s170 = scalar_select %p169, %s164, 13
      %s171 = smul.addr %s168, 14
      %s172 = sadd.s32 %s170, %s171
      %s173 = smul.addr %s166, 28
      %s174 = sadd.s32 %s172, %s173
      %s175 = smul.addr %s174, 4
      %s176 = scalar_lea.vmem %s0, %s175
      %p177 = pneg %p57
      %p178 = pneg %p54
      %p179 = scmp.lt.s32.totalorder %s18, 1
      %s180 = scalar_select %p179, %s18, 1
      %s181 = smul.addr %s180, 16
      %s182 = smul.addr %s181, 8
      %s183 = scalar_lea.vmem %s1, %s182
      %p184 = pneg %p83
      %p185 = pneg %p80
      %p186 = pneg %p113
      %p187 = pneg %p110
      %s188 = smul.u32 14, %s20
      %p189 = scmp.lt.s32.totalorder %s18, 1
      %s190 = scalar_select %p189, %s18, 1
      %p191 = scmp.lt.s32.totalorder %s19, 1
      %s192 = scalar_select %p191, %s19, 1
      %p193 = scmp.lt.s32.totalorder %s188, 13
      %s194 = scalar_select %p193, %s188, 13
      %s195 = smul.addr %s192, 14
      %s196 = sadd.s32 %s194, %s195
      %s197 = smul.addr %s190, 28
      %s198 = sadd.s32 %s196, %s197
      %s199 = scalar_lea.vmem %s2, %s198
      %s200 = smul.u32 14, %s20
      %p201 = scmp.lt.s32.totalorder %s18, 1
      %s202 = scalar_select %p201, %s18, 1
      %p203 = scmp.lt.s32.totalorder %s19, 1
      %s204 = scalar_select %p203, %s19, 1
      %p205 = scmp.lt.s32.totalorder %s200, 13
      %s206 = scalar_select %p205, %s200, 13
      %s207 = smul.addr %s204, 14
      %s208 = sadd.s32 %s206, %s207
      %s209 = smul.addr %s202, 28
      %s210 = sadd.s32 %s208, %s209
      %s211 = smul.addr %s210, 4
      %s212 = scalar_lea.vmem %s0, %s211
      %s213 = smul.u32 14, %s20
      %p214 = scmp.lt.s32.totalorder %s18, 1
      %s215 = scalar_select %p214, %s18, 1
      %s216 = smul.addr %s215, 16
      %s217 = smul.addr %s216, 8
      %s218 = scalar_lea.vmem %s1, %s217
      %s219 = smul.u32 14, %s20
      %p220 = scmp.lt.s32.totalorder %s18, 1
      %s221 = scalar_select %p220, %s18, 1
      %p222 = scmp.lt.s32.totalorder %s19, 1
      %s223 = scalar_select %p222, %s19, 1
      %p224 = scmp.lt.s32.totalorder %s219, 13
      %s225 = scalar_select %p224, %s219, 13
      %s226 = smul.addr %s223, 14
      %s227 = sadd.s32 %s225, %s226
      %s228 = smul.addr %s221, 28
      %s229 = sadd.s32 %s227, %s228
      %s230 = scalar_lea.vmem %s2, %s229
      %s231 = smul.u32 14, %s20
      %v232 = vld [vmem:[%s218] sm:$0xff]
      %v233 = vld [vmem:[%s218 + $0x40] sm:$0xf]
      %v234 = vld [vmem:[%s218 + $0x8] sm:$0xff]
      %v235 = vld [vmem:[%s218 + $0x48] sm:$0xf]
      %v236 = vld [vmem:[%s218 + $0x10] sm:$0xff]
      %v237 = vld [vmem:[%s218 + $0x50] sm:$0xf]
      %v238 = vld [vmem:[%s218 + $0x18] sm:$0xff]
      %v239 = vld [vmem:[%s218 + $0x58] sm:$0xf]
      %v240 = vld [vmem:[%s218 + $0x20] sm:$0x3f]
      %v241 = vld [vmem:[%s218 + $0x28] sm:$0x3f]
      %v242 = vld [vmem:[%s218 + $0x30] ss:$0 sm:$0xff]
      %v243 = vld [vmem:[%s218 + $0x38] ss:$0 sm:$0xff]
      %v244 = vld [vmem:[%s212] sm:$0xff]
      %246 = vset.pattern.permute.xlu0 0
      %247 = vperm.xlu0 %246, %v234
      %v248 = vpop.permute.xlu0 %247
      %251 = vset.pattern.permute.xlu0 0
      %252 = vperm.xlu0 %251, %v235
      %v253 = vpop.permute.xlu0 %252
      %v256 = vcombine.high %v244, %v244
      %vm257 = vcmask 31744
      %v259 = vsel %vm257, %v232, 0
      %v262 = vsel %vm257, %v233, 0
      %vm264 = vcmask 1043456
      %v265 = vsel %vm264, %v244, 0
      %v267 = vsel %vm264, %v256, 0
      %269 = vmatprep.subr.mxu0 %v267
      %270 = vmatpush1.msra.mxu0 %v265
      %271 = vmatprep.subr.mxu0 0.0
      %272 = vmatpush1.msra.mxu0 0.0
      %273 = vmatprep.subr.mxu0 0.0
      %274 = vmatpush1.msra.mxu0 0.0
      %275 = vmatprep.subr.mxu0 0.0
      %276 = vmatpush1.msra.mxu0 0.0
      %277 = vmatprep.subr.mxu0 0.0
      %278 = vmatpush1.msra.mxu0 0.0
      %279 = vmatprep.subr.mxu0 0.0
      %280 = vmatpush1.msra.mxu0 0.0
      %281 = vmatprep.subr.mxu0 0.0
      %282 = vmatpush1.msra.mxu0 0.0
      %283 = vmatprep.subr.mxu0 0.0
      %284 = vmatpush1.msra.mxu0 0.0
      %285 = vmatprep.subr.mxu0 0.0
      %286 = vmatpush1.msra.mxu0 0.0
      %287 = vmatprep.subr.mxu0 0.0
      %288 = vmatpush1.msra.mxu0 0.0
      %289 = vmatprep.subr.mxu0 0.0
      %290 = vmatpush1.msra.mxu0 0.0
      %291 = vmatprep.subr.mxu0 0.0
      %292 = vmatpush1.msra.mxu0 0.0
      %293 = vmatprep.subr.mxu0 0.0
      %294 = vmatpush1.msra.mxu0 0.0
      %295 = vmatprep.subr.mxu0 0.0
      %296 = vmatpush1.msra.mxu0 0.0
      %297 = vmatprep.subr.mxu0 0.0
      %298 = vmatpush1.msra.mxu0 0.0
      %299 = vmatprep.subr.mxu0 0.0
      %300 = vmatpush1.msra.mxu0 0.0
      %301 = vmatprep.subr.mxu0 0.0
      %302 = vmatpush1.msra.mxu0 0.0
      %303 = vmatprep.subr.mxu0 0.0
      %304 = vmatpush1.msra.mxu0 0.0
      %305 = vmatprep.subr.mxu0 0.0
      %306 = vmatpush1.msra.mxu0 0.0
      %307 = vmatprep.subr.mxu0 0.0
      %308 = vmatpush1.msra.mxu0 0.0
      %309 = vmatprep.subr.mxu0 0.0
      %310 = vmatpush1.msra.mxu0 0.0
      %311 = vmatprep.subr.mxu0 0.0
      %312 = vmatpush1.msra.mxu0 0.0
      %313 = vmatprep.subr.mxu0 0.0
      %314 = vmatpush1.msra.mxu0 0.0
      %315 = vmatprep.subr.mxu0 0.0
      %316 = vmatpush1.msra.mxu0 0.0
      %317 = vmatprep.subr.mxu0 0.0
      %318 = vmatpush1.msra.mxu0 0.0
      %319 = vmatprep.subr.mxu0 0.0
      %320 = vmatpush1.msra.mxu0 0.0
      %321 = vmatprep.subr.mxu0 0.0
      %322 = vmatpush1.msra.mxu0 0.0
      %323 = vmatprep.subr.mxu0 0.0
      %324 = vmatpush1.msra.mxu0 0.0
      %325 = vmatprep.subr.mxu0 0.0
      %326 = vmatpush1.msra.mxu0 0.0
      %327 = vmatprep.subr.mxu0 0.0
      %328 = vmatpush1.msra.mxu0 0.0
      %329 = vmatprep.subr.mxu0 0.0
      %330 = vmatpush1.msra.mxu0 0.0
      %331 = vmatprep.subr.mxu0 0.0
      %332 = vmatpush1.msra.mxu0 0.0
      %333 = vmatprep.mubr.f32.mxu0 0.0
      %334 = vmatmul.mubr.f32.gmra.mrb[0].mxu0 %v259
      %v335 = vpop.f32.mrb[0].mxu0
      %v336 = vadd.f32 %v248, %v335
      %v337 = vpop.f32.mrb[0].mxu0
      %v338 = vadd.f32 %v248, %v337
      %339 = vmatprep.mubr.f32.mxu0 0.0
      %340 = vmatmul.mubr.f32.gmra.mrb[0].mxu0 %v262
      %v341 = vpop.f32.mrb[0].mxu0
      %v342 = vadd.f32 %v253, %v341
      %v343 = vpop.f32.mrb[0].mxu0
      %v344 = vadd.f32 %v253, %v343
      %345 = vdwg.mxu0
      %v346 = vmax.f32 %v336, 0.0
      %v347 = vmax.f32 %v338, 0.0
      %v348 = vmax.f32 %v342, 0.0
      %v349 = vmax.f32 %v344, 0.0
      %351 = vset.pattern.permute.xlu0 0
      %352 = vperm.xlu0 %351, %v238
      %v353 = vpop.permute.xlu0 %352
      %356 = vset.pattern.permute.xlu0 0
      %357 = vperm.xlu0 %356, %v239
      %v358 = vpop.permute.xlu0 %357
      %vm360 = vcmask 97280
      %v362 = vsel %vm360, %v236, 0
      %v365 = vsel %vm360, %v237, 0
      %v368 = vsel %vm264, %v348, 0
      %v371 = vsel %vm264, %v349, 0
      %373 = vmatprep.subr.mxu0 %v347
      %374 = vmatpush1.msra.mxu0 %v346
      %375 = vmatprep.subr.mxu0 %v371
      %376 = vmatpush1.msra.mxu0 %v368
      %377 = vmatprep.subr.mxu0 0.0
      %378 = vmatpush1.msra.mxu0 0.0
      %379 = vmatprep.subr.mxu0 0.0
      %380 = vmatpush1.msra.mxu0 0.0
      %381 = vmatprep.subr.mxu0 0.0
      %382 = vmatpush1.msra.mxu0 0.0
      %383 = vmatprep.subr.mxu0 0.0
      %384 = vmatpush1.msra.mxu0 0.0
      %385 = vmatprep.subr.mxu0 0.0
      %386 = vmatpush1.msra.mxu0 0.0
      %387 = vmatprep.subr.mxu0 0.0
      %388 = vmatpush1.msra.mxu0 0.0
      %389 = vmatprep.subr.mxu0 0.0
      %390 = vmatpush1.msra.mxu0 0.0
      %391 = vmatprep.subr.mxu0 0.0
      %392 = vmatpush1.msra.mxu0 0.0
      %393 = vmatprep.subr.mxu0 0.0
      %394 = vmatpush1.msra.mxu0 0.0
      %395 = vmatprep.subr.mxu0 0.0
      %396 = vmatpush1.msra.mxu0 0.0
      %397 = vmatprep.subr.mxu0 0.0
      %398 = vmatpush1.msra.mxu0 0.0
      %399 = vmatprep.subr.mxu0 0.0
      %400 = vmatpush1.msra.mxu0 0.0
      %401 = vmatprep.subr.mxu0 0.0
      %402 = vmatpush1.msra.mxu0 0.0
      %403 = vmatprep.subr.mxu0 0.0
      %404 = vmatpush1.msra.mxu0 0.0
      %405 = vmatprep.subr.mxu0 0.0
      %406 = vmatpush1.msra.mxu0 0.0
      %407 = vmatprep.subr.mxu0 0.0
      %408 = vmatpush1.msra.mxu0 0.0
      %409 = vmatprep.subr.mxu0 0.0
      %410 = vmatpush1.msra.mxu0 0.0
      %411 = vmatprep.subr.mxu0 0.0
      %412 = vmatpush1.msra.mxu0 0.0
      %413 = vmatprep.subr.mxu0 0.0
      %414 = vmatpush1.msra.mxu0 0.0
      %415 = vmatprep.subr.mxu0 0.0
      %416 = vmatpush1.msra.mxu0 0.0
      %417 = vmatprep.subr.mxu0 0.0
      %418 = vmatpush1.msra.mxu0 0.0
      %419 = vmatprep.subr.mxu0 0.0
      %420 = vmatpush1.msra.mxu0 0.0
      %421 = vmatprep.subr.mxu0 0.0
      %422 = vmatpush1.msra.mxu0 0.0
      %423 = vmatprep.subr.mxu0 0.0
      %424 = vmatpush1.msra.mxu0 0.0
      %425 = vmatprep.subr.mxu0 0.0
      %426 = vmatpush1.msra.mxu0 0.0
      %427 = vmatprep.subr.mxu0 0.0
      %428 = vmatpush1.msra.mxu0 0.0
      %429 = vmatprep.subr.mxu0 0.0
      %430 = vmatpush1.msra.mxu0 0.0
      %431 = vmatprep.subr.mxu0 0.0
      %432 = vmatpush1.msra.mxu0 0.0
      %433 = vmatprep.subr.mxu0 0.0
      %434 = vmatpush1.msra.mxu0 0.0
      %435 = vmatprep.subr.mxu0 0.0
      %436 = vmatpush1.msra.mxu0 0.0
      %437 = vmatprep.mubr.f32.mxu0 0.0
      %438 = vmatmul.mubr.f32.gmra.mrb[0].mxu0 %v362
      %v439 = vpop.f32.mrb[0].mxu0
      %v440 = vadd.f32 %v353, %v439
      %v441 = vpop.f32.mrb[0].mxu0
      %v442 = vadd.f32 %v353, %v441
      %443 = vmatprep.mubr.f32.mxu0 0.0
      %444 = vmatmul.mubr.f32.gmra.mrb[0].mxu0 %v365
      %v445 = vpop.f32.mrb[0].mxu0
      %v446 = vadd.f32 %v358, %v445
      %v447 = vpop.f32.mrb[0].mxu0
      %v448 = vadd.f32 %v358, %v447
      %449 = vdwg.mxu0
      %v450 = vmax.f32 %v440, 0.0
      %v451 = vmax.f32 %v442, 0.0
      %v452 = vmax.f32 %v446, 0.0
      %v453 = vmax.f32 %v448, 0.0
      %455 = vset.pattern.permute.xlu0 0
      %456 = vperm.xlu0 %455, %v241
      %v457 = vpop.permute.xlu0 %456
      %v460 = vsel %vm360, %v240, 0
      %v463 = vsel %vm264, %v452, 0
      %v466 = vsel %vm264, %v453, 0
      %468 = vmatprep.subr.mxu0 %v451
      %469 = vmatpush1.msra.mxu0 %v450
      %470 = vmatprep.subr.mxu0 %v466
      %471 = vmatpush1.msra.mxu0 %v463
      %472 = vmatprep.subr.mxu0 0.0
      %473 = vmatpush1.msra.mxu0 0.0
      %474 = vmatprep.subr.mxu0 0.0
      %475 = vmatpush1.msra.mxu0 0.0
      %476 = vmatprep.subr.mxu0 0.0
      %477 = vmatpush1.msra.mxu0 0.0
      %478 = vmatprep.subr.mxu0 0.0
      %479 = vmatpush1.msra.mxu0 0.0
      %480 = vmatprep.subr.mxu0 0.0
      %481 = vmatpush1.msra.mxu0 0.0
      %482 = vmatprep.subr.mxu0 0.0
      %483 = vmatpush1.msra.mxu0 0.0
      %484 = vmatprep.subr.mxu0 0.0
      %485 = vmatpush1.msra.mxu0 0.0
      %486 = vmatprep.subr.mxu0 0.0
      %487 = vmatpush1.msra.mxu0 0.0
      %488 = vmatprep.subr.mxu0 0.0
      %489 = vmatpush1.msra.mxu0 0.0
      %490 = vmatprep.subr.mxu0 0.0
      %491 = vmatpush1.msra.mxu0 0.0
      %492 = vmatprep.subr.mxu0 0.0
      %493 = vmatpush1.msra.mxu0 0.0
      %494 = vmatprep.subr.mxu0 0.0
      %495 = vmatpush1.msra.mxu0 0.0
      %496 = vmatprep.subr.mxu0 0.0
      %497 = vmatpush1.msra.mxu0 0.0
      %498 = vmatprep.subr.mxu0 0.0
      %499 = vmatpush1.msra.mxu0 0.0
      %500 = vmatprep.subr.mxu0 0.0
      %501 = vmatpush1.msra.mxu0 0.0
      %502 = vmatprep.subr.mxu0 0.0
      %503 = vmatpush1.msra.mxu0 0.0
      %504 = vmatprep.subr.mxu0 0.0
      %505 = vmatpush1.msra.mxu0 0.0
      %506 = vmatprep.subr.mxu0 0.0
      %507 = vmatpush1.msra.mxu0 0.0
      %508 = vmatprep.subr.mxu0 0.0
      %509 = vmatpush1.msra.mxu0 0.0
      %510 = vmatprep.subr.mxu0 0.0
      %511 = vmatpush1.msra.mxu0 0.0
      %512 = vmatprep.subr.mxu0 0.0
      %513 = vmatpush1.msra.mxu0 0.0
      %514 = vmatprep.subr.mxu0 0.0
      %515 = vmatpush1.msra.mxu0 0.0
      %516 = vmatprep.subr.mxu0 0.0
      %517 = vmatpush1.msra.mxu0 0.0
      %518 = vmatprep.subr.mxu0 0.0
      %519 = vmatpush1.msra.mxu0 0.0
      %520 = vmatprep.subr.mxu0 0.0
      %521 = vmatpush1.msra.mxu0 0.0
      %522 = vmatprep.subr.mxu0 0.0
      %523 = vmatpush1.msra.mxu0 0.0
      %524 = vmatprep.subr.mxu0 0.0
      %525 = vmatpush1.msra.mxu0 0.0
      %526 = vmatprep.subr.mxu0 0.0
      %527 = vmatpush1.msra.mxu0 0.0
      %528 = vmatprep.subr.mxu0 0.0
      %529 = vmatpush1.msra.mxu0 0.0
      %530 = vmatprep.subr.mxu0 0.0
      %531 = vmatpush1.msra.mxu0 0.0
      %532 = vmatprep.mubr.f32.mxu0 0.0
      %533 = vmatmul.mubr.f32.gmra.mrb[0].mxu0 %v460
      %v534 = vpop.f32.mrb[0].mxu0
      %v535 = vadd.f32 %v457, %v534
      %v536 = vpop.f32.mrb[0].mxu0
      %v537 = vadd.f32 %v457, %v536
      %538 = vdwg.mxu0
      %v539 = vmax.f32 %v535, 0.0
      %v540 = vmax.f32 %v537, 0.0
      %542 = vset.pattern.permute.xlu0 0
      %543 = vperm.xlu0 %542, %v243
      %v544 = vpop.permute.xlu0 %543
      %vm546 = vcmask 48128
      %v548 = vsel %vm546, %v242, 0
      %vm550 = vcmask 1045504
      %v552 = vsel %vm550, %v539, 0
      %v555 = vsel %vm550, %v540, 0
      %557 = vmatprep.subr.mxu0 %v555
      %558 = vmatpush1.msra.mxu0 %v552
      %559 = vmatprep.subr.mxu0 0.0
      %560 = vmatpush1.msra.mxu0 0.0
      %561 = vmatprep.subr.mxu0 0.0
      %562 = vmatpush1.msra.mxu0 0.0
      %563 = vmatprep.subr.mxu0 0.0
      %564 = vmatpush1.msra.mxu0 0.0
      %565 = vmatprep.subr.mxu0 0.0
      %566 = vmatpush1.msra.mxu0 0.0
      %567 = vmatprep.subr.mxu0 0.0
      %568 = vmatpush1.msra.mxu0 0.0
      %569 = vmatprep.subr.mxu0 0.0
      %570 = vmatpush1.msra.mxu0 0.0
      %571 = vmatprep.subr.mxu0 0.0
      %572 = vmatpush1.msra.mxu0 0.0
      %573 = vmatprep.subr.mxu0 0.0
      %574 = vmatpush1.msra.mxu0 0.0
      %575 = vmatprep.subr.mxu0 0.0
      %576 = vmatpush1.msra.mxu0 0.0
      %577 = vmatprep.subr.mxu0 0.0
      %578 = vmatpush1.msra.mxu0 0.0
      %579 = vmatprep.subr.mxu0 0.0
      %580 = vmatpush1.msra.mxu0 0.0
      %581 = vmatprep.subr.mxu0 0.0
      %582 = vmatpush1.msra.mxu0 0.0
      %583 = vmatprep.subr.mxu0 0.0
      %584 = vmatpush1.msra.mxu0 0.0
      %585 = vmatprep.subr.mxu0 0.0
      %586 = vmatpush1.msra.mxu0 0.0
      %587 = vmatprep.subr.mxu0 0.0
      %588 = vmatpush1.msra.mxu0 0.0
      %589 = vmatprep.subr.mxu0 0.0
      %590 = vmatpush1.msra.mxu0 0.0
      %591 = vmatprep.subr.mxu0 0.0
      %592 = vmatpush1.msra.mxu0 0.0
      %593 = vmatprep.subr.mxu0 0.0
      %594 = vmatpush1.msra.mxu0 0.0
      %595 = vmatprep.subr.mxu0 0.0
      %596 = vmatpush1.msra.mxu0 0.0
      %597 = vmatprep.subr.mxu0 0.0
      %598 = vmatpush1.msra.mxu0 0.0
      %599 = vmatprep.subr.mxu0 0.0
      %600 = vmatpush1.msra.mxu0 0.0
      %601 = vmatprep.subr.mxu0 0.0
      %602 = vmatpush1.msra.mxu0 0.0
      %603 = vmatprep.subr.mxu0 0.0
      %604 = vmatpush1.msra.mxu0 0.0
      %605 = vmatprep.subr.mxu0 0.0
      %606 = vmatpush1.msra.mxu0 0.0
      %607 = vmatprep.subr.mxu0 0.0
      %608 = vmatpush1.msra.mxu0 0.0
      %609 = vmatprep.subr.mxu0 0.0
      %610 = vmatpush1.msra.mxu0 0.0
      %611 = vmatprep.subr.mxu0 0.0
      %612 = vmatpush1.msra.mxu0 0.0
      %613 = vmatprep.subr.mxu0 0.0
      %614 = vmatpush1.msra.mxu0 0.0
      %615 = vmatprep.subr.mxu0 0.0
      %616 = vmatpush1.msra.mxu0 0.0
      %617 = vmatprep.subr.mxu0 0.0
      %618 = vmatpush1.msra.mxu0 0.0
      %619 = vmatprep.subr.mxu0 0.0
      %620 = vmatpush1.msra.mxu0 0.0
      %621 = vmatprep.mubr.f32.mxu0 0.0
      %622 = vmatmul.mubr.f32.gmra.mrb[0].mxu0 %v548
      %v623 = vpop.f32.mrb[0].mxu0
      %v624 = vadd.f32 %v544, %v623
      %v625 = vpop.f32.mrb[0].mxu0
      %v626 = vadd.f32 %v544, %v625
      %627 = vdwg.mxu0
      %v628 = vmax.f32 %v624, 0.0
      %v629 = vmax.f32 %v626, 0.0
      %v632 = vcombine.low %v628, %v629
      %v634 = vunpack.c.l.s4 1966171168
      %v635 = vunpack.c.0.s8 %v634
      %v636 = vlaneseq
      %v637 = vshrl.u32 %v636, 7
      %v638 = vsub.s32 %v635, %v637
      %v639 = vrot.slane %v632, %v638
      %v641 = vunpack.c.l.s4 1966171168
      %v642 = vunpack.c.0.s8 %v641
      %v643 = vlaneseq
      %v644 = vshrl.u32 %v643, 7
      %v645 = vsub.s32 %v642, %v644
      %v646 = vrot.slane %v639, %v645
      %v648 = vlaneseq
      %vm649 = vcmp.ge.s32.totalorder %v648, 0
      %vm650 = vcmp.lt.s32.totalorder %v648, 256
      %vm651 = vmand %vm649, %vm650
      %652 = vst.msk [vmem:[%s230] sm:$0x3] %vm651, %v646
      %s653 = scalar_lea.vmem %s212, 8
      %v654 = vld [vmem:[%s653] sm:$0xff]
      %v656 = vcombine.high %v654, %v654
      %v657 = vsel %vm264, %v654, 0
      %v659 = vsel %vm264, %v656, 0
      %661 = vmatprep.subr.mxu0 %v659
      %662 = vmatpush1.msra.mxu0 %v657
      %663 = vmatprep.subr.mxu0 0.0
      %664 = vmatpush1.msra.mxu0 0.0
      %665 = vmatprep.subr.mxu0 0.0
      %666 = vmatpush1.msra.mxu0 0.0
      %667 = vmatprep.subr.mxu0 0.0
      %668 = vmatpush1.msra.mxu0 0.0
      %669 = vmatprep.subr.mxu0 0.0
      %670 = vmatpush1.msra.mxu0 0.0
      %671 = vmatprep.subr.mxu0 0.0
      %672 = vmatpush1.msra.mxu0 0.0
      %673 = vmatprep.subr.mxu0 0.0
      %674 = vmatpush1.msra.mxu0 0.0
      %675 = vmatprep.subr.mxu0 0.0
      %676 = vmatpush1.msra.mxu0 0.0
      %677 = vmatprep.subr.mxu0 0.0
      %678 = vmatpush1.msra.mxu0 0.0
      %679 = vmatprep.subr.mxu0 0.0
      %680 = vmatpush1.msra.mxu0 0.0
      %681 = vmatprep.subr.mxu0 0.0
      %682 = vmatpush1.msra.mxu0 0.0
      %683 = vmatprep.subr.mxu0 0.0
      %684 = vmatpush1.msra.mxu0 0.0
      %685 = vmatprep.subr.mxu0 0.0
      %686 = vmatpush1.msra.mxu0 0.0
      %687 = vmatprep.subr.mxu0 0.0
      %688 = vmatpush1.msra.mxu0 0.0
      %689 = vmatprep.subr.mxu0 0.0
      %690 = vmatpush1.msra.mxu0 0.0
      %691 = vmatprep.subr.mxu0 0.0
      %692 = vmatpush1.msra.mxu0 0.0
      %693 = vmatprep.subr.mxu0 0.0
      %694 = vmatpush1.msra.mxu0 0.0
      %695 = vmatprep.subr.mxu0 0.0
      %696 = vmatpush1.msra.mxu0 0.0
      %697 = vmatprep.subr.mxu0 0.0
      %698 = vmatpush1.msra.mxu0 0.0
      %699 = vmatprep.subr.mxu0 0.0
      %700 = vmatpush1.msra.mxu0 0.0
      %701 = vmatprep.subr.mxu0 0.0
      %702 = vmatpush1.msra.mxu0 0.0
      %703 = vmatprep.subr.mxu0 0.0
      %704 = vmatpush1.msra.mxu0 0.0
      %705 = vmatprep.subr.mxu0 0.0
      %706 = vmatpush1.msra.mxu0 0.0
      %707 = vmatprep.subr.mxu0 0.0
      %708 = vmatpush1.msra.mxu0 0.0
      %709 = vmatprep.subr.mxu0 0.0
      %710 = vmatpush1.msra.mxu0 0.0
      %711 = vmatprep.subr.mxu0 0.0
      %712 = vmatpush1.msra.mxu0 0.0
      %713 = vmatprep.subr.mxu0 0.0
      %714 = vmatpush1.msra.mxu0 0.0
      %715 = vmatprep.subr.mxu0 0.0
      %716 = vmatpush1.msra.mxu0 0.0
      %717 = vmatprep.subr.mxu0 0.0
      %718 = vmatpush1.msra.mxu0 0.0
      %719 = vmatprep.subr.mxu0 0.0
      %720 = vmatpush1.msra.mxu0 0.0
      %721 = vmatprep.subr.mxu0 0.0
      %722 = vmatpush1.msra.mxu0 0.0
      %723 = vmatprep.subr.mxu0 0.0
      %724 = vmatpush1.msra.mxu0 0.0
      %725 = vmatprep.mubr.f32.mxu0 0.0
      %726 = vmatmul.mubr.f32.gmra.mrb[0].mxu0 %v259
      %v727 = vpop.f32.mrb[0].mxu0
      %v728 = vadd.f32 %v248, %v727
      %v729 = vpop.f32.mrb[0].mxu0
      %v730 = vadd.f32 %v248, %v729
      %731 = vmatprep.mubr.f32.mxu0 0.0
      %732 = vmatmul.mubr.f32.gmra.mrb[0].mxu0 %v262
      %v733 = vpop.f32.mrb[0].mxu0
      %v734 = vadd.f32 %v253, %v733
      %v735 = vpop.f32.mrb[0].mxu0
      %v736 = vadd.f32 %v253, %v735
      %737 = vdwg.mxu0
      %v738 = vmax.f32 %v728, 0.0
      %v739 = vmax.f32 %v730, 0.0
      %v740 = vmax.f32 %v734, 0.0
      %v741 = vmax.f32 %v736, 0.0
      %v743 = vsel %vm264, %v740, 0
      %v746 = vsel %vm264, %v741, 0
      %748 = vmatprep.subr.mxu0 %v739
      %749 = vmatpush1.msra.mxu0 %v738
      %750 = vmatprep.subr.mxu0 %v746
      %751 = vmatpush1.msra.mxu0 %v743
      %752 = vmatprep.subr.mxu0 0.0
      %753 = vmatpush1.msra.mxu0 0.0
      %754 = vmatprep.subr.mxu0 0.0
      %755 = vmatpush1.msra.mxu0 0.0
      %756 = vmatprep.subr.mxu0 0.0
      %757 = vmatpush1.msra.mxu0 0.0
      %758 = vmatprep.subr.mxu0 0.0
      %759 = vmatpush1.msra.mxu0 0.0
      %760 = vmatprep.subr.mxu0 0.0
      %761 = vmatpush1.msra.mxu0 0.0
      %762 = vmatprep.subr.mxu0 0.0
      %763 = vmatpush1.msra.mxu0 0.0
      %764 = vmatprep.subr.mxu0 0.0
      %765 = vmatpush1.msra.mxu0 0.0
      %766 = vmatprep.subr.mxu0 0.0
      %767 = vmatpush1.msra.mxu0 0.0
      %768 = vmatprep.subr.mxu0 0.0
      %769 = vmatpush1.msra.mxu0 0.0
      %770 = vmatprep.subr.mxu0 0.0
      %771 = vmatpush1.msra.mxu0 0.0
      %772 = vmatprep.subr.mxu0 0.0
      %773 = vmatpush1.msra.mxu0 0.0
      %774 = vmatprep.subr.mxu0 0.0
      %775 = vmatpush1.msra.mxu0 0.0
      %776 = vmatprep.subr.mxu0 0.0
      %777 = vmatpush1.msra.mxu0 0.0
      %778 = vmatprep.subr.mxu0 0.0
      %779 = vmatpush1.msra.mxu0 0.0
      %780 = vmatprep.subr.mxu0 0.0
      %781 = vmatpush1.msra.mxu0 0.0
      %782 = vmatprep.subr.mxu0 0.0
      %783 = vmatpush1.msra.mxu0 0.0
      %784 = vmatprep.subr.mxu0 0.0
      %785 = vmatpush1.msra.mxu0 0.0
      %786 = vmatprep.subr.mxu0 0.0
      %787 = vmatpush1.msra.mxu0 0.0
      %788 = vmatprep.subr.mxu0 0.0
      %789 = vmatpush1.msra.mxu0 0.0
      %790 = vmatprep.subr.mxu0 0.0
      %791 = vmatpush1.msra.mxu0 0.0
      %792 = vmatprep.subr.mxu0 0.0
      %793 = vmatpush1.msra.mxu0 0.0
      %794 = vmatprep.subr.mxu0 0.0
      %795 = vmatpush1.msra.mxu0 0.0
      %796 = vmatprep.subr.mxu0 0.0
      %797 = vmatpush1.msra.mxu0 0.0
      %798 = vmatprep.subr.mxu0 0.0
      %799 = vmatpush1.msra.mxu0 0.0
      %800 = vmatprep.subr.mxu0 0.0
      %801 = vmatpush1.msra.mxu0 0.0
      %802 = vmatprep.subr.mxu0 0.0
      %803 = vmatpush1.msra.mxu0 0.0
      %804 = vmatprep.subr.mxu0 0.0
      %805 = vmatpush1.msra.mxu0 0.0
      %806 = vmatprep.subr.mxu0 0.0
      %807 = vmatpush1.msra.mxu0 0.0
      %808 = vmatprep.subr.mxu0 0.0
      %809 = vmatpush1.msra.mxu0 0.0
      %810 = vmatprep.subr.mxu0 0.0
      %811 = vmatpush1.msra.mxu0 0.0
      %812 = vmatprep.mubr.f32.mxu0 0.0
      %813 = vmatmul.mubr.f32.gmra.mrb[0].mxu0 %v362
      %v814 = vpop.f32.mrb[0].mxu0
      %v815 = vadd.f32 %v353, %v814
      %v816 = vpop.f32.mrb[0].mxu0
      %v817 = vadd.f32 %v353, %v816
      %818 = vmatprep.mubr.f32.mxu0 0.0
      %819 = vmatmul.mubr.f32.gmra.mrb[0].mxu0 %v365
      %v820 = vpop.f32.mrb[0].mxu0
      %v821 = vadd.f32 %v358, %v820
      %v822 = vpop.f32.mrb[0].mxu0
      %v823 = vadd.f32 %v358, %v822
      %824 = vdwg.mxu0
      %v825 = vmax.f32 %v815, 0.0
      %v826 = vmax.f32 %v817, 0.0
      %v827 = vmax.f32 %v821, 0.0
      %v828 = vmax.f32 %v823, 0.0
      %v830 = vsel %vm264, %v827, 0
      %v833 = vsel %vm264, %v828, 0
      %835 = vmatprep.subr.mxu0 %v826
      %836 = vmatpush1.msra.mxu0 %v825
      %837 = vmatprep.subr.mxu0 %v833
      %838 = vmatpush1.msra.mxu0 %v830
      %839 = vmatprep.subr.mxu0 0.0
      %840 = vmatpush1.msra.mxu0 0.0
      %841 = vmatprep.subr.mxu0 0.0
      %842 = vmatpush1.msra.mxu0 0.0
      %843 = vmatprep.subr.mxu0 0.0
      %844 = vmatpush1.msra.mxu0 0.0
      %845 = vmatprep.subr.mxu0 0.0
      %846 = vmatpush1.msra.mxu0 0.0
      %847 = vmatprep.subr.mxu0 0.0
      %848 = vmatpush1.msra.mxu0 0.0
      %849 = vmatprep.subr.mxu0 0.0
      %850 = vmatpush1.msra.mxu0 0.0
      %851 = vmatprep.subr.mxu0 0.0
      %852 = vmatpush1.msra.mxu0 0.0
      %853 = vmatprep.subr.mxu0 0.0
      %854 = vmatpush1.msra.mxu0 0.0
      %855 = vmatprep.subr.mxu0 0.0
      %856 = vmatpush1.msra.mxu0 0.0
      %857 = vmatprep.subr.mxu0 0.0
      %858 = vmatpush1.msra.mxu0 0.0
      %859 = vmatprep.subr.mxu0 0.0
      %860 = vmatpush1.msra.mxu0 0.0
      %861 = vmatprep.subr.mxu0 0.0
      %862 = vmatpush1.msra.mxu0 0.0
      %863 = vmatprep.subr.mxu0 0.0
      %864 = vmatpush1.msra.mxu0 0.0
      %865 = vmatprep.subr.mxu0 0.0
      %866 = vmatpush1.msra.mxu0 0.0
      %867 = vmatprep.subr.mxu0 0.0
      %868 = vmatpush1.msra.mxu0 0.0
      %869 = vmatprep.subr.mxu0 0.0
      %870 = vmatpush1.msra.mxu0 0.0
      %871 = vmatprep.subr.mxu0 0.0
      %872 = vmatpush1.msra.mxu0 0.0
      %873 = vmatprep.subr.mxu0 0.0
      %874 = vmatpush1.msra.mxu0 0.0
      %875 = vmatprep.subr.mxu0 0.0
      %876 = vmatpush1.msra.mxu0 0.0
      %877 = vmatprep.subr.mxu0 0.0
      %878 = vmatpush1.msra.mxu0 0.0
      %879 = vmatprep.subr.mxu0 0.0
      %880 = vmatpush1.msra.mxu0 0.0
      %881 = vmatprep.subr.mxu0 0.0
      %882 = vmatpush1.msra.mxu0 0.0
      %883 = vmatprep.subr.mxu0 0.0
      %884 = vmatpush1.msra.mxu0 0.0
      %885 = vmatprep.subr.mxu0 0.0
      %886 = vmatpush1.msra.mxu0 0.0
      %887 = vmatprep.subr.mxu0 0.0
      %888 = vmatpush1.msra.mxu0 0.0
      %889 = vmatprep.subr.mxu0 0.0
      %890 = vmatpush1.msra.mxu0 0.0
      %891 = vmatprep.subr.mxu0 0.0
      %892 = vmatpush1.msra.mxu0 0.0
      %893 = vmatprep.subr.mxu0 0.0
      %894 = vmatpush1.msra.mxu0 0.0
      %895 = vmatprep.subr.mxu0 0.0
      %896 = vmatpush1.msra.mxu0 0.0
      %897 = vmatprep.subr.mxu0 0.0
      %898 = vmatpush1.msra.mxu0 0.0
      %899 = vmatprep.mubr.f32.mxu0 0.0
      %900 = vmatmul.mubr.f32.gmra.mrb[0].mxu0 %v460
      %v901 = vpop.f32.mrb[0].mxu0
      %v902 = vadd.f32 %v457, %v901
      %v903 = vpop.f32.mrb[0].mxu0
      %v904 = vadd.f32 %v457, %v903
      %905 = vdwg.mxu0
      %v906 = vmax.f32 %v902, 0.0
      %v907 = vmax.f32 %v904, 0.0
      %v909 = vsel %vm550, %v906, 0
      %v912 = vsel %vm550, %v907, 0
      %914 = vmatprep.subr.mxu0 %v912
      %915 = vmatpush1.msra.mxu0 %v909
      %916 = vmatprep.subr.mxu0 0.0
      %917 = vmatpush1.msra.mxu0 0.0
      %918 = vmatprep.subr.mxu0 0.0
      %919 = vmatpush1.msra.mxu0 0.0
      %920 = vmatprep.subr.mxu0 0.0
      %921 = vmatpush1.msra.mxu0 0.0
      %922 = vmatprep.subr.mxu0 0.0
      %923 = vmatpush1.msra.mxu0 0.0
      %924 = vmatprep.subr.mxu0 0.0
      %925 = vmatpush1.msra.mxu0 0.0
      %926 = vmatprep.subr.mxu0 0.0
      %927 = vmatpush1.msra.mxu0 0.0
      %928 = vmatprep.subr.mxu0 0.0
      %929 = vmatpush1.msra.mxu0 0.0
      %930 = vmatprep.subr.mxu0 0.0
      %931 = vmatpush1.msra.mxu0 0.0
      %932 = vmatprep.subr.mxu0 0.0
      %933 = vmatpush1.msra.mxu0 0.0
      %934 = vmatprep.subr.mxu0 0.0
      %935 = vmatpush1.msra.mxu0 0.0
      %936 = vmatprep.subr.mxu0 0.0
      %937 = vmatpush1.msra.mxu0 0.0
      %938 = vmatprep.subr.mxu0 0.0
      %939 = vmatpush1.msra.mxu0 0.0
      %940 = vmatprep.subr.mxu0 0.0
      %941 = vmatpush1.msra.mxu0 0.0
      %942 = vmatprep.subr.mxu0 0.0
      %943 = vmatpush1.msra.mxu0 0.0
      %944 = vmatprep.subr.mxu0 0.0
      %945 = vmatpush1.msra.mxu0 0.0
      %946 = vmatprep.subr.mxu0 0.0
      %947 = vmatpush1.msra.mxu0 0.0
      %948 = vmatprep.subr.mxu0 0.0
      %949 = vmatpush1.msra.mxu0 0.0
      %950 = vmatprep.subr.mxu0 0.0
      %951 = vmatpush1.msra.mxu0 0.0
      %952 = vmatprep.subr.mxu0 0.0
      %953 = vmatpush1.msra.mxu0 0.0
      %954 = vmatprep.subr.mxu0 0.0
      %955 = vmatpush1.msra.mxu0 0.0
      %956 = vmatprep.subr.mxu0 0.0
      %957 = vmatpush1.msra.mxu0 0.0
      %958 = vmatprep.subr.mxu0 0.0
      %959 = vmatpush1.msra.mxu0 0.0
      %960 = vmatprep.subr.mxu0 0.0
      %961 = vmatpush1.msra.mxu0 0.0
      %962 = vmatprep.subr.mxu0 0.0
      %963 = vmatpush1.msra.mxu0 0.0
      %964 = vmatprep.subr.mxu0 0.0
      %965 = vmatpush1.msra.mxu0 0.0
      %966 = vmatprep.subr.mxu0 0.0
      %967 = vmatpush1.msra.mxu0 0.0
      %968 = vmatprep.subr.mxu0 0.0
      %969 = vmatpush1.msra.mxu0 0.0
      %970 = vmatprep.subr.mxu0 0.0
      %971 = vmatpush1.msra.mxu0 0.0
      %972 = vmatprep.subr.mxu0 0.0
      %973 = vmatpush1.msra.mxu0 0.0
      %974 = vmatprep.subr.mxu0 0.0
      %975 = vmatpush1.msra.mxu0 0.0
      %976 = vmatprep.subr.mxu0 0.0
      %977 = vmatpush1.msra.mxu0 0.0
      %978 = vmatprep.mubr.f32.mxu0 0.0
      %979 = vmatmul.mubr.f32.gmra.mrb[0].mxu0 %v548
      %v980 = vpop.f32.mrb[0].mxu0
      %v981 = vadd.f32 %v544, %v980
      %v982 = vpop.f32.mrb[0].mxu0
      %v983 = vadd.f32 %v544, %v982
      %984 = vdwg.mxu0
      %v985 = vmax.f32 %v981, 0.0
      %v986 = vmax.f32 %v983, 0.0
      %v989 = vcombine.low %v985, %v986
      %v991 = vunpack.c.l.s4 1966171168
      %v992 = vunpack.c.0.s8 %v991
      %v993 = vlaneseq
      %v994 = vshrl.u32 %v993, 7
      %v995 = vsub.s32 %v992, %v994
      %v996 = vrot.slane %v989, %v995
      %v998 = vunpack.c.l.s4 1966171168
      %v999 = vunpack.c.0.s8 %v998
      %v1000 = vlaneseq
      %v1001 = vshrl.u32 %v1000, 7
      %v1002 = vsub.s32 %v999, %v1001
      %v1003 = vrot.slane %v996, %v1002
      %s1005 = scalar_lea.vmem %s230, 2
      %1006 = vst.msk [vmem:[%s1005] sm:$0x3] %vm651, %v1003
      %s1007 = scalar_lea.vmem %s212, 16
      %v1008 = vld [vmem:[%s1007] sm:$0xff]
      %v1010 = vcombine.high %v1008, %v1008
      %v1011 = vsel %vm264, %v1008, 0
      %v1013 = vsel %vm264, %v1010, 0
      %1015 = vmatprep.subr.mxu0 %v1013
      %1016 = vmatpush1.msra.mxu0 %v1011
      %1017 = vmatprep.subr.mxu0 0.0
      %1018 = vmatpush1.msra.mxu0 0.0
      %1019 = vmatprep.subr.mxu0 0.0
      %1020 = vmatpush1.msra.mxu0 0.0
      %1021 = vmatprep.subr.mxu0 0.0
      %1022 = vmatpush1.msra.mxu0 0.0
      %1023 = vmatprep.subr.mxu0 0.0
      %1024 = vmatpush1.msra.mxu0 0.0
      %1025 = vmatprep.subr.mxu0 0.0
      %1026 = vmatpush1.msra.mxu0 0.0
      %1027 = vmatprep.subr.mxu0 0.0
      %1028 = vmatpush1.msra.mxu0 0.0
      %1029 = vmatprep.subr.mxu0 0.0
      %1030 = vmatpush1.msra.mxu0 0.0
      %1031 = vmatprep.subr.mxu0 0.0
      %1032 = vmatpush1.msra.mxu0 0.0
      %1033 = vmatprep.subr.mxu0 0.0
      %1034 = vmatpush1.msra.mxu0 0.0
      %1035 = vmatprep.subr.mxu0 0.0
      %1036 = vmatpush1.msra.mxu0 0.0
      %1037 = vmatprep.subr.mxu0 0.0
      %1038 = vmatpush1.msra.mxu0 0.0
      %1039 = vmatprep.subr.mxu0 0.0
      %1040 = vmatpush1.msra.mxu0 0.0
      %1041 = vmatprep.subr.mxu0 0.0
      %1042 = vmatpush1.msra.mxu0 0.0
      %1043 = vmatprep.subr.mxu0 0.0
      %1044 = vmatpush1.msra.mxu0 0.0
      %1045 = vmatprep.subr.mxu0 0.0
      %1046 = vmatpush1.msra.mxu0 0.0
      %1047 = vmatprep.subr.mxu0 0.0
      %1048 = vmatpush1.msra.mxu0 0.0
      %1049 = vmatprep.subr.mxu0 0.0
      %1050 = vmatpush1.msra.mxu0 0.0
      %1051 = vmatprep.subr.mxu0 0.0
      %1052 = vmatpush1.msra.mxu0 0.0
      %1053 = vmatprep.subr.mxu0 0.0
      %1054 = vmatpush1.msra.mxu0 0.0
      %1055 = vmatprep.subr.mxu0 0.0
      %1056 = vmatpush1.msra.mxu0 0.0
      %1057 = vmatprep.subr.mxu0 0.0
      %1058 = vmatpush1.msra.mxu0 0.0
      %1059 = vmatprep.subr.mxu0 0.0
      %1060 = vmatpush1.msra.mxu0 0.0
      %1061 = vmatprep.subr.mxu0 0.0
      %1062 = vmatpush1.msra.mxu0 0.0
      %1063 = vmatprep.subr.mxu0 0.0
      %1064 = vmatpush1.msra.mxu0 0.0
      %1065 = vmatprep.subr.mxu0 0.0
      %1066 = vmatpush1.msra.mxu0 0.0
      %1067 = vmatprep.subr.mxu0 0.0
      %1068 = vmatpush1.msra.mxu0 0.0
      %1069 = vmatprep.subr.mxu0 0.0
      %1070 = vmatpush1.msra.mxu0 0.0
      %1071 = vmatprep.subr.mxu0 0.0
      %1072 = vmatpush1.msra.mxu0 0.0
      %1073 = vmatprep.subr.mxu0 0.0
      %1074 = vmatpush1.msra.mxu0 0.0
      %1075 = vmatprep.subr.mxu0 0.0
      %1076 = vmatpush1.msra.mxu0 0.0
      %1077 = vmatprep.subr.mxu0 0.0
      %1078 = vmatpush1.msra.mxu0 0.0
      %1079 = vmatprep.mubr.f32.mxu0 0.0
      %1080 = vmatmul.mubr.f32.gmra.mrb[0].mxu0 %v259
      %v1081 = vpop.f32.mrb[0].mxu0
      %v1082 = vadd.f32 %v248, %v1081
      %v1083 = vpop.f32.mrb[0].mxu0
      %v1084 = vadd.f32 %v248, %v1083
      %1085 = vmatprep.mubr.f32.mxu0 0.0
      %1086 = vmatmul.mubr.f32.gmra.mrb[0].mxu0 %v262
      %v1087 = vpop.f32.mrb[0].mxu0
      %v1088 = vadd.f32 %v253, %v1087
      %v1089 = vpop.f32.mrb[0].mxu0
      %v1090 = vadd.f32 %v253, %v1089
      %1091 = vdwg.mxu0
      %v1092 = vmax.f32 %v1082, 0.0
      %v1093 = vmax.f32 %v1084, 0.0
      %v1094 = vmax.f32 %v1088, 0.0
      %v1095 = vmax.f32 %v1090, 0.0
      %v1097 = vsel %vm264, %v1094, 0
      %v1100 = vsel %vm264, %v1095, 0
      %1102 = vmatprep.subr.mxu0 %v1093
      %1103 = vmatpush1.msra.mxu0 %v1092
      %1104 = vmatprep.subr.mxu0 %v1100
      %1105 = vmatpush1.msra.mxu0 %v1097
      %1106 = vmatprep.subr.mxu0 0.0
      %1107 = vmatpush1.msra.mxu0 0.0
      %1108 = vmatprep.subr.mxu0 0.0
      %1109 = vmatpush1.msra.mxu0 0.0
      %1110 = vmatprep.subr.mxu0 0.0
      %1111 = vmatpush1.msra.mxu0 0.0
      %1112 = vmatprep.subr.mxu0 0.0
      %1113 = vmatpush1.msra.mxu0 0.0
      %1114 = vmatprep.subr.mxu0 0.0
      %1115 = vmatpush1.msra.mxu0 0.0
      %1116 = vmatprep.subr.mxu0 0.0
      %1117 = vmatpush1.msra.mxu0 0.0
      %1118 = vmatprep.subr.mxu0 0.0
      %1119 = vmatpush1.msra.mxu0 0.0
      %1120 = vmatprep.subr.mxu0 0.0
      %1121 = vmatpush1.msra.mxu0 0.0
      %1122 = vmatprep.subr.mxu0 0.0
      %1123 = vmatpush1.msra.mxu0 0.0
      %1124 = vmatprep.subr.mxu0 0.0
      %1125 = vmatpush1.msra.mxu0 0.0
      %1126 = vmatprep.subr.mxu0 0.0
      %1127 = vmatpush1.msra.mxu0 0.0
      %1128 = vmatprep.subr.mxu0 0.0
      %1129 = vmatpush1.msra.mxu0 0.0
      %1130 = vmatprep.subr.mxu0 0.0
      %1131 = vmatpush1.msra.mxu0 0.0
      %1132 = vmatprep.subr.mxu0 0.0
      %1133 = vmatpush1.msra.mxu0 0.0
      %1134 = vmatprep.subr.mxu0 0.0
      %1135 = vmatpush1.msra.mxu0 0.0
      %1136 = vmatprep.subr.mxu0 0.0
      %1137 = vmatpush1.msra.mxu0 0.0
      %1138 = vmatprep.subr.mxu0 0.0
      %1139 = vmatpush1.msra.mxu0 0.0
      %1140 = vmatprep.subr.mxu0 0.0
      %1141 = vmatpush1.msra.mxu0 0.0
      %1142 = vmatprep.subr.mxu0 0.0
      %1143 = vmatpush1.msra.mxu0 0.0
      %1144 = vmatprep.subr.mxu0 0.0
      %1145 = vmatpush1.msra.mxu0 0.0
      %1146 = vmatprep.subr.mxu0 0.0
      %1147 = vmatpush1.msra.mxu0 0.0
      %1148 = vmatprep.subr.mxu0 0.0
      %1149 = vmatpush1.msra.mxu0 0.0
      %1150 = vmatprep.subr.mxu0 0.0
      %1151 = vmatpush1.msra.mxu0 0.0
      %1152 = vmatprep.subr.mxu0 0.0
      %1153 = vmatpush1.msra.mxu0 0.0
      %1154 = vmatprep.subr.mxu0 0.0
      %1155 = vmatpush1.msra.mxu0 0.0
      %1156 = vmatprep.subr.mxu0 0.0
      %1157 = vmatpush1.msra.mxu0 0.0
      %1158 = vmatprep.subr.mxu0 0.0
      %1159 = vmatpush1.msra.mxu0 0.0
      %1160 = vmatprep.subr.mxu0 0.0
      %1161 = vmatpush1.msra.mxu0 0.0
      %1162 = vmatprep.subr.mxu0 0.0
      %1163 = vmatpush1.msra.mxu0 0.0
      %1164 = vmatprep.subr.mxu0 0.0
      %1165 = vmatpush1.msra.mxu0 0.0
      %1166 = vmatprep.mubr.f32.mxu0 0.0
      %1167 = vmatmul.mubr.f32.gmra.mrb[0].mxu0 %v362
      %v1168 = vpop.f32.mrb[0].mxu0
      %v1169 = vadd.f32 %v353, %v1168
      %v1170 = vpop.f32.mrb[0].mxu0
      %v1171 = vadd.f32 %v353, %v1170
      %1172 = vmatprep.mubr.f32.mxu0 0.0
      %1173 = vmatmul.mubr.f32.gmra.mrb[0].mxu0 %v365
      %v1174 = vpop.f32.mrb[0].mxu0
      %v1175 = vadd.f32 %v358, %v1174
      %v1176 = vpop.f32.mrb[0].mxu0
      %v1177 = vadd.f32 %v358, %v1176
      %1178 = vdwg.mxu0
      %v1179 = vmax.f32 %v1169, 0.0
      %v1180 = vmax.f32 %v1171, 0.0
      %v1181 = vmax.f32 %v1175, 0.0
      %v1182 = vmax.f32 %v1177, 0.0
      %v1184 = vsel %vm264, %v1181, 0
      %v1187 = vsel %vm264, %v1182, 0
      %1189 = vmatprep.subr.mxu0 %v1180
      %1190 = vmatpush1.msra.mxu0 %v1179
      %1191 = vmatprep.subr.mxu0 %v1187
      %1192 = vmatpush1.msra.mxu0 %v1184
      %1193 = vmatprep.subr.mxu0 0.0
      %1194 = vmatpush1.msra.mxu0 0.0
      %1195 = vmatprep.subr.mxu0 0.0
      %1196 = vmatpush1.msra.mxu0 0.0
      %1197 = vmatprep.subr.mxu0 0.0
      %1198 = vmatpush1.msra.mxu0 0.0
      %1199 = vmatprep.subr.mxu0 0.0
      %1200 = vmatpush1.msra.mxu0 0.0
      %1201 = vmatprep.subr.mxu0 0.0
      %1202 = vmatpush1.msra.mxu0 0.0
      %1203 = vmatprep.subr.mxu0 0.0
      %1204 = vmatpush1.msra.mxu0 0.0
      %1205 = vmatprep.subr.mxu0 0.0
      %1206 = vmatpush1.msra.mxu0 0.0
      %1207 = vmatprep.subr.mxu0 0.0
      %1208 = vmatpush1.msra.mxu0 0.0
      %1209 = vmatprep.subr.mxu0 0.0
      %1210 = vmatpush1.msra.mxu0 0.0
      %1211 = vmatprep.subr.mxu0 0.0
      %1212 = vmatpush1.msra.mxu0 0.0
      %1213 = vmatprep.subr.mxu0 0.0
      %1214 = vmatpush1.msra.mxu0 0.0
      %1215 = vmatprep.subr.mxu0 0.0
      %1216 = vmatpush1.msra.mxu0 0.0
      %1217 = vmatprep.subr.mxu0 0.0
      %1218 = vmatpush1.msra.mxu0 0.0
      %1219 = vmatprep.subr.mxu0 0.0
      %1220 = vmatpush1.msra.mxu0 0.0
      %1221 = vmatprep.subr.mxu0 0.0
      %1222 = vmatpush1.msra.mxu0 0.0
      %1223 = vmatprep.subr.mxu0 0.0
      %1224 = vmatpush1.msra.mxu0 0.0
      %1225 = vmatprep.subr.mxu0 0.0
      %1226 = vmatpush1.msra.mxu0 0.0
      %1227 = vmatprep.subr.mxu0 0.0
      %1228 = vmatpush1.msra.mxu0 0.0
      %1229 = vmatprep.subr.mxu0 0.0
      %1230 = vmatpush1.msra.mxu0 0.0
      %1231 = vmatprep.subr.mxu0 0.0
      %1232 = vmatpush1.msra.mxu0 0.0
      %1233 = vmatprep.subr.mxu0 0.0
      %1234 = vmatpush1.msra.mxu0 0.0
      %1235 = vmatprep.subr.mxu0 0.0
      %1236 = vmatpush1.msra.mxu0 0.0
      %1237 = vmatprep.subr.mxu0 0.0
      %1238 = vmatpush1.msra.mxu0 0.0
      %1239 = vmatprep.subr.mxu0 0.0
      %1240 = vmatpush1.msra.mxu0 0.0
      %1241 = vmatprep.subr.mxu0 0.0
      %1242 = vmatpush1.msra.mxu0 0.0
      %1243 = vmatprep.subr.mxu0 0.0
      %1244 = vmatpush1.msra.mxu0 0.0
      %1245 = vmatprep.subr.mxu0 0.0
      %1246 = vmatpush1.msra.mxu0 0.0
      %1247 = vmatprep.subr.mxu0 0.0
      %1248 = vmatpush1.msra.mxu0 0.0
      %1249 = vmatprep.subr.mxu0 0.0
      %1250 = vmatpush1.msra.mxu0 0.0
      %1251 = vmatprep.subr.mxu0 0.0
      %1252 = vmatpush1.msra.mxu0 0.0
      %1253 = vmatprep.mubr.f32.mxu0 0.0
      %1254 = vmatmul.mubr.f32.gmra.mrb[0].mxu0 %v460
      %v1255 = vpop.f32.mrb[0].mxu0
      %v1256 = vadd.f32 %v457, %v1255
      %v1257 = vpop.f32.mrb[0].mxu0
      %v1258 = vadd.f32 %v457, %v1257
      %1259 = vdwg.mxu0
      %v1260 = vmax.f32 %v1256, 0.0
      %v1261 = vmax.f32 %v1258, 0.0
      %v1263 = vsel %vm550, %v1260, 0
      %v1266 = vsel %vm550, %v1261, 0
      %1268 = vmatprep.subr.mxu0 %v1266
      %1269 = vmatpush1.msra.mxu0 %v1263
      %1270 = vmatprep.subr.mxu0 0.0
      %1271 = vmatpush1.msra.mxu0 0.0
      %1272 = vmatprep.subr.mxu0 0.0
      %1273 = vmatpush1.msra.mxu0 0.0
      %1274 = vmatprep.subr.mxu0 0.0
      %1275 = vmatpush1.msra.mxu0 0.0
      %1276 = vmatprep.subr.mxu0 0.0
      %1277 = vmatpush1.msra.mxu0 0.0
      %1278 = vmatprep.subr.mxu0 0.0
      %1279 = vmatpush1.msra.mxu0 0.0
      %1280 = vmatprep.subr.mxu0 0.0
      %1281 = vmatpush1.msra.mxu0 0.0
      %1282 = vmatprep.subr.mxu0 0.0
      %1283 = vmatpush1.msra.mxu0 0.0
      %1284 = vmatprep.subr.mxu0 0.0
      %1285 = vmatpush1.msra.mxu0 0.0
      %1286 = vmatprep.subr.mxu0 0.0
      %1287 = vmatpush1.msra.mxu0 0.0
      %1288 = vmatprep.subr.mxu0 0.0
      %1289 = vmatpush1.msra.mxu0 0.0
      %1290 = vmatprep.subr.mxu0 0.0
      %1291 = vmatpush1.msra.mxu0 0.0
      %1292 = vmatprep.subr.mxu0 0.0
      %1293 = vmatpush1.msra.mxu0 0.0
      %1294 = vmatprep.subr.mxu0 0.0
      %1295 = vmatpush1.msra.mxu0 0.0
      %1296 = vmatprep.subr.mxu0 0.0
      %1297 = vmatpush1.msra.mxu0 0.0
      %1298 = vmatprep.subr.mxu0 0.0
      %1299 = vmatpush1.msra.mxu0 0.0
      %1300 = vmatprep.subr.mxu0 0.0
      %1301 = vmatpush1.msra.mxu0 0.0
      %1302 = vmatprep.subr.mxu0 0.0
      %1303 = vmatpush1.msra.mxu0 0.0
      %1304 = vmatprep.subr.mxu0 0.0
      %1305 = vmatpush1.msra.mxu0 0.0
      %1306 = vmatprep.subr.mxu0 0.0
      %1307 = vmatpush1.msra.mxu0 0.0
      %1308 = vmatprep.subr.mxu0 0.0
      %1309 = vmatpush1.msra.mxu0 0.0
      %1310 = vmatprep.subr.mxu0 0.0
      %1311 = vmatpush1.msra.mxu0 0.0
      %1312 = vmatprep.subr.mxu0 0.0
      %1313 = vmatpush1.msra.mxu0 0.0
      %1314 = vmatprep.subr.mxu0 0.0
      %1315 = vmatpush1.msra.mxu0 0.0
      %1316 = vmatprep.subr.mxu0 0.0
      %1317 = vmatpush1.msra.mxu0 0.0
      %1318 = vmatprep.subr.mxu0 0.0
      %1319 = vmatpush1.msra.mxu0 0.0
      %1320 = vmatprep.subr.mxu0 0.0
      %1321 = vmatpush1.msra.mxu0 0.0
      %1322 = vmatprep.subr.mxu0 0.0
      %1323 = vmatpush1.msra.mxu0 0.0
      %1324 = vmatprep.subr.mxu0 0.0
      %1325 = vmatpush1.msra.mxu0 0.0
      %1326 = vmatprep.subr.mxu0 0.0
      %1327 = vmatpush1.msra.mxu0 0.0
      %1328 = vmatprep.subr.mxu0 0.0
      %1329 = vmatpush1.msra.mxu0 0.0
      %1330 = vmatprep.subr.mxu0 0.0
      %1331 = vmatpush1.msra.mxu0 0.0
      %1332 = vmatprep.mubr.f32.mxu0 0.0
      %1333 = vmatmul.mubr.f32.gmra.mrb[0].mxu0 %v548
      %v1334 = vpop.f32.mrb[0].mxu0
      %v1335 = vadd.f32 %v544, %v1334
      %v1336 = vpop.f32.mrb[0].mxu0
      %v1337 = vadd.f32 %v544, %v1336
      %1338 = vdwg.mxu0
      %v1339 = vmax.f32 %v1335, 0.0
      %v1340 = vmax.f32 %v1337, 0.0
      %v1343 = vcombine.low %v1339, %v1340
      %v1345 = vunpack.c.l.s4 1966171168
      %v1346 = vunpack.c.0.s8 %v1345
      %v1347 = vlaneseq
      %v1348 = vshrl.u32 %v1347, 7
      %v1349 = vsub.s32 %v1346, %v1348
      %v1350 = vrot.slane %v1343, %v1349
      %v1352 = vunpack.c.l.s4 1966171168
      %v1353 = vunpack.c.0.s8 %v1352
      %v1354 = vlaneseq
      %v1355 = vshrl.u32 %v1354, 7
      %v1356 = vsub.s32 %v1353, %v1355
      %v1357 = vrot.slane %v1350, %v1356
      %s1359 = scalar_lea.vmem %s230, 4
      %1360 = vst.msk [vmem:[%s1359] sm:$0x3] %vm651, %v1357
      %s1361 = scalar_lea.vmem %s212, 24
      %v1362 = vld [vmem:[%s1361] sm:$0xff]
      %v1364 = vcombine.high %v1362, %v1362
      %v1365 = vsel %vm264, %v1362, 0
      %v1367 = vsel %vm264, %v1364, 0
      %1369 = vmatprep.subr.mxu0 %v1367
      %1370 = vmatpush1.msra.mxu0 %v1365
      %1371 = vmatprep.subr.mxu0 0.0
      %1372 = vmatpush1.msra.mxu0 0.0
      %1373 = vmatprep.subr.mxu0 0.0
      %1374 = vmatpush1.msra.mxu0 0.0
      %1375 = vmatprep.subr.mxu0 0.0
      %1376 = vmatpush1.msra.mxu0 0.0
      %1377 = vmatprep.subr.mxu0 0.0
      %1378 = vmatpush1.msra.mxu0 0.0
      %1379 = vmatprep.subr.mxu0 0.0
      %1380 = vmatpush1.msra.mxu0 0.0
      %1381 = vmatprep.subr.mxu0 0.0
      %1382 = vmatpush1.msra.mxu0 0.0
      %1383 = vmatprep.subr.mxu0 0.0
      %1384 = vmatpush1.msra.mxu0 0.0
      %1385 = vmatprep.subr.mxu0 0.0
      %1386 = vmatpush1.msra.mxu0 0.0
      %1387 = vmatprep.subr.mxu0 0.0
      %1388 = vmatpush1.msra.mxu0 0.0
      %1389 = vmatprep.subr.mxu0 0.0
      %1390 = vmatpush1.msra.mxu0 0.0
      %1391 = vmatprep.subr.mxu0 0.0
      %1392 = vmatpush1.msra.mxu0 0.0
      %1393 = vmatprep.subr.mxu0 0.0
      %1394 = vmatpush1.msra.mxu0 0.0
      %1395 = vmatprep.subr.mxu0 0.0
      %1396 = vmatpush1.msra.mxu0 0.0
      %1397 = vmatprep.subr.mxu0 0.0
      %1398 = vmatpush1.msra.mxu0 0.0
      %1399 = vmatprep.subr.mxu0 0.0
      %1400 = vmatpush1.msra.mxu0 0.0
      %1401 = vmatprep.subr.mxu0 0.0
      %1402 = vmatpush1.msra.mxu0 0.0
      %1403 = vmatprep.subr.mxu0 0.0
      %1404 = vmatpush1.msra.mxu0 0.0
      %1405 = vmatprep.subr.mxu0 0.0
      %1406 = vmatpush1.msra.mxu0 0.0
      %1407 = vmatprep.subr.mxu0 0.0
      %1408 = vmatpush1.msra.mxu0 0.0
      %1409 = vmatprep.subr.mxu0 0.0
      %1410 = vmatpush1.msra.mxu0 0.0
      %1411 = vmatprep.subr.mxu0 0.0
      %1412 = vmatpush1.msra.mxu0 0.0
      %1413 = vmatprep.subr.mxu0 0.0
      %1414 = vmatpush1.msra.mxu0 0.0
      %1415 = vmatprep.subr.mxu0 0.0
      %1416 = vmatpush1.msra.mxu0 0.0
      %1417 = vmatprep.subr.mxu0 0.0
      %1418 = vmatpush1.msra.mxu0 0.0
      %1419 = vmatprep.subr.mxu0 0.0
      %1420 = vmatpush1.msra.mxu0 0.0
      %1421 = vmatprep.subr.mxu0 0.0
      %1422 = vmatpush1.msra.mxu0 0.0
      %1423 = vmatprep.subr.mxu0 0.0
      %1424 = vmatpush1.msra.mxu0 0.0
      %1425 = vmatprep.subr.mxu0 0.0
      %1426 = vmatpush1.msra.mxu0 0.0
      %1427 = vmatprep.subr.mxu0 0.0
      %1428 = vmatpush1.msra.mxu0 0.0
      %1429 = vmatprep.subr.mxu0 0.0
      %1430 = vmatpush1.msra.mxu0 0.0
      %1431 = vmatprep.subr.mxu0 0.0
      %1432 = vmatpush1.msra.mxu0 0.0
      %1433 = vmatprep.mubr.f32.mxu0 0.0
      %1434 = vmatmul.mubr.f32.gmra.mrb[0].mxu0 %v259
      %v1435 = vpop.f32.mrb[0].mxu0
      %v1436 = vadd.f32 %v248, %v1435
      %v1437 = vpop.f32.mrb[0].mxu0
      %v1438 = vadd.f32 %v248, %v1437
      %1439 = vmatprep.mubr.f32.mxu0 0.0
      %1440 = vmatmul.mubr.f32.gmra.mrb[0].mxu0 %v262
      %v1441 = vpop.f32.mrb[0].mxu0
      %v1442 = vadd.f32 %v253, %v1441
      %v1443 = vpop.f32.mrb[0].mxu0
      %v1444 = vadd.f32 %v253, %v1443
      %1445 = vdwg.mxu0
      %v1446 = vmax.f32 %v1436, 0.0
      %v1447 = vmax.f32 %v1438, 0.0
      %v1448 = vmax.f32 %v1442, 0.0
      %v1449 = vmax.f32 %v1444, 0.0
      %v1451 = vsel %vm264, %v1448, 0
      %v1454 = vsel %vm264, %v1449, 0
      %1456 = vmatprep.subr.mxu0 %v1447
      %1457 = vmatpush1.msra.mxu0 %v1446
      %1458 = vmatprep.subr.mxu0 %v1454
      %1459 = vmatpush1.msra.mxu0 %v1451
      %1460 = vmatprep.subr.mxu0 0.0
      %1461 = vmatpush1.msra.mxu0 0.0
      %1462 = vmatprep.subr.mxu0 0.0
      %1463 = vmatpush1.msra.mxu0 0.0
      %1464 = vmatprep.subr.mxu0 0.0
      %1465 = vmatpush1.msra.mxu0 0.0
      %1466 = vmatprep.subr.mxu0 0.0
      %1467 = vmatpush1.msra.mxu0 0.0
      %1468 = vmatprep.subr.mxu0 0.0
      %1469 = vmatpush1.msra.mxu0 0.0
      %1470 = vmatprep.subr.mxu0 0.0
      %1471 = vmatpush1.msra.mxu0 0.0
      %1472 = vmatprep.subr.mxu0 0.0
      %1473 = vmatpush1.msra.mxu0 0.0
      %1474 = vmatprep.subr.mxu0 0.0
      %1475 = vmatpush1.msra.mxu0 0.0
      %1476 = vmatprep.subr.mxu0 0.0
      %1477 = vmatpush1.msra.mxu0 0.0
      %1478 = vmatprep.subr.mxu0 0.0
      %1479 = vmatpush1.msra.mxu0 0.0
      %1480 = vmatprep.subr.mxu0 0.0
      %1481 = vmatpush1.msra.mxu0 0.0
      %1482 = vmatprep.subr.mxu0 0.0
      %1483 = vmatpush1.msra.mxu0 0.0
      %1484 = vmatprep.subr.mxu0 0.0
      %1485 = vmatpush1.msra.mxu0 0.0
      %1486 = vmatprep.subr.mxu0 0.0
      %1487 = vmatpush1.msra.mxu0 0.0
      %1488 = vmatprep.subr.mxu0 0.0
      %1489 = vmatpush1.msra.mxu0 0.0
      %1490 = vmatprep.subr.mxu0 0.0
      %1491 = vmatpush1.msra.mxu0 0.0
      %1492 = vmatprep.subr.mxu0 0.0
      %1493 = vmatpush1.msra.mxu0 0.0
      %1494 = vmatprep.subr.mxu0 0.0
      %1495 = vmatpush1.msra.mxu0 0.0
      %1496 = vmatprep.subr.mxu0 0.0
      %1497 = vmatpush1.msra.mxu0 0.0
      %1498 = vmatprep.subr.mxu0 0.0
      %1499 = vmatpush1.msra.mxu0 0.0
      %1500 = vmatprep.subr.mxu0 0.0
      %1501 = vmatpush1.msra.mxu0 0.0
      %1502 = vmatprep.subr.mxu0 0.0
      %1503 = vmatpush1.msra.mxu0 0.0
      %1504 = vmatprep.subr.mxu0 0.0
      %1505 = vmatpush1.msra.mxu0 0.0
      %1506 = vmatprep.subr.mxu0 0.0
      %1507 = vmatpush1.msra.mxu0 0.0
      %1508 = vmatprep.subr.mxu0 0.0
      %1509 = vmatpush1.msra.mxu0 0.0
      %1510 = vmatprep.subr.mxu0 0.0
      %1511 = vmatpush1.msra.mxu0 0.0
      %1512 = vmatprep.subr.mxu0 0.0
      %1513 = vmatpush1.msra.mxu0 0.0
      %1514 = vmatprep.subr.mxu0 0.0
      %1515 = vmatpush1.msra.mxu0 0.0
      %1516 = vmatprep.subr.mxu0 0.0
      %1517 = vmatpush1.msra.mxu0 0.0
      %1518 = vmatprep.subr.mxu0 0.0
      %1519 = vmatpush1.msra.mxu0 0.0
      %1520 = vmatprep.mubr.f32.mxu0 0.0
      %1521 = vmatmul.mubr.f32.gmra.mrb[0].mxu0 %v362
      %v1522 = vpop.f32.mrb[0].mxu0
      %v1523 = vadd.f32 %v353, %v1522
      %v1524 = vpop.f32.mrb[0].mxu0
      %v1525 = vadd.f32 %v353, %v1524
      %1526 = vmatprep.mubr.f32.mxu0 0.0
      %1527 = vmatmul.mubr.f32.gmra.mrb[0].mxu0 %v365
      %v1528 = vpop.f32.mrb[0].mxu0
      %v1529 = vadd.f32 %v358, %v1528
      %v1530 = vpop.f32.mrb[0].mxu0
      %v1531 = vadd.f32 %v358, %v1530
      %1532 = vdwg.mxu0
      %v1533 = vmax.f32 %v1523, 0.0
      %v1534 = vmax.f32 %v1525, 0.0
      %v1535 = vmax.f32 %v1529, 0.0
      %v1536 = vmax.f32 %v1531, 0.0
      %v1538 = vsel %vm264, %v1535, 0
      %v1541 = vsel %vm264, %v1536, 0
      %1543 = vmatprep.subr.mxu0 %v1534
      %1544 = vmatpush1.msra.mxu0 %v1533
      %1545 = vmatprep.subr.mxu0 %v1541
      %1546 = vmatpush1.msra.mxu0 %v1538
      %1547 = vmatprep.subr.mxu0 0.0
      %1548 = vmatpush1.msra.mxu0 0.0
      %1549 = vmatprep.subr.mxu0 0.0
      %1550 = vmatpush1.msra.mxu0 0.0
      %1551 = vmatprep.subr.mxu0 0.0
      %1552 = vmatpush1.msra.mxu0 0.0
      %1553 = vmatprep.subr.mxu0 0.0
      %1554 = vmatpush1.msra.mxu0 0.0
      %1555 = vmatprep.subr.mxu0 0.0
      %1556 = vmatpush1.msra.mxu0 0.0
      %1557 = vmatprep.subr.mxu0 0.0
      %1558 = vmatpush1.msra.mxu0 0.0
      %1559 = vmatprep.subr.mxu0 0.0
      %1560 = vmatpush1.msra.mxu0 0.0
      %1561 = vmatprep.subr.mxu0 0.0
      %1562 = vmatpush1.msra.mxu0 0.0
      %1563 = vmatprep.subr.mxu0 0.0
      %1564 = vmatpush1.msra.mxu0 0.0
      %1565 = vmatprep.subr.mxu0 0.0
      %1566 = vmatpush1.msra.mxu0 0.0
      %1567 = vmatprep.subr.mxu0 0.0
      %1568 = vmatpush1.msra.mxu0 0.0
      %1569 = vmatprep.subr.mxu0 0.0
      %1570 = vmatpush1.msra.mxu0 0.0
      %1571 = vmatprep.subr.mxu0 0.0
      %1572 = vmatpush1.msra.mxu0 0.0
      %1573 = vmatprep.subr.mxu0 0.0
      %1574 = vmatpush1.msra.mxu0 0.0
      %1575 = vmatprep.subr.mxu0 0.0
      %1576 = vmatpush1.msra.mxu0 0.0
      %1577 = vmatprep.subr.mxu0 0.0
      %1578 = vmatpush1.msra.mxu0 0.0
      %1579 = vmatprep.subr.mxu0 0.0
      %1580 = vmatpush1.msra.mxu0 0.0
      %1581 = vmatprep.subr.mxu0 0.0
      %1582 = vmatpush1.msra.mxu0 0.0
      %1583 = vmatprep.subr.mxu0 0.0
      %1584 = vmatpush1.msra.mxu0 0.0
      %1585 = vmatprep.subr.mxu0 0.0
      %1586 = vmatpush1.msra.mxu0 0.0
      %1587 = vmatprep.subr.mxu0 0.0
      %1588 = vmatpush1.msra.mxu0 0.0
      %1589 = vmatprep.subr.mxu0 0.0
      %1590 = vmatpush1.msra.mxu0 0.0
      %1591 = vmatprep.subr.mxu0 0.0
      %1592 = vmatpush1.msra.mxu0 0.0
      %1593 = vmatprep.subr.mxu0 0.0
      %1594 = vmatpush1.msra.mxu0 0.0
      %1595 = vmatprep.subr.mxu0 0.0
      %1596 = vmatpush1.msra.mxu0 0.0
      %1597 = vmatprep.subr.mxu0 0.0
      %1598 = vmatpush1.msra.mxu0 0.0
      %1599 = vmatprep.subr.mxu0 0.0
      %1600 = vmatpush1.msra.mxu0 0.0
      %1601 = vmatprep.subr.mxu0 0.0
      %1602 = vmatpush1.msra.mxu0 0.0
      %1603 = vmatprep.subr.mxu0 0.0
      %1604 = vmatpush1.msra.mxu0 0.0
      %1605 = vmatprep.subr.mxu0 0.0
      %1606 = vmatpush1.msra.mxu0 0.0
      %1607 = vmatprep.mubr.f32.mxu0 0.0
      %1608 = vmatmul.mubr.f32.gmra.mrb[0].mxu0 %v460
      %v1609 = vpop.f32.mrb[0].mxu0
      %v1610 = vadd.f32 %v457, %v1609
      %v1611 = vpop.f32.mrb[0].mxu0
      %v1612 = vadd.f32 %v457, %v1611
      %1613 = vdwg.mxu0
      %v1614 = vmax.f32 %v1610, 0.0
      %v1615 = vmax.f32 %v1612, 0.0
      %v1617 = vsel %vm550, %v1614, 0
      %v1620 = vsel %vm550, %v1615, 0
      %1622 = vmatprep.subr.mxu0 %v1620
      %1623 = vmatpush1.msra.mxu0 %v1617
      %1624 = vmatprep.subr.mxu0 0.0
      %1625 = vmatpush1.msra.mxu0 0.0
      %1626 = vmatprep.subr.mxu0 0.0
      %1627 = vmatpush1.msra.mxu0 0.0
      %1628 = vmatprep.subr.mxu0 0.0
      %1629 = vmatpush1.msra.mxu0 0.0
      %1630 = vmatprep.subr.mxu0 0.0
      %1631 = vmatpush1.msra.mxu0 0.0
      %1632 = vmatprep.subr.mxu0 0.0
      %1633 = vmatpush1.msra.mxu0 0.0
      %1634 = vmatprep.subr.mxu0 0.0
      %1635 = vmatpush1.msra.mxu0 0.0
      %1636 = vmatprep.subr.mxu0 0.0
      %1637 = vmatpush1.msra.mxu0 0.0
      %1638 = vmatprep.subr.mxu0 0.0
      %1639 = vmatpush1.msra.mxu0 0.0
      %1640 = vmatprep.subr.mxu0 0.0
      %1641 = vmatpush1.msra.mxu0 0.0
      %1642 = vmatprep.subr.mxu0 0.0
      %1643 = vmatpush1.msra.mxu0 0.0
      %1644 = vmatprep.subr.mxu0 0.0
      %1645 = vmatpush1.msra.mxu0 0.0
      %1646 = vmatprep.subr.mxu0 0.0
      %1647 = vmatpush1.msra.mxu0 0.0
      %1648 = vmatprep.subr.mxu0 0.0
      %1649 = vmatpush1.msra.mxu0 0.0
      %1650 = vmatprep.subr.mxu0 0.0
      %1651 = vmatpush1.msra.mxu0 0.0
      %1652 = vmatprep.subr.mxu0 0.0
      %1653 = vmatpush1.msra.mxu0 0.0
      %1654 = vmatprep.subr.mxu0 0.0
      %1655 = vmatpush1.msra.mxu0 0.0
      %1656 = vmatprep.subr.mxu0 0.0
      %1657 = vmatpush1.msra.mxu0 0.0
      %1658 = vmatprep.subr.mxu0 0.0
      %1659 = vmatpush1.msra.mxu0 0.0
      %1660 = vmatprep.subr.mxu0 0.0
      %1661 = vmatpush1.msra.mxu0 0.0
      %1662 = vmatprep.subr.mxu0 0.0
      %1663 = vmatpush1.msra.mxu0 0.0
      %1664 = vmatprep.subr.mxu0 0.0
      %1665 = vmatpush1.msra.mxu0 0.0
      %1666 = vmatprep.subr.mxu0 0.0
      %1667 = vmatpush1.msra.mxu0 0.0
      %1668 = vmatprep.subr.mxu0 0.0
      %1669 = vmatpush1.msra.mxu0 0.0
      %1670 = vmatprep.subr.mxu0 0.0
      %1671 = vmatpush1.msra.mxu0 0.0
      %1672 = vmatprep.subr.mxu0 0.0
      %1673 = vmatpush1.msra.mxu0 0.0
      %1674 = vmatprep.subr.mxu0 0.0
      %1675 = vmatpush1.msra.mxu0 0.0
      %1676 = vmatprep.subr.mxu0 0.0
      %1677 = vmatpush1.msra.mxu0 0.0
      %1678 = vmatprep.subr.mxu0 0.0
      %1679 = vmatpush1.msra.mxu0 0.0
      %1680 = vmatprep.subr.mxu0 0.0
      %1681 = vmatpush1.msra.mxu0 0.0
      %1682 = vmatprep.subr.mxu0 0.0
      %1683 = vmatpush1.msra.mxu0 0.0
      %1684 = vmatprep.subr.mxu0 0.0
      %1685 = vmatpush1.msra.mxu0 0.0
      %1686 = vmatprep.mubr.f32.mxu0 0.0
      %1687 = vmatmul.mubr.f32.gmra.mrb[0].mxu0 %v548
      %v1688 = vpop.f32.mrb[0].mxu0
      %v1689 = vadd.f32 %v544, %v1688
      %v1690 = vpop.f32.mrb[0].mxu0
      %v1691 = vadd.f32 %v544, %v1690
      %1692 = vdwg.mxu0
      %v1693 = vmax.f32 %v1689, 0.0
      %v1694 = vmax.f32 %v1691, 0.0
      %v1697 = vcombine.low %v1693, %v1694
      %v1699 = vunpack.c.l.s4 1966171168
      %v1700 = vunpack.c.0.s8 %v1699
      %v1701 = vlaneseq
      %v1702 = vshrl.u32 %v1701, 7
      %v1703 = vsub.s32 %v1700, %v1702
      %v1704 = vrot.slane %v1697, %v1703
      %v1706 = vunpack.c.l.s4 1966171168
      %v1707 = vunpack.c.0.s8 %v1706
      %v1708 = vlaneseq
      %v1709 = vshrl.u32 %v1708, 7
      %v1710 = vsub.s32 %v1707, %v1709
      %v1711 = vrot.slane %v1704, %v1710
      %s1713 = scalar_lea.vmem %s230, 6
      %1714 = vst.msk [vmem:[%s1713] sm:$0x3] %vm651, %v1711
      %s1715 = scalar_lea.vmem %s212, 32
      %v1716 = vld [vmem:[%s1715] sm:$0xff]
      %v1718 = vcombine.high %v1716, %v1716
      %v1719 = vsel %vm264, %v1716, 0
      %v1721 = vsel %vm264, %v1718, 0
      %1723 = vmatprep.subr.mxu0 %v1721
      %1724 = vmatpush1.msra.mxu0 %v1719
      %1725 = vmatprep.subr.mxu0 0.0
      %1726 = vmatpush1.msra.mxu0 0.0
      %1727 = vmatprep.subr.mxu0 0.0
      %1728 = vmatpush1.msra.mxu0 0.0
      %1729 = vmatprep.subr.mxu0 0.0
      %1730 = vmatpush1.msra.mxu0 0.0
      %1731 = vmatprep.subr.mxu0 0.0
      %1732 = vmatpush1.msra.mxu0 0.0
      %1733 = vmatprep.subr.mxu0 0.0
      %1734 = vmatpush1.msra.mxu0 0.0
      %1735 = vmatprep.subr.mxu0 0.0
      %1736 = vmatpush1.msra.mxu0 0.0
      %1737 = vmatprep.subr.mxu0 0.0
      %1738 = vmatpush1.msra.mxu0 0.0
      %1739 = vmatprep.subr.mxu0 0.0
      %1740 = vmatpush1.msra.mxu0 0.0
      %1741 = vmatprep.subr.mxu0 0.0
      %1742 = vmatpush1.msra.mxu0 0.0
      %1743 = vmatprep.subr.mxu0 0.0
      %1744 = vmatpush1.msra.mxu0 0.0
      %1745 = vmatprep.subr.mxu0 0.0
      %1746 = vmatpush1.msra.mxu0 0.0
      %1747 = vmatprep.subr.mxu0 0.0
      %1748 = vmatpush1.msra.mxu0 0.0
      %1749 = vmatprep.subr.mxu0 0.0
      %1750 = vmatpush1.msra.mxu0 0.0
      %1751 = vmatprep.subr.mxu0 0.0
      %1752 = vmatpush1.msra.mxu0 0.0
      %1753 = vmatprep.subr.mxu0 0.0
      %1754 = vmatpush1.msra.mxu0 0.0
      %1755 = vmatprep.subr.mxu0 0.0
      %1756 = vmatpush1.msra.mxu0 0.0
      %1757 = vmatprep.subr.mxu0 0.0
      %1758 = vmatpush1.msra.mxu0 0.0
      %1759 = vmatprep.subr.mxu0 0.0
      %1760 = vmatpush1.msra.mxu0 0.0
      %1761 = vmatprep.subr.mxu0 0.0
      %1762 = vmatpush1.msra.mxu0 0.0
      %1763 = vmatprep.subr.mxu0 0.0
      %1764 = vmatpush1.msra.mxu0 0.0
      %1765 = vmatprep.subr.mxu0 0.0
      %1766 = vmatpush1.msra.mxu0 0.0
      %1767 = vmatprep.subr.mxu0 0.0
      %1768 = vmatpush1.msra.mxu0 0.0
      %1769 = vmatprep.subr.mxu0 0.0
      %1770 = vmatpush1.msra.mxu0 0.0
      %1771 = vmatprep.subr.mxu0 0.0
      %1772 = vmatpush1.msra.mxu0 0.0
      %1773 = vmatprep.subr.mxu0 0.0
      %1774 = vmatpush1.msra.mxu0 0.0
      %1775 = vmatprep.subr.mxu0 0.0
      %1776 = vmatpush1.msra.mxu0 0.0
      %1777 = vmatprep.subr.mxu0 0.0
      %1778 = vmatpush1.msra.mxu0 0.0
      %1779 = vmatprep.subr.mxu0 0.0
      %1780 = vmatpush1.msra.mxu0 0.0
      %1781 = vmatprep.subr.mxu0 0.0
      %1782 = vmatpush1.msra.mxu0 0.0
      %1783 = vmatprep.subr.mxu0 0.0
      %1784 = vmatpush1.msra.mxu0 0.0
      %1785 = vmatprep.subr.mxu0 0.0
      %1786 = vmatpush1.msra.mxu0 0.0
      %1787 = vmatprep.mubr.f32.mxu0 0.0
      %1788 = vmatmul.mubr.f32.gmra.mrb[0].mxu0 %v259
      %v1789 = vpop.f32.mrb[0].mxu0
      %v1790 = vadd.f32 %v248, %v1789
      %v1791 = vpop.f32.mrb[0].mxu0
      %v1792 = vadd.f32 %v248, %v1791
      %1793 = vmatprep.mubr.f32.mxu0 0.0
      %1794 = vmatmul.mubr.f32.gmra.mrb[0].mxu0 %v262
      %v1795 = vpop.f32.mrb[0].mxu0
      %v1796 = vadd.f32 %v253, %v1795
      %v1797 = vpop.f32.mrb[0].mxu0
      %v1798 = vadd.f32 %v253, %v1797
      %1799 = vdwg.mxu0
      %v1800 = vmax.f32 %v1790, 0.0
      %v1801 = vmax.f32 %v1792, 0.0
      %v1802 = vmax.f32 %v1796, 0.0
      %v1803 = vmax.f32 %v1798, 0.0
      %v1805 = vsel %vm264, %v1802, 0
      %v1808 = vsel %vm264, %v1803, 0
      %1810 = vmatprep.subr.mxu0 %v1801
      %1811 = vmatpush1.msra.mxu0 %v1800
      %1812 = vmatprep.subr.mxu0 %v1808
      %1813 = vmatpush1.msra.mxu0 %v1805
      %1814 = vmatprep.subr.mxu0 0.0
      %1815 = vmatpush1.msra.mxu0 0.0
      %1816 = vmatprep.subr.mxu0 0.0
      %1817 = vmatpush1.msra.mxu0 0.0
      %1818 = vmatprep.subr.mxu0 0.0
      %1819 = vmatpush1.msra.mxu0 0.0
      %1820 = vmatprep.subr.mxu0 0.0
      %1821 = vmatpush1.msra.mxu0 0.0
      %1822 = vmatprep.subr.mxu0 0.0
      %1823 = vmatpush1.msra.mxu0 0.0
      %1824 = vmatprep.subr.mxu0 0.0
      %1825 = vmatpush1.msra.mxu0 0.0
      %1826 = vmatprep.subr.mxu0 0.0
      %1827 = vmatpush1.msra.mxu0 0.0
      %1828 = vmatprep.subr.mxu0 0.0
      %1829 = vmatpush1.msra.mxu0 0.0
      %1830 = vmatprep.subr.mxu0 0.0
      %1831 = vmatpush1.msra.mxu0 0.0
      %1832 = vmatprep.subr.mxu0 0.0
      %1833 = vmatpush1.msra.mxu0 0.0
      %1834 = vmatprep.subr.mxu0 0.0
      %1835 = vmatpush1.msra.mxu0 0.0
      %1836 = vmatprep.subr.mxu0 0.0
      %1837 = vmatpush1.msra.mxu0 0.0
      %1838 = vmatprep.subr.mxu0 0.0
      %1839 = vmatpush1.msra.mxu0 0.0
      %1840 = vmatprep.subr.mxu0 0.0
      %1841 = vmatpush1.msra.mxu0 0.0
      %1842 = vmatprep.subr.mxu0 0.0
      %1843 = vmatpush1.msra.mxu0 0.0
      %1844 = vmatprep.subr.mxu0 0.0
      %1845 = vmatpush1.msra.mxu0 0.0
      %1846 = vmatprep.subr.mxu0 0.0
      %1847 = vmatpush1.msra.mxu0 0.0
      %1848 = vmatprep.subr.mxu0 0.0
      %1849 = vmatpush1.msra.mxu0 0.0
      %1850 = vmatprep.subr.mxu0 0.0
      %1851 = vmatpush1.msra.mxu0 0.0
      %1852 = vmatprep.subr.mxu0 0.0
      %1853 = vmatpush1.msra.mxu0 0.0
      %1854 = vmatprep.subr.mxu0 0.0
      %1855 = vmatpush1.msra.mxu0 0.0
      %1856 = vmatprep.subr.mxu0 0.0
      %1857 = vmatpush1.msra.mxu0 0.0
      %1858 = vmatprep.subr.mxu0 0.0
      %1859 = vmatpush1.msra.mxu0 0.0
      %1860 = vmatprep.subr.mxu0 0.0
      %1861 = vmatpush1.msra.mxu0 0.0
      %1862 = vmatprep.subr.mxu0 0.0
      %1863 = vmatpush1.msra.mxu0 0.0
      %1864 = vmatprep.subr.mxu0 0.0
      %1865 = vmatpush1.msra.mxu0 0.0
      %1866 = vmatprep.subr.mxu0 0.0
      %1867 = vmatpush1.msra.mxu0 0.0
      %1868 = vmatprep.subr.mxu0 0.0
      %1869 = vmatpush1.msra.mxu0 0.0
      %1870 = vmatprep.subr.mxu0 0.0
      %1871 = vmatpush1.msra.mxu0 0.0
      %1872 = vmatprep.subr.mxu0 0.0
      %1873 = vmatpush1.msra.mxu0 0.0
      %1874 = vmatprep.mubr.f32.mxu0 0.0
      %1875 = vmatmul.mubr.f32.gmra.mrb[0].mxu0 %v362
      %v1876 = vpop.f32.mrb[0].mxu0
      %v1877 = vadd.f32 %v353, %v1876
      %v1878 = vpop.f32.mrb[0].mxu0
      %v1879 = vadd.f32 %v353, %v1878
      %1880 = vmatprep.mubr.f32.mxu0 0.0
      %1881 = vmatmul.mubr.f32.gmra.mrb[0].mxu0 %v365
      %v1882 = vpop.f32.mrb[0].mxu0
      %v1883 = vadd.f32 %v358, %v1882
      %v1884 = vpop.f32.mrb[0].mxu0
      %v1885 = vadd.f32 %v358, %v1884
      %1886 = vdwg.mxu0
      %v1887 = vmax.f32 %v1877, 0.0
      %v1888 = vmax.f32 %v1879, 0.0
      %v1889 = vmax.f32 %v1883, 0.0
      %v1890 = vmax.f32 %v1885, 0.0
      %v1892 = vsel %vm264, %v1889, 0
      %v1895 = vsel %vm264, %v1890, 0
      %1897 = vmatprep.subr.mxu0 %v1888
      %1898 = vmatpush1.msra.mxu0 %v1887
      %1899 = vmatprep.subr.mxu0 %v1895
      %1900 = vmatpush1.msra.mxu0 %v1892
      %1901 = vmatprep.subr.mxu0 0.0
      %1902 = vmatpush1.msra.mxu0 0.0
      %1903 = vmatprep.subr.mxu0 0.0
      %1904 = vmatpush1.msra.mxu0 0.0
      %1905 = vmatprep.subr.mxu0 0.0
      %1906 = vmatpush1.msra.mxu0 0.0
      %1907 = vmatprep.subr.mxu0 0.0
      %1908 = vmatpush1.msra.mxu0 0.0
      %1909 = vmatprep.subr.mxu0 0.0
      %1910 = vmatpush1.msra.mxu0 0.0
      %1911 = vmatprep.subr.mxu0 0.0
      %1912 = vmatpush1.msra.mxu0 0.0
      %1913 = vmatprep.subr.mxu0 0.0
      %1914 = vmatpush1.msra.mxu0 0.0
      %1915 = vmatprep.subr.mxu0 0.0
      %1916 = vmatpush1.msra.mxu0 0.0
      %1917 = vmatprep.subr.mxu0 0.0
      %1918 = vmatpush1.msra.mxu0 0.0
      %1919 = vmatprep.subr.mxu0 0.0
      %1920 = vmatpush1.msra.mxu0 0.0
      %1921 = vmatprep.subr.mxu0 0.0
      %1922 = vmatpush1.msra.mxu0 0.0
      %1923 = vmatprep.subr.mxu0 0.0
      %1924 = vmatpush1.msra.mxu0 0.0
      %1925 = vmatprep.subr.mxu0 0.0
      %1926 = vmatpush1.msra.mxu0 0.0
      %1927 = vmatprep.subr.mxu0 0.0
      %1928 = vmatpush1.msra.mxu0 0.0
      %1929 = vmatprep.subr.mxu0 0.0
      %1930 = vmatpush1.msra.mxu0 0.0
      %1931 = vmatprep.subr.mxu0 0.0
      %1932 = vmatpush1.msra.mxu0 0.0
      %1933 = vmatprep.subr.mxu0 0.0
      %1934 = vmatpush1.msra.mxu0 0.0
      %1935 = vmatprep.subr.mxu0 0.0
      %1936 = vmatpush1.msra.mxu0 0.0
      %1937 = vmatprep.subr.mxu0 0.0
      %1938 = vmatpush1.msra.mxu0 0.0
      %1939 = vmatprep.subr.mxu0 0.0
      %1940 = vmatpush1.msra.mxu0 0.0
      %1941 = vmatprep.subr.mxu0 0.0
      %1942 = vmatpush1.msra.mxu0 0.0
      %1943 = vmatprep.subr.mxu0 0.0
      %1944 = vmatpush1.msra.mxu0 0.0
      %1945 = vmatprep.subr.mxu0 0.0
      %1946 = vmatpush1.msra.mxu0 0.0
      %1947 = vmatprep.subr.mxu0 0.0
      %1948 = vmatpush1.msra.mxu0 0.0
      %1949 = vmatprep.subr.mxu0 0.0
      %1950 = vmatpush1.msra.mxu0 0.0
      %1951 = vmatprep.subr.mxu0 0.0
      %1952 = vmatpush1.msra.mxu0 0.0
      %1953 = vmatprep.subr.mxu0 0.0
      %1954 = vmatpush1.msra.mxu0 0.0
      %1955 = vmatprep.subr.mxu0 0.0
      %1956 = vmatpush1.msra.mxu0 0.0
      %1957 = vmatprep.subr.mxu0 0.0
      %1958 = vmatpush1.msra.mxu0 0.0
      %1959 = vmatprep.subr.mxu0 0.0
      %1960 = vmatpush1.msra.mxu0 0.0
      %1961 = vmatprep.mubr.f32.mxu0 0.0
      %1962 = vmatmul.mubr.f32.gmra.mrb[0].mxu0 %v460
      %v1963 = vpop.f32.mrb[0].mxu0
      %v1964 = vadd.f32 %v457, %v1963
      %v1965 = vpop.f32.mrb[0].mxu0
      %v1966 = vadd.f32 %v457, %v1965
      %1967 = vdwg.mxu0
      %v1968 = vmax.f32 %v1964, 0.0
      %v1969 = vmax.f32 %v1966, 0.0
      %v1971 = vsel %vm550, %v1968, 0
      %v1974 = vsel %vm550, %v1969, 0
      %1976 = vmatprep.subr.mxu0 %v1974
      %1977 = vmatpush1.msra.mxu0 %v1971
      %1978 = vmatprep.subr.mxu0 0.0
      %1979 = vmatpush1.msra.mxu0 0.0
      %1980 = vmatprep.subr.mxu0 0.0
      %1981 = vmatpush1.msra.mxu0 0.0
      %1982 = vmatprep.subr.mxu0 0.0
      %1983 = vmatpush1.msra.mxu0 0.0
      %1984 = vmatprep.subr.mxu0 0.0
      %1985 = vmatpush1.msra.mxu0 0.0
      %1986 = vmatprep.subr.mxu0 0.0
      %1987 = vmatpush1.msra.mxu0 0.0
      %1988 = vmatprep.subr.mxu0 0.0
      %1989 = vmatpush1.msra.mxu0 0.0
      %1990 = vmatprep.subr.mxu0 0.0
      %1991 = vmatpush1.msra.mxu0 0.0
      %1992 = vmatprep.subr.mxu0 0.0
      %1993 = vmatpush1.msra.mxu0 0.0
      %1994 = vmatprep.subr.mxu0 0.0
      %1995 = vmatpush1.msra.mxu0 0.0
      %1996 = vmatprep.subr.mxu0 0.0
      %1997 = vmatpush1.msra.mxu0 0.0
      %1998 = vmatprep.subr.mxu0 0.0
      %1999 = vmatpush1.msra.mxu0 0.0
      %2000 = vmatprep.subr.mxu0 0.0
      %2001 = vmatpush1.msra.mxu0 0.0
      %2002 = vmatprep.subr.mxu0 0.0
      %2003 = vmatpush1.msra.mxu0 0.0
      %2004 = vmatprep.subr.mxu0 0.0
      %2005 = vmatpush1.msra.mxu0 0.0
      %2006 = vmatprep.subr.mxu0 0.0
      %2007 = vmatpush1.msra.mxu0 0.0
      %2008 = vmatprep.subr.mxu0 0.0
      %2009 = vmatpush1.msra.mxu0 0.0
      %2010 = vmatprep.subr.mxu0 0.0
      %2011 = vmatpush1.msra.mxu0 0.0
      %2012 = vmatprep.subr.mxu0 0.0
      %2013 = vmatpush1.msra.mxu0 0.0
      %2014 = vmatprep.subr.mxu0 0.0
      %2015 = vmatpush1.msra.mxu0 0.0
      %2016 = vmatprep.subr.mxu0 0.0
      %2017 = vmatpush1.msra.mxu0 0.0
      %2018 = vmatprep.subr.mxu0 0.0
      %2019 = vmatpush1.msra.mxu0 0.0
      %2020 = vmatprep.subr.mxu0 0.0
      %2021 = vmatpush1.msra.mxu0 0.0
      %2022 = vmatprep.subr.mxu0 0.0
      %2023 = vmatpush1.msra.mxu0 0.0
      %2024 = vmatprep.subr.mxu0 0.0
      %2025 = vmatpush1.msra.mxu0 0.0
      %2026 = vmatprep.subr.mxu0 0.0
      %2027 = vmatpush1.msra.mxu0 0.0
      %2028 = vmatprep.subr.mxu0 0.0
      %2029 = vmatpush1.msra.mxu0 0.0
      %2030 = vmatprep.subr.mxu0 0.0
      %2031 = vmatpush1.msra.mxu0 0.0
      %2032 = vmatprep.subr.mxu0 0.0
      %2033 = vmatpush1.msra.mxu0 0.0
      %2034 = vmatprep.subr.mxu0 0.0
      %2035 = vmatpush1.msra.mxu0 0.0
      %2036 = vmatprep.subr.mxu0 0.0
      %2037 = vmatpush1.msra.mxu0 0.0
      %2038 = vmatprep.subr.mxu0 0.0
      %2039 = vmatpush1.msra.mxu0 0.0
      %2040 = vmatprep.mubr.f32.mxu0 0.0
      %2041 = vmatmul.mubr.f32.gmra.mrb[0].mxu0 %v548
      %v2042 = vpop.f32.mrb[0].mxu0
      %v2043 = vadd.f32 %v544, %v2042
      %v2044 = vpop.f32.mrb[0].mxu0
      %v2045 = vadd.f32 %v544, %v2044
      %2046 = vdwg.mxu0
      %v2047 = vmax.f32 %v2043, 0.0
      %v2048 = vmax.f32 %v2045, 0.0
      %v2051 = vcombine.low %v2047, %v2048
      %v2053 = vunpack.c.l.s4 1966171168
      %v2054 = vunpack.c.0.s8 %v2053
      %v2055 = vlaneseq
      %v2056 = vshrl.u32 %v2055, 7
      %v2057 = vsub.s32 %v2054, %v2056
      %v2058 = vrot.slane %v2051, %v2057
      %v2060 = vunpack.c.l.s4 1966171168
      %v2061 = vunpack.c.0.s8 %v2060
      %v2062 = vlaneseq
      %v2063 = vshrl.u32 %v2062, 7
      %v2064 = vsub.s32 %v2061, %v2063
      %v2065 = vrot.slane %v2058, %v2064
      %s2067 = scalar_lea.vmem %s230, 8
      %2068 = vst.msk [vmem:[%s2067] sm:$0x3] %vm651, %v2065
      %s2069 = scalar_lea.vmem %s212, 40
      %v2070 = vld [vmem:[%s2069] sm:$0xff]
      %v2072 = vcombine.high %v2070, %v2070
      %v2073 = vsel %vm264, %v2070, 0
      %v2075 = vsel %vm264, %v2072, 0
      %2077 = vmatprep.subr.mxu0 %v2075
      %2078 = vmatpush1.msra.mxu0 %v2073
      %2079 = vmatprep.subr.mxu0 0.0
      %2080 = vmatpush1.msra.mxu0 0.0
      %2081 = vmatprep.subr.mxu0 0.0
      %2082 = vmatpush1.msra.mxu0 0.0
      %2083 = vmatprep.subr.mxu0 0.0
      %2084 = vmatpush1.msra.mxu0 0.0
      %2085 = vmatprep.subr.mxu0 0.0
      %2086 = vmatpush1.msra.mxu0 0.0
      %2087 = vmatprep.subr.mxu0 0.0
      %2088 = vmatpush1.msra.mxu0 0.0
      %2089 = vmatprep.subr.mxu0 0.0
      %2090 = vmatpush1.msra.mxu0 0.0
      %2091 = vmatprep.subr.mxu0 0.0
      %2092 = vmatpush1.msra.mxu0 0.0
      %2093 = vmatprep.subr.mxu0 0.0
      %2094 = vmatpush1.msra.mxu0 0.0
      %2095 = vmatprep.subr.mxu0 0.0
      %2096 = vmatpush1.msra.mxu0 0.0
      %2097 = vmatprep.subr.mxu0 0.0
      %2098 = vmatpush1.msra.mxu0 0.0
      %2099 = vmatprep.subr.mxu0 0.0
      %2100 = vmatpush1.msra.mxu0 0.0
      %2101 = vmatprep.subr.mxu0 0.0
      %2102 = vmatpush1.msra.mxu0 0.0
      %2103 = vmatprep.subr.mxu0 0.0
      %2104 = vmatpush1.msra.mxu0 0.0
      %2105 = vmatprep.subr.mxu0 0.0
      %2106 = vmatpush1.msra.mxu0 0.0
      %2107 = vmatprep.subr.mxu0 0.0
      %2108 = vmatpush1.msra.mxu0 0.0
      %2109 = vmatprep.subr.mxu0 0.0
      %2110 = vmatpush1.msra.mxu0 0.0
      %2111 = vmatprep.subr.mxu0 0.0
      %2112 = vmatpush1.msra.mxu0 0.0
      %2113 = vmatprep.subr.mxu0 0.0
      %2114 = vmatpush1.msra.mxu0 0.0
      %2115 = vmatprep.subr.mxu0 0.0
      %2116 = vmatpush1.msra.mxu0 0.0
      %2117 = vmatprep.subr.mxu0 0.0
      %2118 = vmatpush1.msra.mxu0 0.0
      %2119 = vmatprep.subr.mxu0 0.0
      %2120 = vmatpush1.msra.mxu0 0.0
      %2121 = vmatprep.subr.mxu0 0.0
      %2122 = vmatpush1.msra.mxu0 0.0
      %2123 = vmatprep.subr.mxu0 0.0
      %2124 = vmatpush1.msra.mxu0 0.0
      %2125 = vmatprep.subr.mxu0 0.0
      %2126 = vmatpush1.msra.mxu0 0.0
      %2127 = vmatprep.subr.mxu0 0.0
      %2128 = vmatpush1.msra.mxu0 0.0
      %2129 = vmatprep.subr.mxu0 0.0
      %2130 = vmatpush1.msra.mxu0 0.0
      %2131 = vmatprep.subr.mxu0 0.0
      %2132 = vmatpush1.msra.mxu0 0.0
      %2133 = vmatprep.subr.mxu0 0.0
      %2134 = vmatpush1.msra.mxu0 0.0
      %2135 = vmatprep.subr.mxu0 0.0
      %2136 = vmatpush1.msra.mxu0 0.0
      %2137 = vmatprep.subr.mxu0 0.0
      %2138 = vmatpush1.msra.mxu0 0.0
      %2139 = vmatprep.subr.mxu0 0.0
      %2140 = vmatpush1.msra.mxu0 0.0
      %2141 = vmatprep.mubr.f32.mxu0 0.0
      %2142 = vmatmul.mubr.f32.gmra.mrb[0].mxu0 %v259
      %v2143 = vpop.f32.mrb[0].mxu0
      %v2144 = vadd.f32 %v248, %v2143
      %v2145 = vpop.f32.mrb[0].mxu0
      %v2146 = vadd.f32 %v248, %v2145
      %2147 = vmatprep.mubr.f32.mxu0 0.0
      %2148 = vmatmul.mubr.f32.gmra.mrb[0].mxu0 %v262
      %v2149 = vpop.f32.mrb[0].mxu0
      %v2150 = vadd.f32 %v253, %v2149
      %v2151 = vpop.f32.mrb[0].mxu0
      %v2152 = vadd.f32 %v253, %v2151
      %2153 = vdwg.mxu0
      %v2154 = vmax.f32 %v2144, 0.0
      %v2155 = vmax.f32 %v2146, 0.0
      %v2156 = vmax.f32 %v2150, 0.0
      %v2157 = vmax.f32 %v2152, 0.0
      %v2159 = vsel %vm264, %v2156, 0
      %v2162 = vsel %vm264, %v2157, 0
      %2164 = vmatprep.subr.mxu0 %v2155
      %2165 = vmatpush1.msra.mxu0 %v2154
      %2166 = vmatprep.subr.mxu0 %v2162
      %2167 = vmatpush1.msra.mxu0 %v2159
      %2168 = vmatprep.subr.mxu0 0.0
      %2169 = vmatpush1.msra.mxu0 0.0
      %2170 = vmatprep.subr.mxu0 0.0
      %2171 = vmatpush1.msra.mxu0 0.0
      %2172 = vmatprep.subr.mxu0 0.0
      %2173 = vmatpush1.msra.mxu0 0.0
      %2174 = vmatprep.subr.mxu0 0.0
      %2175 = vmatpush1.msra.mxu0 0.0
      %2176 = vmatprep.subr.mxu0 0.0
      %2177 = vmatpush1.msra.mxu0 0.0
      %2178 = vmatprep.subr.mxu0 0.0
      %2179 = vmatpush1.msra.mxu0 0.0
      %2180 = vmatprep.subr.mxu0 0.0
      %2181 = vmatpush1.msra.mxu0 0.0
      %2182 = vmatprep.subr.mxu0 0.0
      %2183 = vmatpush1.msra.mxu0 0.0
      %2184 = vmatprep.subr.mxu0 0.0
      %2185 = vmatpush1.msra.mxu0 0.0
      %2186 = vmatprep.subr.mxu0 0.0
      %2187 = vmatpush1.msra.mxu0 0.0
      %2188 = vmatprep.subr.mxu0 0.0
      %2189 = vmatpush1.msra.mxu0 0.0
      %2190 = vmatprep.subr.mxu0 0.0
      %2191 = vmatpush1.msra.mxu0 0.0
      %2192 = vmatprep.subr.mxu0 0.0
      %2193 = vmatpush1.msra.mxu0 0.0
      %2194 = vmatprep.subr.mxu0 0.0
      %2195 = vmatpush1.msra.mxu0 0.0
      %2196 = vmatprep.subr.mxu0 0.0
      %2197 = vmatpush1.msra.mxu0 0.0
      %2198 = vmatprep.subr.mxu0 0.0
      %2199 = vmatpush1.msra.mxu0 0.0
      %2200 = vmatprep.subr.mxu0 0.0
      %2201 = vmatpush1.msra.mxu0 0.0
      %2202 = vmatprep.subr.mxu0 0.0
      %2203 = vmatpush1.msra.mxu0 0.0
      %2204 = vmatprep.subr.mxu0 0.0
      %2205 = vmatpush1.msra.mxu0 0.0
      %2206 = vmatprep.subr.mxu0 0.0
      %2207 = vmatpush1.msra.mxu0 0.0
      %2208 = vmatprep.subr.mxu0 0.0
      %2209 = vmatpush1.msra.mxu0 0.0
      %2210 = vmatprep.subr.mxu0 0.0
      %2211 = vmatpush1.msra.mxu0 0.0
      %2212 = vmatprep.subr.mxu0 0.0
      %2213 = vmatpush1.msra.mxu0 0.0
      %2214 = vmatprep.subr.mxu0 0.0
      %2215 = vmatpush1.msra.mxu0 0.0
      %2216 = vmatprep.subr.mxu0 0.0
      %2217 = vmatpush1.msra.mxu0 0.0
      %2218 = vmatprep.subr.mxu0 0.0
      %2219 = vmatpush1.msra.mxu0 0.0
      %2220 = vmatprep.subr.mxu0 0.0
      %2221 = vmatpush1.msra.mxu0 0.0
      %2222 = vmatprep.subr.mxu0 0.0
      %2223 = vmatpush1.msra.mxu0 0.0
      %2224 = vmatprep.subr.mxu0 0.0
      %2225 = vmatpush1.msra.mxu0 0.0
      %2226 = vmatprep.subr.mxu0 0.0
      %2227 = vmatpush1.msra.mxu0 0.0
      %2228 = vmatprep.mubr.f32.mxu0 0.0
      %2229 = vmatmul.mubr.f32.gmra.mrb[0].mxu0 %v362
      %v2230 = vpop.f32.mrb[0].mxu0
      %v2231 = vadd.f32 %v353, %v2230
      %v2232 = vpop.f32.mrb[0].mxu0
      %v2233 = vadd.f32 %v353, %v2232
      %2234 = vmatprep.mubr.f32.mxu0 0.0
      %2235 = vmatmul.mubr.f32.gmra.mrb[0].mxu0 %v365
      %v2236 = vpop.f32.mrb[0].mxu0
      %v2237 = vadd.f32 %v358, %v2236
      %v2238 = vpop.f32.mrb[0].mxu0
      %v2239 = vadd.f32 %v358, %v2238
      %2240 = vdwg.mxu0
      %v2241 = vmax.f32 %v2231, 0.0
      %v2242 = vmax.f32 %v2233, 0.0
      %v2243 = vmax.f32 %v2237, 0.0
      %v2244 = vmax.f32 %v2239, 0.0
      %v2246 = vsel %vm264, %v2243, 0
      %v2249 = vsel %vm264, %v2244, 0
      %2251 = vmatprep.subr.mxu0 %v2242
      %2252 = vmatpush1.msra.mxu0 %v2241
      %2253 = vmatprep.subr.mxu0 %v2249
      %2254 = vmatpush1.msra.mxu0 %v2246
      %2255 = vmatprep.subr.mxu0 0.0
      %2256 = vmatpush1.msra.mxu0 0.0
      %2257 = vmatprep.subr.mxu0 0.0
      %2258 = vmatpush1.msra.mxu0 0.0
      %2259 = vmatprep.subr.mxu0 0.0
      %2260 = vmatpush1.msra.mxu0 0.0
      %2261 = vmatprep.subr.mxu0 0.0
      %2262 = vmatpush1.msra.mxu0 0.0
      %2263 = vmatprep.subr.mxu0 0.0
      %2264 = vmatpush1.msra.mxu0 0.0
      %2265 = vmatprep.subr.mxu0 0.0
      %2266 = vmatpush1.msra.mxu0 0.0
      %2267 = vmatprep.subr.mxu0 0.0
      %2268 = vmatpush1.msra.mxu0 0.0
      %2269 = vmatprep.subr.mxu0 0.0
      %2270 = vmatpush1.msra.mxu0 0.0
      %2271 = vmatprep.subr.mxu0 0.0
      %2272 = vmatpush1.msra.mxu0 0.0
      %2273 = vmatprep.subr.mxu0 0.0
      %2274 = vmatpush1.msra.mxu0 0.0
      %2275 = vmatprep.subr.mxu0 0.0
      %2276 = vmatpush1.msra.mxu0 0.0
      %2277 = vmatprep.subr.mxu0 0.0
      %2278 = vmatpush1.msra.mxu0 0.0
      %2279 = vmatprep.subr.mxu0 0.0
      %2280 = vmatpush1.msra.mxu0 0.0
      %2281 = vmatprep.subr.mxu0 0.0
      %2282 = vmatpush1.msra.mxu0 0.0
      %2283 = vmatprep.subr.mxu0 0.0
      %2284 = vmatpush1.msra.mxu0 0.0
      %2285 = vmatprep.subr.mxu0 0.0
      %2286 = vmatpush1.msra.mxu0 0.0
      %2287 = vmatprep.subr.mxu0 0.0
      %2288 = vmatpush1.msra.mxu0 0.0
      %2289 = vmatprep.subr.mxu0 0.0
      %2290 = vmatpush1.msra.mxu0 0.0
      %2291 = vmatprep.subr.mxu0 0.0
      %2292 = vmatpush1.msra.mxu0 0.0
      %2293 = vmatprep.subr.mxu0 0.0
      %2294 = vmatpush1.msra.mxu0 0.0
      %2295 = vmatprep.subr.mxu0 0.0
      %2296 = vmatpush1.msra.mxu0 0.0
      %2297 = vmatprep.subr.mxu0 0.0
      %2298 = vmatpush1.msra.mxu0 0.0
      %2299 = vmatprep.subr.mxu0 0.0
      %2300 = vmatpush1.msra.mxu0 0.0
      %2301 = vmatprep.subr.mxu0 0.0
      %2302 = vmatpush1.msra.mxu0 0.0
      %2303 = vmatprep.subr.mxu0 0.0
      %2304 = vmatpush1.msra.mxu0 0.0
      %2305 = vmatprep.subr.mxu0 0.0
      %2306 = vmatpush1.msra.mxu0 0.0
      %2307 = vmatprep.subr.mxu0 0.0
      %2308 = vmatpush1.msra.mxu0 0.0
      %2309 = vmatprep.subr.mxu0 0.0
      %2310 = vmatpush1.msra.mxu0 0.0
      %2311 = vmatprep.subr.mxu0 0.0
      %2312 = vmatpush1.msra.mxu0 0.0
      %2313 = vmatprep.subr.mxu0 0.0
      %2314 = vmatpush1.msra.mxu0 0.0
      %2315 = vmatprep.mubr.f32.mxu0 0.0
      %2316 = vmatmul.mubr.f32.gmra.mrb[0].mxu0 %v460
      %v2317 = vpop.f32.mrb[0].mxu0
      %v2318 = vadd.f32 %v457, %v2317
      %v2319 = vpop.f32.mrb[0].mxu0
      %v2320 = vadd.f32 %v457, %v2319
      %2321 = vdwg.mxu0
      %v2322 = vmax.f32 %v2318, 0.0
      %v2323 = vmax.f32 %v2320, 0.0
      %v2325 = vsel %vm550, %v2322, 0
      %v2328 = vsel %vm550, %v2323, 0
      %2330 = vmatprep.subr.mxu0 %v2328
      %2331 = vmatpush1.msra.mxu0 %v2325
      %2332 = vmatprep.subr.mxu0 0.0
      %2333 = vmatpush1.msra.mxu0 0.0
      %2334 = vmatprep.subr.mxu0 0.0
      %2335 = vmatpush1.msra.mxu0 0.0
      %2336 = vmatprep.subr.mxu0 0.0
      %2337 = vmatpush1.msra.mxu0 0.0
      %2338 = vmatprep.subr.mxu0 0.0
      %2339 = vmatpush1.msra.mxu0 0.0
      %2340 = vmatprep.subr.mxu0 0.0
      %2341 = vmatpush1.msra.mxu0 0.0
      %2342 = vmatprep.subr.mxu0 0.0
      %2343 = vmatpush1.msra.mxu0 0.0
      %2344 = vmatprep.subr.mxu0 0.0
      %2345 = vmatpush1.msra.mxu0 0.0
      %2346 = vmatprep.subr.mxu0 0.0
      %2347 = vmatpush1.msra.mxu0 0.0
      %2348 = vmatprep.subr.mxu0 0.0
      %2349 = vmatpush1.msra.mxu0 0.0
      %2350 = vmatprep.subr.mxu0 0.0
      %2351 = vmatpush1.msra.mxu0 0.0
      %2352 = vmatprep.subr.mxu0 0.0
      %2353 = vmatpush1.msra.mxu0 0.0
      %2354 = vmatprep.subr.mxu0 0.0
      %2355 = vmatpush1.msra.mxu0 0.0
      %2356 = vmatprep.subr.mxu0 0.0
      %2357 = vmatpush1.msra.mxu0 0.0
      %2358 = vmatprep.subr.mxu0 0.0
      %2359 = vmatpush1.msra.mxu0 0.0
      %2360 = vmatprep.subr.mxu0 0.0
      %2361 = vmatpush1.msra.mxu0 0.0
      %2362 = vmatprep.subr.mxu0 0.0
      %2363 = vmatpush1.msra.mxu0 0.0
      %2364 = vmatprep.subr.mxu0 0.0
      %2365 = vmatpush1.msra.mxu0 0.0
      %2366 = vmatprep.subr.mxu0 0.0
      %2367 = vmatpush1.msra.mxu0 0.0
      %2368 = vmatprep.subr.mxu0 0.0
      %2369 = vmatpush1.msra.mxu0 0.0
      %2370 = vmatprep.subr.mxu0 0.0
      %2371 = vmatpush1.msra.mxu0 0.0
      %2372 = vmatprep.subr.mxu0 0.0
      %2373 = vmatpush1.msra.mxu0 0.0
      %2374 = vmatprep.subr.mxu0 0.0
      %2375 = vmatpush1.msra.mxu0 0.0
      %2376 = vmatprep.subr.mxu0 0.0
      %2377 = vmatpush1.msra.mxu0 0.0
      %2378 = vmatprep.subr.mxu0 0.0
      %2379 = vmatpush1.msra.mxu0 0.0
      %2380 = vmatprep.subr.mxu0 0.0
      %2381 = vmatpush1.msra.mxu0 0.0
      %2382 = vmatprep.subr.mxu0 0.0
      %2383 = vmatpush1.msra.mxu0 0.0
      %2384 = vmatprep.subr.mxu0 0.0
      %2385 = vmatpush1.msra.mxu0 0.0
      %2386 = vmatprep.subr.mxu0 0.0
      %2387 = vmatpush1.msra.mxu0 0.0
      %2388 = vmatprep.subr.mxu0 0.0
      %2389 = vmatpush1.msra.mxu0 0.0
      %2390 = vmatprep.subr.mxu0 0.0
      %2391 = vmatpush1.msra.mxu0 0.0
      %2392 = vmatprep.subr.mxu0 0.0
      %2393 = vmatpush1.msra.mxu0 0.0
      %2394 = vmatprep.mubr.f32.mxu0 0.0
      %2395 = vmatmul.mubr.f32.gmra.mrb[0].mxu0 %v548
      %v2396 = vpop.f32.mrb[0].mxu0
      %v2397 = vadd.f32 %v544, %v2396
      %v2398 = vpop.f32.mrb[0].mxu0
      %v2399 = vadd.f32 %v544, %v2398
      %2400 = vdwg.mxu0
      %v2401 = vmax.f32 %v2397, 0.0
      %v2402 = vmax.f32 %v2399, 0.0
      %v2405 = vcombine.low %v2401, %v2402
      %v2407 = vunpack.c.l.s4 1966171168
      %v2408 = vunpack.c.0.s8 %v2407
      %v2409 = vlaneseq
      %v2410 = vshrl.u32 %v2409, 7
      %v2411 = vsub.s32 %v2408, %v2410
      %v2412 = vrot.slane %v2405, %v2411
      %v2414 = vunpack.c.l.s4 1966171168
      %v2415 = vunpack.c.0.s8 %v2414
      %v2416 = vlaneseq
      %v2417 = vshrl.u32 %v2416, 7
      %v2418 = vsub.s32 %v2415, %v2417
      %v2419 = vrot.slane %v2412, %v2418
      %s2421 = scalar_lea.vmem %s230, 10
      %2422 = vst.msk [vmem:[%s2421] sm:$0x3] %vm651, %v2419
      %s2423 = scalar_lea.vmem %s212, 48
      %v2424 = vld [vmem:[%s2423] sm:$0xff]
      %v2426 = vcombine.high %v2424, %v2424
      %v2427 = vsel %vm264, %v2424, 0
      %v2429 = vsel %vm264, %v2426, 0
      %2431 = vmatprep.subr.mxu0 %v2429
      %2432 = vmatpush1.msra.mxu0 %v2427
      %2433 = vmatprep.subr.mxu0 0.0
      %2434 = vmatpush1.msra.mxu0 0.0
      %2435 = vmatprep.subr.mxu0 0.0
      %2436 = vmatpush1.msra.mxu0 0.0
      %2437 = vmatprep.subr.mxu0 0.0
      %2438 = vmatpush1.msra.mxu0 0.0
      %2439 = vmatprep.subr.mxu0 0.0
      %2440 = vmatpush1.msra.mxu0 0.0
      %2441 = vmatprep.subr.mxu0 0.0
      %2442 = vmatpush1.msra.mxu0 0.0
      %2443 = vmatprep.subr.mxu0 0.0
      %2444 = vmatpush1.msra.mxu0 0.0
      %2445 = vmatprep.subr.mxu0 0.0
      %2446 = vmatpush1.msra.mxu0 0.0
      %2447 = vmatprep.subr.mxu0 0.0
      %2448 = vmatpush1.msra.mxu0 0.0
      %2449 = vmatprep.subr.mxu0 0.0
      %2450 = vmatpush1.msra.mxu0 0.0
      %2451 = vmatprep.subr.mxu0 0.0
      %2452 = vmatpush1.msra.mxu0 0.0
      %2453 = vmatprep.subr.mxu0 0.0
      %2454 = vmatpush1.msra.mxu0 0.0
      %2455 = vmatprep.subr.mxu0 0.0
      %2456 = vmatpush1.msra.mxu0 0.0
      %2457 = vmatprep.subr.mxu0 0.0
      %2458 = vmatpush1.msra.mxu0 0.0
      %2459 = vmatprep.subr.mxu0 0.0
      %2460 = vmatpush1.msra.mxu0 0.0
      %2461 = vmatprep.subr.mxu0 0.0
      %2462 = vmatpush1.msra.mxu0 0.0
      %2463 = vmatprep.subr.mxu0 0.0
      %2464 = vmatpush1.msra.mxu0 0.0
      %2465 = vmatprep.subr.mxu0 0.0
      %2466 = vmatpush1.msra.mxu0 0.0
      %2467 = vmatprep.subr.mxu0 0.0
      %2468 = vmatpush1.msra.mxu0 0.0
      %2469 = vmatprep.subr.mxu0 0.0
      %2470 = vmatpush1.msra.mxu0 0.0
      %2471 = vmatprep.subr.mxu0 0.0
      %2472 = vmatpush1.msra.mxu0 0.0
      %2473 = vmatprep.subr.mxu0 0.0
      %2474 = vmatpush1.msra.mxu0 0.0
      %2475 = vmatprep.subr.mxu0 0.0
      %2476 = vmatpush1.msra.mxu0 0.0
      %2477 = vmatprep.subr.mxu0 0.0
      %2478 = vmatpush1.msra.mxu0 0.0
      %2479 = vmatprep.subr.mxu0 0.0
      %2480 = vmatpush1.msra.mxu0 0.0
      %2481 = vmatprep.subr.mxu0 0.0
      %2482 = vmatpush1.msra.mxu0 0.0
      %2483 = vmatprep.subr.mxu0 0.0
      %2484 = vmatpush1.msra.mxu0 0.0
      %2485 = vmatprep.subr.mxu0 0.0
      %2486 = vmatpush1.msra.mxu0 0.0
      %2487 = vmatprep.subr.mxu0 0.0
      %2488 = vmatpush1.msra.mxu0 0.0
      %2489 = vmatprep.subr.mxu0 0.0
      %2490 = vmatpush1.msra.mxu0 0.0
      %2491 = vmatprep.subr.mxu0 0.0
      %2492 = vmatpush1.msra.mxu0 0.0
      %2493 = vmatprep.subr.mxu0 0.0
      %2494 = vmatpush1.msra.mxu0 0.0
      %2495 = vmatprep.mubr.f32.mxu0 0.0
      %2496 = vmatmul.mubr.f32.gmra.mrb[0].mxu0 %v259
      %v2497 = vpop.f32.mrb[0].mxu0
      %v2498 = vadd.f32 %v248, %v2497
      %v2499 = vpop.f32.mrb[0].mxu0
      %v2500 = vadd.f32 %v248, %v2499
      %2501 = vmatprep.mubr.f32.mxu0 0.0
      %2502 = vmatmul.mubr.f32.gmra.mrb[0].mxu0 %v262
      %v2503 = vpop.f32.mrb[0].mxu0
      %v2504 = vadd.f32 %v253, %v2503
      %v2505 = vpop.f32.mrb[0].mxu0
      %v2506 = vadd.f32 %v253, %v2505
      %2507 = vdwg.mxu0
      %v2508 = vmax.f32 %v2498, 0.0
      %v2509 = vmax.f32 %v2500, 0.0
      %v2510 = vmax.f32 %v2504, 0.0
      %v2511 = vmax.f32 %v2506, 0.0
      %v2513 = vsel %vm264, %v2510, 0
      %v2516 = vsel %vm264, %v2511, 0
      %2518 = vmatprep.subr.mxu0 %v2509
      %2519 = vmatpush1.msra.mxu0 %v2508
      %2520 = vmatprep.subr.mxu0 %v2516
      %2521 = vmatpush1.msra.mxu0 %v2513
      %2522 = vmatprep.subr.mxu0 0.0
      %2523 = vmatpush1.msra.mxu0 0.0
      %2524 = vmatprep.subr.mxu0 0.0
      %2525 = vmatpush1.msra.mxu0 0.0
      %2526 = vmatprep.subr.mxu0 0.0
      %2527 = vmatpush1.msra.mxu0 0.0
      %2528 = vmatprep.subr.mxu0 0.0
      %2529 = vmatpush1.msra.mxu0 0.0
      %2530 = vmatprep.subr.mxu0 0.0
      %2531 = vmatpush1.msra.mxu0 0.0
      %2532 = vmatprep.subr.mxu0 0.0
      %2533 = vmatpush1.msra.mxu0 0.0
      %2534 = vmatprep.subr.mxu0 0.0
      %2535 = vmatpush1.msra.mxu0 0.0
      %2536 = vmatprep.subr.mxu0 0.0
      %2537 = vmatpush1.msra.mxu0 0.0
      %2538 = vmatprep.subr.mxu0 0.0
      %2539 = vmatpush1.msra.mxu0 0.0
      %2540 = vmatprep.subr.mxu0 0.0
      %2541 = vmatpush1.msra.mxu0 0.0
      %2542 = vmatprep.subr.mxu0 0.0
      %2543 = vmatpush1.msra.mxu0 0.0
      %2544 = vmatprep.subr.mxu0 0.0
      %2545 = vmatpush1.msra.mxu0 0.0
      %2546 = vmatprep.subr.mxu0 0.0
      %2547 = vmatpush1.msra.mxu0 0.0
      %2548 = vmatprep.subr.mxu0 0.0
      %2549 = vmatpush1.msra.mxu0 0.0
      %2550 = vmatprep.subr.mxu0 0.0
      %2551 = vmatpush1.msra.mxu0 0.0
      %2552 = vmatprep.subr.mxu0 0.0
      %2553 = vmatpush1.msra.mxu0 0.0
      %2554 = vmatprep.subr.mxu0 0.0
      %2555 = vmatpush1.msra.mxu0 0.0
      %2556 = vmatprep.subr.mxu0 0.0
      %2557 = vmatpush1.msra.mxu0 0.0
      %2558 = vmatprep.subr.mxu0 0.0
      %2559 = vmatpush1.msra.mxu0 0.0
      %2560 = vmatprep.subr.mxu0 0.0
      %2561 = vmatpush1.msra.mxu0 0.0
      %2562 = vmatprep.subr.mxu0 0.0
      %2563 = vmatpush1.msra.mxu0 0.0
      %2564 = vmatprep.subr.mxu0 0.0
      %2565 = vmatpush1.msra.mxu0 0.0
      %2566 = vmatprep.subr.mxu0 0.0
      %2567 = vmatpush1.msra.mxu0 0.0
      %2568 = vmatprep.subr.mxu0 0.0
      %2569 = vmatpush1.msra.mxu0 0.0
      %2570 = vmatprep.subr.mxu0 0.0
      %2571 = vmatpush1.msra.mxu0 0.0
      %2572 = vmatprep.subr.mxu0 0.0
      %2573 = vmatpush1.msra.mxu0 0.0
      %2574 = vmatprep.subr.mxu0 0.0
      %2575 = vmatpush1.msra.mxu0 0.0
      %2576 = vmatprep.subr.mxu0 0.0
      %2577 = vmatpush1.msra.mxu0 0.0
      %2578 = vmatprep.subr.mxu0 0.0
      %2579 = vmatpush1.msra.mxu0 0.0
      %2580 = vmatprep.subr.mxu0 0.0
      %2581 = vmatpush1.msra.mxu0 0.0
      %2582 = vmatprep.mubr.f32.mxu0 0.0
      %2583 = vmatmul.mubr.f32.gmra.mrb[0].mxu0 %v362
      %v2584 = vpop.f32.mrb[0].mxu0
      %v2585 = vadd.f32 %v353, %v2584
      %v2586 = vpop.f32.mrb[0].mxu0
      %v2587 = vadd.f32 %v353, %v2586
      %2588 = vmatprep.mubr.f32.mxu0 0.0
      %2589 = vmatmul.mubr.f32.gmra.mrb[0].mxu0 %v365
      %v2590 = vpop.f32.mrb[0].mxu0
      %v2591 = vadd.f32 %v358, %v2590
      %v2592 = vpop.f32.mrb[0].mxu0
      %v2593 = vadd.f32 %v358, %v2592
      %2594 = vdwg.mxu0
      %v2595 = vmax.f32 %v2585, 0.0
      %v2596 = vmax.f32 %v2587, 0.0
      %v2597 = vmax.f32 %v2591, 0.0
      %v2598 = vmax.f32 %v2593, 0.0
      %v2600 = vsel %vm264, %v2597, 0
      %v2603 = vsel %vm264, %v2598, 0
      %2605 = vmatprep.subr.mxu0 %v2596
      %2606 = vmatpush1.msra.mxu0 %v2595
      %2607 = vmatprep.subr.mxu0 %v2603
      %2608 = vmatpush1.msra.mxu0 %v2600
      %2609 = vmatprep.subr.mxu0 0.0
      %2610 = vmatpush1.msra.mxu0 0.0
      %2611 = vmatprep.subr.mxu0 0.0
      %2612 = vmatpush1.msra.mxu0 0.0
      %2613 = vmatprep.subr.mxu0 0.0
      %2614 = vmatpush1.msra.mxu0 0.0
      %2615 = vmatprep.subr.mxu0 0.0
      %2616 = vmatpush1.msra.mxu0 0.0
      %2617 = vmatprep.subr.mxu0 0.0
      %2618 = vmatpush1.msra.mxu0 0.0
      %2619 = vmatprep.subr.mxu0 0.0
      %2620 = vmatpush1.msra.mxu0 0.0
      %2621 = vmatprep.subr.mxu0 0.0
      %2622 = vmatpush1.msra.mxu0 0.0
      %2623 = vmatprep.subr.mxu0 0.0
      %2624 = vmatpush1.msra.mxu0 0.0
      %2625 = vmatprep.subr.mxu0 0.0
      %2626 = vmatpush1.msra.mxu0 0.0
      %2627 = vmatprep.subr.mxu0 0.0
      %2628 = vmatpush1.msra.mxu0 0.0
      %2629 = vmatprep.subr.mxu0 0.0
      %2630 = vmatpush1.msra.mxu0 0.0
      %2631 = vmatprep.subr.mxu0 0.0
      %2632 = vmatpush1.msra.mxu0 0.0
      %2633 = vmatprep.subr.mxu0 0.0
      %2634 = vmatpush1.msra.mxu0 0.0
      %2635 = vmatprep.subr.mxu0 0.0
      %2636 = vmatpush1.msra.mxu0 0.0
      %2637 = vmatprep.subr.mxu0 0.0
      %2638 = vmatpush1.msra.mxu0 0.0
      %2639 = vmatprep.subr.mxu0 0.0
      %2640 = vmatpush1.msra.mxu0 0.0
      %2641 = vmatprep.subr.mxu0 0.0
      %2642 = vmatpush1.msra.mxu0 0.0
      %2643 = vmatprep.subr.mxu0 0.0
      %2644 = vmatpush1.msra.mxu0 0.0
      %2645 = vmatprep.subr.mxu0 0.0
      %2646 = vmatpush1.msra.mxu0 0.0
      %2647 = vmatprep.subr.mxu0 0.0
      %2648 = vmatpush1.msra.mxu0 0.0
      %2649 = vmatprep.subr.mxu0 0.0
      %2650 = vmatpush1.msra.mxu0 0.0
      %2651 = vmatprep.subr.mxu0 0.0
      %2652 = vmatpush1.msra.mxu0 0.0
      %2653 = vmatprep.subr.mxu0 0.0
      %2654 = vmatpush1.msra.mxu0 0.0
      %2655 = vmatprep.subr.mxu0 0.0
      %2656 = vmatpush1.msra.mxu0 0.0
      %2657 = vmatprep.subr.mxu0 0.0
      %2658 = vmatpush1.msra.mxu0 0.0
      %2659 = vmatprep.subr.mxu0 0.0
      %2660 = vmatpush1.msra.mxu0 0.0
      %2661 = vmatprep.subr.mxu0 0.0
      %2662 = vmatpush1.msra.mxu0 0.0
      %2663 = vmatprep.subr.mxu0 0.0
      %2664 = vmatpush1.msra.mxu0 0.0
      %2665 = vmatprep.subr.mxu0 0.0
      %2666 = vmatpush1.msra.mxu0 0.0
      %2667 = vmatprep.subr.mxu0 0.0
      %2668 = vmatpush1.msra.mxu0 0.0
      %2669 = vmatprep.mubr.f32.mxu0 0.0
      %2670 = vmatmul.mubr.f32.gmra.mrb[0].mxu0 %v460
      %v2671 = vpop.f32.mrb[0].mxu0
      %v2672 = vadd.f32 %v457, %v2671
      %v2673 = vpop.f32.mrb[0].mxu0
      %v2674 = vadd.f32 %v457, %v2673
      %2675 = vdwg.mxu0
      %v2676 = vmax.f32 %v2672, 0.0
      %v2677 = vmax.f32 %v2674, 0.0
      %v2679 = vsel %vm550, %v2676, 0
      %v2682 = vsel %vm550, %v2677, 0
      %2684 = vmatprep.subr.mxu0 %v2682
      %2685 = vmatpush1.msra.mxu0 %v2679
      %2686 = vmatprep.subr.mxu0 0.0
      %2687 = vmatpush1.msra.mxu0 0.0
      %2688 = vmatprep.subr.mxu0 0.0
      %2689 = vmatpush1.msra.mxu0 0.0
      %2690 = vmatprep.subr.mxu0 0.0
      %2691 = vmatpush1.msra.mxu0 0.0
      %2692 = vmatprep.subr.mxu0 0.0
      %2693 = vmatpush1.msra.mxu0 0.0
      %2694 = vmatprep.subr.mxu0 0.0
      %2695 = vmatpush1.msra.mxu0 0.0
      %2696 = vmatprep.subr.mxu0 0.0
      %2697 = vmatpush1.msra.mxu0 0.0
      %2698 = vmatprep.subr.mxu0 0.0
      %2699 = vmatpush1.msra.mxu0 0.0
      %2700 = vmatprep.subr.mxu0 0.0
      %2701 = vmatpush1.msra.mxu0 0.0
      %2702 = vmatprep.subr.mxu0 0.0
      %2703 = vmatpush1.msra.mxu0 0.0
      %2704 = vmatprep.subr.mxu0 0.0
      %2705 = vmatpush1.msra.mxu0 0.0
      %2706 = vmatprep.subr.mxu0 0.0
      %2707 = vmatpush1.msra.mxu0 0.0
      %2708 = vmatprep.subr.mxu0 0.0
      %2709 = vmatpush1.msra.mxu0 0.0
      %2710 = vmatprep.subr.mxu0 0.0
      %2711 = vmatpush1.msra.mxu0 0.0
      %2712 = vmatprep.subr.mxu0 0.0
      %2713 = vmatpush1.msra.mxu0 0.0
      %2714 = vmatprep.subr.mxu0 0.0
      %2715 = vmatpush1.msra.mxu0 0.0
      %2716 = vmatprep.subr.mxu0 0.0
      %2717 = vmatpush1.msra.mxu0 0.0
      %2718 = vmatprep.subr.mxu0 0.0
      %2719 = vmatpush1.msra.mxu0 0.0
      %2720 = vmatprep.subr.mxu0 0.0
      %2721 = vmatpush1.msra.mxu0 0.0
      %2722 = vmatprep.subr.mxu0 0.0
      %2723 = vmatpush1.msra.mxu0 0.0
      %2724 = vmatprep.subr.mxu0 0.0
      %2725 = vmatpush1.msra.mxu0 0.0
      %2726 = vmatprep.subr.mxu0 0.0
      %2727 = vmatpush1.msra.mxu0 0.0
      %2728 = vmatprep.subr.mxu0 0.0
      %2729 = vmatpush1.msra.mxu0 0.0
      %2730 = vmatprep.subr.mxu0 0.0
      %2731 = vmatpush1.msra.mxu0 0.0
      %2732 = vmatprep.subr.mxu0 0.0
      %2733 = vmatpush1.msra.mxu0 0.0
      %2734 = vmatprep.subr.mxu0 0.0
      %2735 = vmatpush1.msra.mxu0 0.0
      %2736 = vmatprep.subr.mxu0 0.0
      %2737 = vmatpush1.msra.mxu0 0.0
      %2738 = vmatprep.subr.mxu0 0.0
      %2739 = vmatpush1.msra.mxu0 0.0
      %2740 = vmatprep.subr.mxu0 0.0
      %2741 = vmatpush1.msra.mxu0 0.0
      %2742 = vmatprep.subr.mxu0 0.0
      %2743 = vmatpush1.msra.mxu0 0.0
      %2744 = vmatprep.subr.mxu0 0.0
      %2745 = vmatpush1.msra.mxu0 0.0
      %2746 = vmatprep.subr.mxu0 0.0
      %2747 = vmatpush1.msra.mxu0 0.0
      %2748 = vmatprep.mubr.f32.mxu0 0.0
      %2749 = vmatmul.mubr.f32.gmra.mrb[0].mxu0 %v548
      %v2750 = vpop.f32.mrb[0].mxu0
      %v2751 = vadd.f32 %v544, %v2750
      %v2752 = vpop.f32.mrb[0].mxu0
      %v2753 = vadd.f32 %v544, %v2752
      %2754 = vdwg.mxu0
      %v2755 = vmax.f32 %v2751, 0.0
      %v2756 = vmax.f32 %v2753, 0.0
      %v2759 = vcombine.low %v2755, %v2756
      %v2761 = vunpack.c.l.s4 1966171168
      %v2762 = vunpack.c.0.s8 %v2761
      %v2763 = vlaneseq
      %v2764 = vshrl.u32 %v2763, 7
      %v2765 = vsub.s32 %v2762, %v2764
      %v2766 = vrot.slane %v2759, %v2765
      %v2768 = vunpack.c.l.s4 1966171168
      %v2769 = vunpack.c.0.s8 %v2768
      %v2770 = vlaneseq
      %v2771 = vshrl.u32 %v2770, 7
      %v2772 = vsub.s32 %v2769, %v2771
      %v2773 = vrot.slane %v2766, %v2772
      %s2775 = scalar_lea.vmem %s230, 12
      %2776 = vst.msk [vmem:[%s2775] sm:$0x3] %vm651, %v2773
      %s2777 = smul.u32 14, %s20
      %p2778 = scmp.lt.s32.totalorder %s18, 1
      %s2779 = scalar_select %p2778, %s18, 1
      %p2780 = scmp.lt.s32.totalorder %s19, 1
      %s2781 = scalar_select %p2780, %s19, 1
      %p2782 = scmp.lt.s32.totalorder %s2777, 13
      %s2783 = scalar_select %p2782, %s2777, 13
      %s2784 = smul.addr %s2781, 14
      %s2785 = sadd.s32 %s2783, %s2784
      %s2786 = smul.addr %s2779, 28
      %s2787 = sadd.s32 %s2785, %s2786
      %s2788 = scalar_lea.vmem %s2, %s2787
      // Predicated region
      $region29: #{hamiltonian_forward.1} parent=27 // pred_check
        %p2789 = pneg %p110
      $region30: #{hamiltonian_forward.1} parent=27 // pred_check_branch
        %2791 = sbr.rel (%p2789) target = $region32
      $region31: #{hamiltonian_forward.1} parent=27 // pred_region
        %s2792 = smul.u32 14, %s20
      $region32: #{hamiltonian_forward.1} parent=27 // pred_fallthru
        _
    $region28: #{hamiltonian_forward.1} parent=5 // pred_fallthru
      _
    %p2793 = scmp.le.s32.totalorder 2, %s8
    // Predicated region
    $region33: #{hamiltonian_forward.1} parent=5 // pred_check
      %p2794 = pneg %p2793
    $region34: #{hamiltonian_forward.1} parent=5 // pred_check_branch
      %2796 = sbr.rel (%p2794) target = $region36
    $region35: #{hamiltonian_forward.1} parent=5 // pred_region
      %s2797 = ssub.s32 %s8, 2
      // Predicated region
      $region37: #{hamiltonian_forward.1} parent=35 // pred_check
        %p2798 = pneg %p116
      $region38: #{hamiltonian_forward.1} parent=35 // pred_check_branch
        %2800 = sbr.rel (%p2798) target = $region40
      $region39: #{hamiltonian_forward.1} parent=35 // pred_region
        %s2801 = smul.u32 14, %s23
        %p2802 = scmp.lt.s32.totalorder %s21, 1
        %s2803 = scalar_select %p2802, %s21, 1
        %p2804 = scmp.lt.s32.totalorder %s22, 1
        %s2805 = scalar_select %p2804, %s22, 1
        %p2806 = scmp.lt.s32.totalorder %s2801, 13
        %s2807 = scalar_select %p2806, %s2801, 13
        %s2808 = smul.addr %s2805, 14
        %s2809 = sadd.s32 %s2807, %s2808
        %s2810 = smul.addr %s2803, 28
        %s2811 = sadd.s32 %s2809, %s2810
        %s2812 = scalar_lea.vmem %s2, %s2811
      $region40: #{hamiltonian_forward.1} parent=35 // pred_fallthru
        _
    $region36: #{hamiltonian_forward.1} parent=5 // pred_fallthru
      _
  $region6: #{hamiltonian_forward.1} parent=0 // loop_footer
    %s12 = sadd.s32 1, %s8
  $region7: #{hamiltonian_forward.1} parent=0 // loop_footer_branch
    %7 = sbr.rel target = $region3
  $region8: #{hamiltonian_forward.1} parent=0 // loop_exit
    _

</llo_original>
